<compile_context>
chip_gen: v5e
topology: v5e:2x2
jax: 0.10.0
libtpu: 0.0.40
codegen_flags: <defaults>
</compile_context>

<pallas_src>
import math
from functools import partial

import jax
import jax.numpy as jnp
from jax.experimental import pallas as pl
from jax.experimental.pallas import tpu as pltpu


NEG_INF = -1e9
LN_EPS = 1e-5
ACT_DTYPE = jnp.bfloat16          # storage dtype for weights / activations

# Scoped-VMEM cap shared by the pallas_calls.  48 MiB is safe on every
# generation (v7x has 64 MiB physical VMEM); v5e/v6e could raise it to ~100 MiB.
VMEM_LIMIT = 48 * 1024 * 1024


# ----------------------------------------------------------------------------
# helpers
# ----------------------------------------------------------------------------

def _pick_tile(dim, pref, align):
    """Largest `align`-aligned tile <= pref that divides `dim`, else the full dim.

    Full-extent blocks are always legal.  The full-dim fallback is only hit for
    awkward sizes; TODO(synk): switch those to pl.cdiv grids with masked edge
    tiles instead of a single huge block."""
    if dim <= pref:
        return dim
    t = (min(pref, dim) // align) * align
    while t >= align:
        if dim % t == 0:
            return t
        t -= align
    return dim


def _cparams(semantics):
    return pltpu.CompilerParams(dimension_semantics=semantics,
                                vmem_limit_bytes=VMEM_LIMIT)


# ----------------------------------------------------------------------------
# Pallas kernels
# ----------------------------------------------------------------------------

def _matmul_kernel(x_ref, w_ref, b_ref, o_ref, acc_ref, *, activation):
    # tiled o = act(x @ w + b); grid = (M/tm, N/tn, K/tk), K innermost.
    @pl.when(pl.program_id(2) == 0)
    def _():
        acc_ref[...] = jnp.zeros_like(acc_ref)

    acc_ref[...] += jnp.dot(x_ref[...], w_ref[...],
                            preferred_element_type=jnp.float32)

    @pl.when(pl.program_id(2) == pl.num_programs(2) - 1)
    def _():
        r = acc_ref[...] + b_ref[...]
        if activation == "relu":
            r = jnp.maximum(r, 0.0)
        o_ref[...] = r.astype(o_ref.dtype)


def _head_proj_kernel(x_ref, w_ref, b_ref, o_ref, acc_ref):
    # head-major projection: out[p, h] = x @ w[p, h] + b[p, h]
    # grid = (P, H, M/tm, K/tk), K innermost.
    @pl.when(pl.program_id(3) == 0)
    def _():
        acc_ref[...] = jnp.zeros_like(acc_ref)

    acc_ref[...] += jnp.dot(x_ref[...], w_ref[0, 0],
                            preferred_element_type=jnp.float32)

    @pl.when(pl.program_id(3) == pl.num_programs(3) - 1)
    def _():
        o_ref[0, 0] = (acc_ref[...] + b_ref[0, 0]).astype(o_ref.dtype)


def _mha_kernel(q_ref, k_ref, v_ref, bias_ref, kp_ref, o_ref, *, scale):
    # one (batch, head, q-tile) per grid step; blocks are full (T, dh) slabs.
    q = q_ref[0, 0, 0]                     # [tq, dh] bf16
    k = k_ref[0, 0, 0]                     # [Tk, dh] bf16
    v = v_ref[0, 0, 0]                     # [Tk, dh] bf16
    bias = bias_ref[...] + kp_ref[0]       # [tq,Tk] + [1,Tk] -> [tq,Tk] f32

    # contract last dims directly -> no explicit k.T relayout
    s = jax.lax.dot_general(q, k, (((1,), (1,)), ((), ())),
                            preferred_element_type=jnp.float32) * scale + bias
    s = s - jnp.max(s, axis=-1, keepdims=True)
    p = jnp.exp(s)
    denom = jnp.sum(p, axis=-1, keepdims=True)
    p = p * pl.reciprocal(denom, approx=True)
    o = jnp.dot(p.astype(v.dtype), v, preferred_element_type=jnp.float32)
    o_ref[0, 0] = o.astype(o_ref.dtype)
    # TODO(synk): add flash-style Tk tiling (online softmax) for very long
    # sequences; at these shapes a single Tk block is optimal.


def _attn_out_ln_kernel(a_ref, wo_ref, bo_ref, res_ref, g_ref, beta_ref,
                        o_ref, acc_ref, *, eps):
    # out = LayerNorm(residual + sum_h a[h] @ wo[h] + bo)
    # grid = (M/tm, H), H (head contraction) innermost.
    h = pl.program_id(1)

    @pl.when(h == 0)
    def _():
        acc_ref[...] = jnp.zeros_like(acc_ref)

    acc_ref[...] += jnp.dot(a_ref[0], wo_ref[0],
                            preferred_element_type=jnp.float32)

    @pl.when(h == pl.num_programs(1) - 1)
    def _():
        y = acc_ref[...] + bo_ref[...] + res_ref[...].astype(jnp.float32)
        mean = jnp.mean(y, axis=-1, keepdims=True)
        var = jnp.mean(jnp.square(y - mean), axis=-1, keepdims=True)
        o_ref[...] = ((y - mean) * jax.lax.rsqrt(var + eps)
                      * g_ref[...] + beta_ref[...]).astype(o_ref.dtype)


def _ffn_ln_kernel(x_ref, w1_ref, b1_ref, w2_ref, b2_ref, g_ref, beta_ref,
                   o_ref, acc_ref, *, eps):
    # out = LayerNorm(x + relu(x @ w1 + b1) @ w2 + b2)
    # grid = (M/tm, F/tf), F (hidden) innermost; x block is the residual too.
    f = pl.program_id(1)

    @pl.when(f == 0)
    def _():
        acc_ref[...] = jnp.zeros_like(acc_ref)

    h = jnp.dot(x_ref[...], w1_ref[...],
                preferred_element_type=jnp.float32) + b1_ref[...]
    h = jnp.maximum(h, 0.0)
    acc_ref[...] += jnp.dot(h.astype(w2_ref.dtype), w2_ref[...],
                            preferred_element_type=jnp.float32)

    @pl.when(f == pl.num_programs(1) - 1)
    def _():
        y = acc_ref[...] + b2_ref[...] + x_ref[...].astype(jnp.float32)
        mean = jnp.mean(y, axis=-1, keepdims=True)
        var = jnp.mean(jnp.square(y - mean), axis=-1, keepdims=True)
        o_ref[...] = ((y - mean) * jax.lax.rsqrt(var + eps)
                      * g_ref[...] + beta_ref[...]).astype(o_ref.dtype)


# ----------------------------------------------------------------------------
# Pallas wrappers
# ----------------------------------------------------------------------------

def pallas_linear(x2d, w, b, activation=None, tm=512, tn=512, tk=1024,
                  out_dtype=jnp.float32):
    """o = act(x @ w + b).  Used for the (unpadded, unsliced) vocab projection."""
    M, K = x2d.shape
    N = w.shape[1]
    tm = _pick_tile(M, tm, 8)
    tn = _pick_tile(N, tn, 128)
    tk = _pick_tile(K, tk, 128)
    grid = (M // tm, N // tn, K // tk)

    # When M is a single tile and many weight tiles are streamed (vocab proj),
    # deepen the weight pipeline to hide DMA latency behind short MXU bursts.
    n_w_blocks = (N // tn) * (K // tk)
    if M // tm == 1 and n_w_blocks >= 3:
        w_spec = pl.BlockSpec((tk, tn), lambda i, j, k: (k, j),
                              pipeline_mode=pl.Buffered(3))
    else:
        w_spec = pl.BlockSpec((tk, tn), lambda i, j, k: (k, j))

    flops = 2 * M * N * K
    bytes_accessed = 2 * (M * K + K * N) + 4 * (M * N + N)
    return pl.pallas_call(
        partial(_matmul_kernel, activation=activation),
        out_shape=jax.ShapeDtypeStruct((M, N), out_dtype),
        grid=grid,
        in_specs=[
            pl.BlockSpec((tm, tk), lambda i, j, k: (i, k)),
            w_spec,
            pl.BlockSpec((1, tn), lambda i, j, k: (0, j)),
        ],
        out_specs=pl.BlockSpec((tm, tn), lambda i, j, k: (i, j)),
        scratch_shapes=[pltpu.VMEM((tm, tn), jnp.float32)],
        compiler_params=_cparams(("parallel", "parallel", "arbitrary")),
        cost_estimate=pl.CostEstimate(
            flops=flops, transcendentals=0, bytes_accessed=bytes_accessed),
    )(x2d, w, b.reshape(1, N))


def pallas_head_proj(x2d, w, b, tm=256, tk=512):
    """Head-major projection.  x:[M,Din], w:[P,H,Din,dh], b:[P,H,1,dh] -> [P,H,M,dh]."""
    M, Din = x2d.shape
    P, H, _, dh = w.shape
    tm = _pick_tile(M, tm, 8)
    tk = _pick_tile(Din, tk, 128)
    grid = (P, H, M // tm, Din // tk)
    flops = 2 * P * H * M * Din * dh
    bytes_accessed = 2 * (M * Din + P * H * Din * dh + P * H * M * dh) + 4 * P * H * dh
    return pl.pallas_call(
        _head_proj_kernel,
        out_shape=jax.ShapeDtypeStruct((P, H, M, dh), ACT_DTYPE),
        grid=grid,
        in_specs=[
            pl.BlockSpec((tm, tk), lambda p, h, i, k: (i, k)),
            pl.BlockSpec((1, 1, tk, dh), lambda p, h, i, k: (p, h, k, 0)),
            pl.BlockSpec((1, 1, 1, dh), lambda p, h, i, k: (p, h, 0, 0)),
        ],
        out_specs=pl.BlockSpec((1, 1, tm, dh), lambda p, h, i, k: (p, h, i, 0)),
        scratch_shapes=[pltpu.VMEM((tm, dh), jnp.float32)],
        compiler_params=_cparams(("parallel", "parallel", "parallel", "arbitrary")),
        cost_estimate=pl.CostEstimate(
            flops=flops, transcendentals=0, bytes_accessed=bytes_accessed),
    )(x2d, w, b)


def pallas_attention(q_arr, kv_arr, attn_bias, kp_bias, q_idx, k_idx, v_idx,
                     tq=256):
    """q_arr:[Pq,H,B,Tq,dh], kv_arr:[Pkv,H,B,Tk,dh], attn_bias:[Tq,Tk] (shared),
    kp_bias:[B,1,Tk].  q/k/v are selected from the fused buffers purely via
    BlockSpec index_maps (leading axis q_idx/k_idx/v_idx) -> no XLA slices."""
    _, H, B, Tq, dh = q_arr.shape
    Tk = kv_arr.shape[3]
    scale = 1.0 / math.sqrt(dh)
    tq = _pick_tile(Tq, tq, 8)
    grid = (B, H, Tq // tq)
    flops = 4 * B * H * Tq * Tk * dh
    transcendentals = B * H * Tq * Tk
    bytes_accessed = 2 * (2 * B * H * Tq * dh + 2 * B * H * Tk * dh) + 4 * (Tq * Tk + B * Tk)
    return pl.pallas_call(
        partial(_mha_kernel, scale=scale),
        out_shape=jax.ShapeDtypeStruct((H, B, Tq, dh), ACT_DTYPE),
        grid=grid,
        in_specs=[
            pl.BlockSpec((1, 1, 1, tq, dh), lambda b, h, qi: (q_idx, h, b, qi, 0)),
            pl.BlockSpec((1, 1, 1, Tk, dh), lambda b, h, qi: (k_idx, h, b, 0, 0)),
            pl.BlockSpec((1, 1, 1, Tk, dh), lambda b, h, qi: (v_idx, h, b, 0, 0)),
            pl.BlockSpec((tq, Tk), lambda b, h, qi: (qi, 0)),
            pl.BlockSpec((1, 1, Tk), lambda b, h, qi: (b, 0, 0)),
        ],
        out_specs=pl.BlockSpec((1, 1, tq, dh), lambda b, h, qi: (h, b, qi, 0)),
        compiler_params=_cparams(("parallel", "parallel", "parallel")),
        cost_estimate=pl.CostEstimate(
            flops=flops, transcendentals=transcendentals,
            bytes_accessed=bytes_accessed),
    )(q_arr, kv_arr, kv_arr, attn_bias, kp_bias)


def pallas_attn_out_ln(a, wo, bo, res, g, beta, tm=256):
    """LayerNorm(res + concat_h(a) @ wo + bo) with heads contracted via the grid.
    a:[H,M,dh], wo:[H,dh,D], res:[M,D] -> [M,D]."""
    H, M, dh = a.shape
    D = wo.shape[-1]
    tm = _pick_tile(M, tm, 8)
    grid = (M // tm, H)
    flops = 2 * M * H * dh * D + 10 * M * D
    bytes_accessed = 2 * (H * M * dh + H * dh * D + 2 * M * D) + 4 * 3 * D
    return pl.pallas_call(
        partial(_attn_out_ln_kernel, eps=LN_EPS),
        out_shape=jax.ShapeDtypeStruct((M, D), ACT_DTYPE),
        grid=grid,
        in_specs=[
            pl.BlockSpec((1, tm, dh), lambda i, h: (h, i, 0)),
            pl.BlockSpec((1, dh, D), lambda i, h: (h, 0, 0)),
            pl.BlockSpec((1, D), lambda i, h: (0, 0)),
            pl.BlockSpec((tm, D), lambda i, h: (i, 0)),
            pl.BlockSpec((1, D), lambda i, h: (0, 0)),
            pl.BlockSpec((1, D), lambda i, h: (0, 0)),
        ],
        out_specs=pl.BlockSpec((tm, D), lambda i, h: (i, 0)),
        scratch_shapes=[pltpu.VMEM((tm, D), jnp.float32)],
        compiler_params=_cparams(("parallel", "arbitrary")),
        cost_estimate=pl.CostEstimate(
            flops=flops, transcendentals=M, bytes_accessed=bytes_accessed),
    )(a, wo, bo.reshape(1, D), res, g.reshape(1, D), beta.reshape(1, D))


def pallas_ffn_ln(x2d, w1, b1, w2, b2, g, beta, tm=256, tf=256):
    """LayerNorm(x + relu(x @ w1 + b1) @ w2 + b2), tiled over (M, F), acc over F.
    tf capped at 256 to stay within v7x's 64 MiB VMEM at large D/F."""
    M, D = x2d.shape
    F = w1.shape[1]
    tm = _pick_tile(M, tm, 8)
    tf = _pick_tile(F, tf, 128)
    grid = (M // tm, F // tf)
    flops = 4 * M * F * D + 10 * M * D
    bytes_accessed = 2 * (2 * M * D + 2 * D * F) + 4 * (F + 3 * D)
    return pl.pallas_call(
        partial(_ffn_ln_kernel, eps=LN_EPS),
        out_shape=jax.ShapeDtypeStruct((M, D), ACT_DTYPE),
        grid=grid,
        in_specs=[
            pl.BlockSpec((tm, D), lambda i, f: (i, 0)),
            pl.BlockSpec((D, tf), lambda i, f: (0, f)),
            pl.BlockSpec((1, tf), lambda i, f: (0, f)),
            pl.BlockSpec((tf, D), lambda i, f: (f, 0)),
            pl.BlockSpec((1, D), lambda i, f: (0, 0)),
            pl.BlockSpec((1, D), lambda i, f: (0, 0)),
            pl.BlockSpec((1, D), lambda i, f: (0, 0)),
        ],
        out_specs=pl.BlockSpec((tm, D), lambda i, f: (i, 0)),
        scratch_shapes=[pltpu.VMEM((tm, D), jnp.float32)],
        compiler_params=_cparams(("parallel", "arbitrary")),
        cost_estimate=pl.CostEstimate(
            flops=flops, transcendentals=M, bytes_accessed=bytes_accessed),
    )(x2d, w1, b1.reshape(1, F), w2, b2.reshape(1, D),
      g.reshape(1, D), beta.reshape(1, D))


# ----------------------------------------------------------------------------
# Model pieces (JAX glue calling the Pallas kernels)
# ----------------------------------------------------------------------------

def attention_block(attn_p, ln_p, x_q, x_kv, attn_bias, kp_bias, num_heads,
                    self_attn):
    """Post-LN attention sub-layer: LN(x_q + MHA(x_q, x_kv) @ Wo + bo)."""
    B, Tq, D = x_q.shape
    Tk = x_kv.shape[1]
    H = num_heads
    dh = D // H
    xq2 = x_q.reshape(-1, D)

    if self_attn:
        qkv = pallas_head_proj(xq2, attn_p["wqkv"], attn_p["bqkv"])     # [3,H,M,dh]
        qkv = qkv.reshape(3, H, B, Tq, dh)                              # free reshape
        q_arr, kv_arr = qkv, qkv
        q_idx, k_idx, v_idx = 0, 1, 2
    else:
        q_arr = pallas_head_proj(xq2, attn_p["wq"], attn_p["bq"])
        q_arr = q_arr.reshape(1, H, B, Tq, dh)
        kv_arr = pallas_head_proj(x_kv.reshape(-1, D), attn_p["wkv"], attn_p["bkv"])
        kv_arr = kv_arr.reshape(2, H, B, Tk, dh)
        q_idx, k_idx, v_idx = 0, 0, 1

    o = pallas_attention(q_arr, kv_arr, attn_bias, kp_bias,
                         q_idx, k_idx, v_idx)                           # [H,B,Tq,dh]
    # output projection + residual + LayerNorm fused in one kernel
    out = pallas_attn_out_ln(o.reshape(H, B * Tq, dh), attn_p["wo"],
                             attn_p["bo"], xq2, ln_p["g"], ln_p["b"])
    return out.reshape(B, Tq, D)


def ffn_block(ffn_p, ln_p, x):
    B, T, D = x.shape
    out = pallas_ffn_ln(x.reshape(-1, D), ffn_p["w1"], ffn_p["b1"],
                        ffn_p["w2"], ffn_p["b2"], ln_p["g"], ln_p["b"])
    return out.reshape(B, T, D)


def sinusoidal_pe(max_len, d):
    pos = jnp.arange(max_len, dtype=jnp.float32)[:, None]
    i = jnp.arange(d // 2, dtype=jnp.float32)[None, :]
    angle = pos / jnp.power(10000.0, 2.0 * i / d)
    pe = jnp.zeros((max_len, d), jnp.float32)
    pe = pe.at[:, 0::2].set(jnp.sin(angle))
    pe = pe.at[:, 1::2].set(jnp.cos(angle))
    return pe


def embed(p, tokens):
    x = jnp.take(p["embed"], tokens, axis=0).astype(jnp.float32)        # [B,S,D]
    x = x + p["pos"][None, : tokens.shape[1], :]
    return x.astype(ACT_DTYPE)


def _kp_bias(kpm):
    # bool key-padding mask [B, T] -> additive f32 [B, 1, T]
    return jnp.where(kpm, NEG_INF, 0.0).astype(jnp.float32)[:, None, :]


def encoder_forward(p, X_src, src_kpm, num_heads):
    B, S = X_src.shape
    x = embed(p, X_src)
    kp_bias = _kp_bias(src_kpm)                          # [B,1,S]
    zero_bias = jnp.zeros((S, S), jnp.float32)           # shared across batch/heads
    for layer in p["layers"]:
        x = attention_block(layer["self_attn"], layer["ln1"], x, x,
                            zero_bias, kp_bias, num_heads, self_attn=True)
        x = ffn_block(layer["ffn"], layer["ln2"], x)
    return x


def decoder_forward(p, X_tgt, memory, tgt_causal_mask, tgt_kpm, src_kpm,
                    num_heads):
    B, T = X_tgt.shape
    S = memory.shape[1]
    x = embed(p, X_tgt)
    causal_bias = jnp.where(tgt_causal_mask, NEG_INF, 0.0).astype(jnp.float32)  # [T,T]
    tgt_kp_bias = _kp_bias(tgt_kpm)                                             # [B,1,T]
    src_kp_bias = _kp_bias(src_kpm)                                             # [B,1,S]
    zero_cross = jnp.zeros((T, S), jnp.float32)
    for layer in p["layers"]:
        x = attention_block(layer["self_attn"], layer["ln1"], x, x,
                            causal_bias, tgt_kp_bias, num_heads, self_attn=True)
        x = attention_block(layer["cross_attn"], layer["ln2"], x, memory,
                            zero_cross, src_kp_bias, num_heads, self_attn=False)
        x = ffn_block(layer["ffn"], layer["ln3"], x)
    return x


def transformer_forward(params, X_tgt, X_src, tgt_causal_mask, tgt_kpm, src_kpm,
                        num_heads):
    mem = encoder_forward(params["encoder"], X_src, src_kpm, num_heads)
    dec = decoder_forward(params["decoder"], X_tgt, mem, tgt_causal_mask,
                          tgt_kpm, src_kpm, num_heads)
    B, T, D = dec.shape
    vocab = params["proj_w"].shape[1]
    # unpadded, lane-width = vocab output block -> no post-hoc XLA slice
    logits = pallas_linear(dec.reshape(-1, D), params["proj_w"], params["proj_b"])
    return logits.reshape(B, T, vocab)


# TODO(synk): `generate()` (beam search with torch.multinomial / topk and a
# data-dependent Python loop over beam length) is not translated to Pallas.


# ----------------------------------------------------------------------------
# Deterministic parameter initialization
# ----------------------------------------------------------------------------

def _init_linear(key, fan_in, fan_out):
    k1, k2 = jax.random.split(key)
    lim = 1.0 / math.sqrt(fan_in)
    w = jax.random.uniform(k1, (fan_in, fan_out), jnp.float32, -lim, lim)
    b = jax.random.uniform(k2, (fan_out,), jnp.float32, -lim, lim)
    return w, b


def _init_mha(key, d, h):
    dh = d // h
    ks = jax.random.split(key, 4)
    wq, bq = _init_linear(ks[0], d, d)
    wk, bk = _init_linear(ks[1], d, d)
    wv, bv = _init_linear(ks[2], d, d)
    wo, bo = _init_linear(ks[3], d, d)

    def head_major(w):    # [d, d] -> [h, d, dh] (columns split into heads)
        return jnp.transpose(w.reshape(d, h, dh), (1, 0, 2))

    def head_bias(b):     # [d] -> [h, 1, dh]
        return b.reshape(h, 1, dh)

    return {
        # fused head-major projections (self-attn uses wqkv; cross: wq + wkv)
        "wqkv": jnp.stack([head_major(wq), head_major(wk),
                           head_major(wv)]).astype(ACT_DTYPE),   # [3,h,d,dh]
        "bqkv": jnp.stack([head_bias(bq), head_bias(bk), head_bias(bv)]),
        "wq": head_major(wq)[None].astype(ACT_DTYPE),            # [1,h,d,dh]
        "bq": head_bias(bq)[None],                                # [1,h,1,dh]
        "wkv": jnp.stack([head_major(wk), head_major(wv)]).astype(ACT_DTYPE),
        "bkv": jnp.stack([head_bias(bk), head_bias(bv)]),
        "wo": wo.reshape(h, dh, d).astype(ACT_DTYPE),             # [h,dh,d]
        "bo": bo,                                                 # [d] f32
    }


def _init_ln(d):
    return {"g": jnp.ones((d,), jnp.float32), "b": jnp.zeros((d,), jnp.float32)}


def _init_ffn(key, d, f):
    k1, k2 = jax.random.split(key)
    w1, b1 = _init_linear(k1, d, f)
    w2, b2 = _init_linear(k2, f, d)
    return {"w1": w1.astype(ACT_DTYPE), "b1": b1,
            "w2": w2.astype(ACT_DTYPE), "b2": b2}


def init_params(key, vocab, d, heads, ffn, n_enc_layers, n_dec_layers, max_len):
    keys = jax.random.split(key, 6)
    pe = sinusoidal_pe(max_len, d)

    enc_layers = []
    for k in jax.random.split(keys[0], n_enc_layers):
        ka, kf = jax.random.split(k)
        enc_layers.append({
            "self_attn": _init_mha(ka, d, heads),
            "ln1": _init_ln(d),
            "ffn": _init_ffn(kf, d, ffn),
            "ln2": _init_ln(d),
        })
    dec_layers = []
    for k in jax.random.split(keys[1], n_dec_layers):
        ka, kc, kf = jax.random.split(k, 3)
        dec_layers.append({
            "self_attn": _init_mha(ka, d, heads),
            "ln1": _init_ln(d),
            "cross_attn": _init_mha(kc, d, heads),
            "ln2": _init_ln(d),
            "ffn": _init_ffn(kf, d, ffn),
            "ln3": _init_ln(d),
        })

    proj_w, proj_b = _init_linear(keys[2], d, vocab)

    return {
        "encoder": {
            "embed": (0.02 * jax.random.normal(keys[3], (vocab, d),
                                               jnp.float32)).astype(ACT_DTYPE),
            "pos": pe,
            "layers": enc_layers,
        },
        "decoder": {
            "embed": (0.02 * jax.random.normal(keys[4], (vocab, d),
                                               jnp.float32)).astype(ACT_DTYPE),
            "pos": pe,
            "layers": dec_layers,
        },
        "proj_w": proj_w.astype(ACT_DTYPE),
        "proj_b": proj_b,
    }


def get_causal_mask(n):
    # True == masked (cannot attend), matching torch convention j > i
    return jnp.triu(jnp.ones((n, n), bool), k=1)


# ----------------------------------------------------------------------------
# Main
# ----------------------------------------------------------------------------

if __name__ == "__main__":
    VOCAB = 50
    HIDDEN = 32
    HEADS = 4
    FFN = 64
    N_LAYERS = 2
    B = 2
    S_SRC = 8
    S_TGT = 8
    MAX_LEN = 16

    key = jax.random.PRNGKey(0)
    k_param, k_src, k_tgt = jax.random.split(key, 3)

    params = init_params(k_param, VOCAB, HIDDEN, HEADS, FFN,
                         N_LAYERS, N_LAYERS, MAX_LEN)

    X_src = jax.random.randint(k_src, (B, S_SRC), 0, VOCAB, jnp.int32)
    X_tgt = jax.random.randint(k_tgt, (B, S_TGT), 0, VOCAB, jnp.int32)

    tgt_causal_mask = get_causal_mask(S_TGT)                       # [T, T] bool
    src_kpm = jnp.zeros((B, S_SRC), bool).at[1, -2:].set(True)     # [B, S] bool
    tgt_kpm = jnp.zeros((B, S_TGT), bool).at[1, -1:].set(True)     # [B, T] bool

    fwd = jax.jit(partial(transformer_forward, num_heads=HEADS))
    logits = fwd(params, X_tgt, X_src, tgt_causal_mask, tgt_kpm, src_kpm)
    logits = jax.block_until_ready(logits)

    assert logits.shape == (B, S_TGT, VOCAB), logits.shape
    assert bool(jnp.all(jnp.isfinite(logits)))
    print("KERNEL_OK")
</pallas_src>

<mosaic_0001>
module attributes {stable_mosaic.version = 11 : i64} {
  func.func @_head_proj_kernel(%arg0: i32, %arg1: i32, %arg2: i32, %arg3: i32, %arg4: memref<16x32xbf16, #tpu.memory_space<vmem>>, %arg5: memref<1x1x32x8xbf16, #tpu.memory_space<vmem>>, %arg6: memref<1x1x1x8xf32, #tpu.memory_space<vmem>>, %arg7: memref<1x1x16x8xbf16, #tpu.memory_space<vmem>>, %arg8: memref<16x8xf32, #tpu.memory_space<vmem>>) attributes {dimension_semantics = [#tpu.dimension_semantics<parallel>, #tpu.dimension_semantics<parallel>, #tpu.dimension_semantics<parallel>, #tpu.dimension_semantics<arbitrary>], iteration_bounds = array<i64: 3, 4, 1, 1>, scalar_prefetch = 0 : i64, scratch_operands = 1 : i64, tpu.core_type = #tpu.core_type<tc>, window_params = [{transform_indices = @transform_0, window_bounds = array<i64: 16, 32>}, {transform_indices = @transform_1, window_bounds = array<i64: 1, 1, 32, 8>}, {transform_indices = @transform_2, window_bounds = array<i64: 1, 1, 1, 8>}, {transform_indices = @transform_3, window_bounds = array<i64: 1, 1, 16, 8>}]} {
    %c0_i32 = arith.constant 0 : i32
    %0 = arith.cmpi eq, %arg3, %c0_i32 : i32
    %1 = arith.extui %0 : i1 to i32
    %c0_i32_0 = arith.constant 0 : i32
    %2 = arith.cmpi ne, %1, %c0_i32_0 : i32
    scf.if %2 {
      %cst_12 = arith.constant 0.000000e+00 : f32
      %13 = vector.broadcast %cst_12 : f32 to vector<16x8xf32>
      %c0_13 = arith.constant 0 : index
      %c0_14 = arith.constant 0 : index
      %14 = vector.load %arg8[%c0_13, %c0_14] : memref<16x8xf32, #tpu.memory_space<vmem>>, vector<16x8xf32>
      tpu.vector_store %arg8[%c0_13, %c0_14], %13 {strides = array<i32>} : memref<16x8xf32, #tpu.memory_space<vmem>>, vector<16x8xf32>,
    } else {
    }
    %c0 = arith.constant 0 : index
    %c0_1 = arith.constant 0 : index
    %3 = vector.load %arg8[%c0, %c0_1] : memref<16x8xf32, #tpu.memory_space<vmem>>, vector<16x8xf32>
    %c0_2 = arith.constant 0 : index
    %c0_3 = arith.constant 0 : index
    %4 = vector.load %arg4[%c0_2, %c0_3] : memref<16x32xbf16, #tpu.memory_space<vmem>>, vector<16x32xbf16>
    %c0_4 = arith.constant 0 : index
    %c0_5 = arith.constant 0 : index
    %c0_6 = arith.constant 0 : index
    %c0_7 = arith.constant 0 : index
    %5 = vector.load %arg5[%c0_4, %c0_5, %c0_6, %c0_7] : memref<1x1x32x8xbf16, #tpu.memory_space<vmem>>, vector<1x1x32x8xbf16>
    %6 = vector.shape_cast %5 : vector<1x1x32x8xbf16> to vector<32x8xbf16>
    %cst = arith.constant dense<0.000000e+00> : vector<16x8xf32>
    %7 = tpu.matmul %4, %6, %cst {dimension_numbers = #tpu.dot_dimension_numbers<[1], [0], [0], [1], [0, 0, 1, 1], [], []>} : vector<16x32xbf16>, vector<32x8xbf16>, vector<16x8xf32> -> vector<16x8xf32>
    %8 = arith.addf %3, %7 : vector<16x8xf32>
    %c0_8 = arith.constant 0 : index
    %c0_9 = arith.constant 0 : index
    %9 = vector.load %arg8[%c0_8, %c0_9] : memref<16x8xf32, #tpu.memory_space<vmem>>, vector<16x8xf32>
    tpu.vector_store %arg8[%c0_8, %c0_9], %8 {strides = array<i32>} : memref<16x8xf32, #tpu.memory_space<vmem>>, vector<16x8xf32>,
    %c0_i32_10 = arith.constant 0 : i32
    %10 = arith.cmpi eq, %arg3, %c0_i32_10 : i32
    %11 = arith.extui %10 : i1 to i32
    %c0_i32_11 = arith.constant 0 : i32
    %12 = arith.cmpi ne, %11, %c0_i32_11 : i32
    scf.if %12 {
      %c0_12 = arith.constant 0 : index
      %c0_13 = arith.constant 0 : index
      %13 = vector.load %arg8[%c0_12, %c0_13] : memref<16x8xf32, #tpu.memory_space<vmem>>, vector<16x8xf32>
      %c0_14 = arith.constant 0 : index
      %c0_15 = arith.constant 0 : index
      %c0_16 = arith.constant 0 : index
      %c0_17 = arith.constant 0 : index
      %14 = vector.load %arg6[%c0_14, %c0_15, %c0_16, %c0_17] : memref<1x1x1x8xf32, #tpu.memory_space<vmem>>, vector<1x1x1x8xf32>
      %15 = vector.shape_cast %14 : vector<1x1x1x8xf32> to vector<1x8xf32>
      %16 = vector.broadcast %15 : vector<1x8xf32> to vector<16x8xf32>
      %17 = arith.addf %13, %16 : vector<16x8xf32>
      %18 = arith.truncf %17 : vector<16x8xf32> to vector<16x8xbf16>
      %c0_18 = arith.constant 0 : index
      %c0_19 = arith.constant 0 : index
      %c0_20 = arith.constant 0 : index
      %c0_21 = arith.constant 0 : index
      %19 = vector.load %arg7[%c0_18, %c0_19, %c0_20, %c0_21] : memref<1x1x16x8xbf16, #tpu.memory_space<vmem>>, vector<1x1x16x8xbf16>
      %20 = vector.shape_cast %19 : vector<1x1x16x8xbf16> to vector<16x8xbf16>
      %21 = vector.shape_cast %18 : vector<16x8xbf16> to vector<1x1x16x8xbf16>
      tpu.vector_store %arg7[%c0_18, %c0_19, %c0_20, %c0_21], %21 {strides = array<i32>} : memref<1x1x16x8xbf16, #tpu.memory_space<vmem>>, vector<1x1x16x8xbf16>,
    } else {
    }
    return
  }
  func.func @transform_0(%arg0: i32, %arg1: i32, %arg2: i32, %arg3: i32) -> (i32, i32) {
    %c0_i32 = arith.constant 0 : i32
    return %arg2, %arg3 : i32, i32
  }
  func.func @transform_1(%arg0: i32, %arg1: i32, %arg2: i32, %arg3: i32) -> (i32, i32, i32, i32) {
    %c0_i32 = arith.constant 0 : i32
    %c0_i32_0 = arith.constant 0 : i32
    return %arg0, %arg1, %arg3, %c0_i32 : i32, i32, i32, i32
  }
  func.func @transform_2(%arg0: i32, %arg1: i32, %arg2: i32, %arg3: i32) -> (i32, i32, i32, i32) {
    %c0_i32 = arith.constant 0 : i32
    %c0_i32_0 = arith.constant 0 : i32
    %c0_i32_1 = arith.constant 0 : i32
    return %arg0, %arg1, %c0_i32, %c0_i32_0 : i32, i32, i32, i32
  }
  func.func @transform_3(%arg0: i32, %arg1: i32, %arg2: i32, %arg3: i32) -> (i32, i32, i32, i32) {
    %c0_i32 = arith.constant 0 : i32
    %c0_i32_0 = arith.constant 0 : i32
    return %arg0, %arg1, %arg2, %c0_i32 : i32, i32, i32, i32
  }
}

module attributes {stable_mosaic.version = 11 : i64} {
  func.func @_attn_out_ln_kernel(%arg0: i32, %arg1: i32, %arg2: memref<1x16x8xbf16, #tpu.memory_space<vmem>>, %arg3: memref<1x8x32xbf16, #tpu.memory_space<vmem>>, %arg4: memref<1x32xf32, #tpu.memory_space<vmem>>, %arg5: memref<16x32xbf16, #tpu.memory_space<vmem>>, %arg6: memref<1x32xf32, #tpu.memory_space<vmem>>, %arg7: memref<1x32xf32, #tpu.memory_space<vmem>>, %arg8: memref<16x32xbf16, #tpu.memory_space<vmem>>, %arg9: memref<16x32xf32, #tpu.memory_space<vmem>>) attributes {dimension_semantics = [#tpu.dimension_semantics<parallel>, #tpu.dimension_semantics<arbitrary>], iteration_bounds = array<i64: 1, 4>, scalar_prefetch = 0 : i64, scratch_operands = 1 : i64, tpu.core_type = #tpu.core_type<tc>, window_params = [{transform_indices = @transform_0, window_bounds = array<i64: 1, 16, 8>}, {transform_indices = @transform_1, window_bounds = array<i64: 1, 8, 32>}, {pipeline_mode = #tpu.pipeline_mode<synchronous>, transform_indices = @transform_2, window_bounds = array<i64: 1, 32>}, {transform_indices = @transform_3, window_bounds = array<i64: 16, 32>}, {pipeline_mode = #tpu.pipeline_mode<synchronous>, transform_indices = @transform_4, window_bounds = array<i64: 1, 32>}, {pipeline_mode = #tpu.pipeline_mode<synchronous>, transform_indices = @transform_5, window_bounds = array<i64: 1, 32>}, {transform_indices = @transform_6, window_bounds = array<i64: 16, 32>}]} {
    %c0_i32 = arith.constant 0 : i32
    %0 = arith.cmpi eq, %arg1, %c0_i32 : i32
    %1 = arith.extui %0 : i1 to i32
    %c0_i32_0 = arith.constant 0 : i32
    %2 = arith.cmpi ne, %1, %c0_i32_0 : i32
    scf.if %2 {
      %cst_11 = arith.constant 0.000000e+00 : f32
      %14 = vector.broadcast %cst_11 : f32 to vector<16x32xf32>
      %c0_12 = arith.constant 0 : index
      %c0_13 = arith.constant 0 : index
      %15 = vector.load %arg9[%c0_12, %c0_13] : memref<16x32xf32, #tpu.memory_space<vmem>>, vector<16x32xf32>
      tpu.vector_store %arg9[%c0_12, %c0_13], %14 {strides = array<i32>} : memref<16x32xf32, #tpu.memory_space<vmem>>, vector<16x32xf32>,
    } else {
    }
    %c0 = arith.constant 0 : index
    %c0_1 = arith.constant 0 : index
    %3 = vector.load %arg9[%c0, %c0_1] : memref<16x32xf32, #tpu.memory_space<vmem>>, vector<16x32xf32>
    %c0_2 = arith.constant 0 : index
    %c0_3 = arith.constant 0 : index
    %c0_4 = arith.constant 0 : index
    %4 = vector.load %arg2[%c0_2, %c0_3, %c0_4] : memref<1x16x8xbf16, #tpu.memory_space<vmem>>, vector<1x16x8xbf16>
    %5 = vector.shape_cast %4 : vector<1x16x8xbf16> to vector<16x8xbf16>
    %c0_5 = arith.constant 0 : index
    %c0_6 = arith.constant 0 : index
    %c0_7 = arith.constant 0 : index
    %6 = vector.load %arg3[%c0_5, %c0_6, %c0_7] : memref<1x8x32xbf16, #tpu.memory_space<vmem>>, vector<1x8x32xbf16>
    %7 = vector.shape_cast %6 : vector<1x8x32xbf16> to vector<8x32xbf16>
    %cst = arith.constant dense<0.000000e+00> : vector<16x32xf32>
    %8 = tpu.matmul %5, %7, %cst {dimension_numbers = #tpu.dot_dimension_numbers<[1], [0], [0], [1], [0, 0, 1, 1], [], []>} : vector<16x8xbf16>, vector<8x32xbf16>, vector<16x32xf32> -> vector<16x32xf32>
    %9 = arith.addf %3, %8 : vector<16x32xf32>
    %c0_8 = arith.constant 0 : index
    %c0_9 = arith.constant 0 : index
    %10 = vector.load %arg9[%c0_8, %c0_9] : memref<16x32xf32, #tpu.memory_space<vmem>>, vector<16x32xf32>
    tpu.vector_store %arg9[%c0_8, %c0_9], %9 {strides = array<i32>} : memref<16x32xf32, #tpu.memory_space<vmem>>, vector<16x32xf32>,
    %c3_i32 = arith.constant 3 : i32
    %11 = arith.cmpi eq, %arg1, %c3_i32 : i32
    %12 = arith.extui %11 : i1 to i32
    %c0_i32_10 = arith.constant 0 : i32
    %13 = arith.cmpi ne, %12, %c0_i32_10 : i32
    scf.if %13 {
      %c0_11 = arith.constant 0 : index
      %c0_12 = arith.constant 0 : index
      %14 = vector.load %arg9[%c0_11, %c0_12] : memref<16x32xf32, #tpu.memory_space<vmem>>, vector<16x32xf32>
      %c0_13 = arith.constant 0 : index
      %c0_14 = arith.constant 0 : index
      %15 = vector.load %arg4[%c0_13, %c0_14] : memref<1x32xf32, #tpu.memory_space<vmem>>, vector<1x32xf32>
      %16 = vector.broadcast %15 : vector<1x32xf32> to vector<16x32xf32>
      %17 = arith.addf %14, %16 : vector<16x32xf32>
      %c0_15 = arith.constant 0 : index
      %c0_16 = arith.constant 0 : index
      %18 = vector.load %arg5[%c0_15, %c0_16] : memref<16x32xbf16, #tpu.memory_space<vmem>>, vector<16x32xbf16>
      %19 = arith.extf %18 : vector<16x32xbf16> to vector<16x32xf32>
      %20 = arith.addf %17, %19 : vector<16x32xf32>
      %cst_17 = arith.constant dense<0.000000e+00> : vector<16xf32>
      %21 = vector.multi_reduction <add>, %20, %cst_17 [1] : vector<16x32xf32> to vector<16xf32>
      %22 = vector.shape_cast %21 : vector<16xf32> to vector<16x1xf32>
      %cst_18 = arith.constant 3.200000e+01 : f32
      %23 = vector.broadcast %cst_18 : f32 to vector<16x1xf32>
      %24 = arith.divf %22, %23 : vector<16x1xf32>
      %25 = vector.broadcast %24 : vector<16x1xf32> to vector<16x32xf32>
      %26 = arith.subf %20, %25 : vector<16x32xf32>
      %27 = arith.mulf %26, %26 : vector<16x32xf32>
      %cst_19 = arith.constant dense<0.000000e+00> : vector<16xf32>
      %28 = vector.multi_reduction <add>, %27, %cst_19 [1] : vector<16x32xf32> to vector<16xf32>
      %29 = vector.shape_cast %28 : vector<16xf32> to vector<16x1xf32>
      %cst_20 = arith.constant 3.200000e+01 : f32
      %30 = vector.broadcast %cst_20 : f32 to vector<16x1xf32>
      %31 = arith.divf %29, %30 : vector<16x1xf32>
      %32 = vector.broadcast %24 : vector<16x1xf32> to vector<16x32xf32>
      %33 = arith.subf %20, %32 : vector<16x32xf32>
      %cst_21 = arith.constant 9.99999974E-6 : f32
      %34 = vector.broadcast %cst_21 : f32 to vector<16x1xf32>
      %35 = arith.addf %31, %34 : vector<16x1xf32>
      %36 = math.rsqrt %35 : vector<16x1xf32>
      %37 = vector.broadcast %36 : vector<16x1xf32> to vector<16x32xf32>
      %38 = arith.mulf %33, %37 : vector<16x32xf32>
      %c0_22 = arith.constant 0 : index
      %c0_23 = arith.constant 0 : index
      %39 = vector.load %arg6[%c0_22, %c0_23] : memref<1x32xf32, #tpu.memory_space<vmem>>, vector<1x32xf32>
      %40 = vector.broadcast %39 : vector<1x32xf32> to vector<16x32xf32>
      %41 = arith.mulf %38, %40 : vector<16x32xf32>
      %c0_24 = arith.constant 0 : index
      %c0_25 = arith.constant 0 : index
      %42 = vector.load %arg7[%c0_24, %c0_25] : memref<1x32xf32, #tpu.memory_space<vmem>>, vector<1x32xf32>
      %43 = vector.broadcast %42 : vector<1x32xf32> to vector<16x32xf32>
      %44 = arith.addf %41, %43 : vector<16x32xf32>
      %45 = arith.truncf %44 : vector<16x32xf32> to vector<16x32xbf16>
      %c0_26 = arith.constant 0 : index
      %c0_27 = arith.constant 0 : index
      %46 = vector.load %arg8[%c0_26, %c0_27] : memref<16x32xbf16, #tpu.memory_space<vmem>>, vector<16x32xbf16>
      tpu.vector_store %arg8[%c0_26, %c0_27], %45 {strides = array<i32>} : memref<16x32xbf16, #tpu.memory_space<vmem>>, vector<16x32xbf16>,
    } else {
    }
    return
  }
  func.func @transform_0(%arg0: i32, %arg1: i32) -> (i32, i32, i32) {
    %c0_i32 = arith.constant 0 : i32
    %c0_i32_0 = arith.constant 0 : i32
    return %arg1, %arg0, %c0_i32 : i32, i32, i32
  }
  func.func @transform_1(%arg0: i32, %arg1: i32) -> (i32, i32, i32) {
    %c0_i32 = arith.constant 0 : i32
    %c0_i32_0 = arith.constant 0 : i32
    %c0_i32_1 = arith.constant 0 : i32
    return %arg1, %c0_i32, %c0_i32_0 : i32, i32, i32
  }
  func.func @transform_2(%arg0: i32, %arg1: i32) -> (i32, i32) {
    %c0_i32 = arith.constant 0 : i32
    %c0_i32_0 = arith.constant 0 : i32
    %c0_i32_1 = arith.constant 0 : i32
    return %c0_i32, %c0_i32_0 : i32, i32
  }
  func.func @transform_3(%arg0: i32, %arg1: i32) -> (i32, i32) {
    %c0_i32 = arith.constant 0 : i32
    %c0_i32_0 = arith.constant 0 : i32
    return %arg0, %c0_i32 : i32, i32
  }
  func.func @transform_4(%arg0: i32, %arg1: i32) -> (i32, i32) {
    %c0_i32 = arith.constant 0 : i32
    %c0_i32_0 = arith.constant 0 : i32
    %c0_i32_1 = arith.constant 0 : i32
    return %c0_i32, %c0_i32_0 : i32, i32
  }
  func.func @transform_5(%arg0: i32, %arg1: i32) -> (i32, i32) {
    %c0_i32 = arith.constant 0 : i32
    %c0_i32_0 = arith.constant 0 : i32
    %c0_i32_1 = arith.constant 0 : i32
    return %c0_i32, %c0_i32_0 : i32, i32
  }
  func.func @transform_6(%arg0: i32, %arg1: i32) -> (i32, i32) {
    %c0_i32 = arith.constant 0 : i32
    %c0_i32_0 = arith.constant 0 : i32
    return %arg0, %c0_i32 : i32, i32
  }
}

module attributes {stable_mosaic.version = 11 : i64} {
  func.func @_mha_kernel(%arg0: i32, %arg1: i32, %arg2: i32, %arg3: memref<1x1x1x8x8xbf16, #tpu.memory_space<vmem>>, %arg4: memref<1x1x1x8x8xbf16, #tpu.memory_space<vmem>>, %arg5: memref<1x1x1x8x8xbf16, #tpu.memory_space<vmem>>, %arg6: memref<8x8xf32, #tpu.memory_space<vmem>>, %arg7: memref<1x1x8xf32, #tpu.memory_space<vmem>>, %arg8: memref<1x1x8x8xbf16, #tpu.memory_space<vmem>>) attributes {dimension_semantics = [#tpu.dimension_semantics<parallel>, #tpu.dimension_semantics<parallel>, #tpu.dimension_semantics<parallel>], iteration_bounds = array<i64: 2, 4, 1>, scalar_prefetch = 0 : i64, scratch_operands = 0 : i64, tpu.core_type = #tpu.core_type<tc>, window_params = [{transform_indices = @transform_0, window_bounds = array<i64: 1, 1, 1, 8, 8>}, {transform_indices = @transform_1, window_bounds = array<i64: 1, 1, 1, 8, 8>}, {transform_indices = @transform_2, window_bounds = array<i64: 1, 1, 1, 8, 8>}, {transform_indices = @transform_3, window_bounds = array<i64: 8, 8>}, {transform_indices = @transform_4, window_bounds = array<i64: 1, 1, 8>}, {transform_indices = @transform_5, window_bounds = array<i64: 1, 1, 8, 8>}]} {
    %c0 = arith.constant 0 : index
    %c0_0 = arith.constant 0 : index
    %c0_1 = arith.constant 0 : index
    %c0_2 = arith.constant 0 : index
    %c0_3 = arith.constant 0 : index
    %0 = vector.load %arg3[%c0, %c0_0, %c0_1, %c0_2, %c0_3] : memref<1x1x1x8x8xbf16, #tpu.memory_space<vmem>>, vector<1x1x1x8x8xbf16>
    %1 = vector.shape_cast %0 : vector<1x1x1x8x8xbf16> to vector<8x8xbf16>
    %c0_4 = arith.constant 0 : index
    %c0_5 = arith.constant 0 : index
    %c0_6 = arith.constant 0 : index
    %c0_7 = arith.constant 0 : index
    %c0_8 = arith.constant 0 : index
    %2 = vector.load %arg4[%c0_4, %c0_5, %c0_6, %c0_7, %c0_8] : memref<1x1x1x8x8xbf16, #tpu.memory_space<vmem>>, vector<1x1x1x8x8xbf16>
    %3 = vector.shape_cast %2 : vector<1x1x1x8x8xbf16> to vector<8x8xbf16>
    %c0_9 = arith.constant 0 : index
    %c0_10 = arith.constant 0 : index
    %c0_11 = arith.constant 0 : index
    %c0_12 = arith.constant 0 : index
    %c0_13 = arith.constant 0 : index
    %4 = vector.load %arg5[%c0_9, %c0_10, %c0_11, %c0_12, %c0_13] : memref<1x1x1x8x8xbf16, #tpu.memory_space<vmem>>, vector<1x1x1x8x8xbf16>
    %5 = vector.shape_cast %4 : vector<1x1x1x8x8xbf16> to vector<8x8xbf16>
    %c0_14 = arith.constant 0 : index
    %c0_15 = arith.constant 0 : index
    %6 = vector.load %arg6[%c0_14, %c0_15] : memref<8x8xf32, #tpu.memory_space<vmem>>, vector<8x8xf32>
    %c0_16 = arith.constant 0 : index
    %c0_17 = arith.constant 0 : index
    %c0_18 = arith.constant 0 : index
    %7 = vector.load %arg7[%c0_16, %c0_17, %c0_18] : memref<1x1x8xf32, #tpu.memory_space<vmem>>, vector<1x1x8xf32>
    %8 = vector.shape_cast %7 : vector<1x1x8xf32> to vector<1x8xf32>
    %9 = vector.broadcast %8 : vector<1x8xf32> to vector<8x8xf32>
    %10 = arith.addf %6, %9 : vector<8x8xf32>
    %cst = arith.constant dense<0.000000e+00> : vector<8x8xf32>
    %11 = tpu.matmul %1, %3, %cst {dimension_numbers = #tpu.dot_dimension_numbers<[1], [1], [0], [0], [0, 0, 1, 0], [], []>} : vector<8x8xbf16>, vector<8x8xbf16>, vector<8x8xf32> -> vector<8x8xf32>
    %cst_19 = arith.constant 0.353553385 : f32
    %12 = vector.broadcast %cst_19 : f32 to vector<8x8xf32>
    %13 = arith.mulf %11, %12 : vector<8x8xf32>
    %14 = arith.addf %13, %10 : vector<8x8xf32>
    %cst_20 = arith.constant dense<0xFF800000> : vector<8xf32>
    %15 = vector.multi_reduction <maximumf>, %14, %cst_20 [1] : vector<8x8xf32> to vector<8xf32>
    %16 = vector.shape_cast %15 : vector<8xf32> to vector<8x1xf32>
    %17 = vector.broadcast %16 : vector<8x1xf32> to vector<8x8xf32>
    %18 = arith.subf %14, %17 : vector<8x8xf32>
    %19 = math.exp %18 : vector<8x8xf32>
    %cst_21 = arith.constant dense<0.000000e+00> : vector<8xf32>
    %20 = vector.multi_reduction <add>, %19, %cst_21 [1] : vector<8x8xf32> to vector<8xf32>
    %21 = vector.shape_cast %20 : vector<8xf32> to vector<8x1xf32>
    %22 = tpu.reciprocal %21 {approx = true} : vector<8x1xf32> -> vector<8x1xf32>
    %23 = vector.broadcast %22 : vector<8x1xf32> to vector<8x8xf32>
    %24 = arith.mulf %19, %23 : vector<8x8xf32>
    %25 = arith.truncf %24 : vector<8x8xf32> to vector<8x8xbf16>
    %cst_22 = arith.constant dense<0.000000e+00> : vector<8x8xf32>
    %26 = tpu.matmul %25, %5, %cst_22 {dimension_numbers = #tpu.dot_dimension_numbers<[1], [0], [0], [1], [0, 0, 1, 1], [], []>} : vector<8x8xbf16>, vector<8x8xbf16>, vector<8x8xf32> -> vector<8x8xf32>
    %27 = arith.truncf %26 : vector<8x8xf32> to vector<8x8xbf16>
    %c0_23 = arith.constant 0 : index
    %c0_24 = arith.constant 0 : index
    %c0_25 = arith.constant 0 : index
    %c0_26 = arith.constant 0 : index
    %28 = vector.load %arg8[%c0_23, %c0_24, %c0_25, %c0_26] : memref<1x1x8x8xbf16, #tpu.memory_space<vmem>>, vector<1x1x8x8xbf16>
    %29 = vector.shape_cast %28 : vector<1x1x8x8xbf16> to vector<8x8xbf16>
    %30 = vector.shape_cast %27 : vector<8x8xbf16> to vector<1x1x8x8xbf16>
    tpu.vector_store %arg8[%c0_23, %c0_24, %c0_25, %c0_26], %30 {strides = array<i32>} : memref<1x1x8x8xbf16, #tpu.memory_space<vmem>>, vector<1x1x8x8xbf16>,
    return
  }
  func.func @transform_0(%arg0: i32, %arg1: i32, %arg2: i32) -> (i32, i32, i32, i32, i32) {
    %c0_i32 = arith.constant 0 : i32
    %c0_i32_0 = arith.constant 0 : i32
    %c0_i32_1 = arith.constant 0 : i32
    return %c0_i32, %arg1, %arg0, %arg2, %c0_i32_0 : i32, i32, i32, i32, i32
  }
  func.func @transform_1(%arg0: i32, %arg1: i32, %arg2: i32) -> (i32, i32, i32, i32, i32) {
    %c1_i32 = arith.constant 1 : i32
    %c0_i32 = arith.constant 0 : i32
    %c0_i32_0 = arith.constant 0 : i32
    %c0_i32_1 = arith.constant 0 : i32
    return %c1_i32, %arg1, %arg0, %c0_i32, %c0_i32_0 : i32, i32, i32, i32, i32
  }
  func.func @transform_2(%arg0: i32, %arg1: i32, %arg2: i32) -> (i32, i32, i32, i32, i32) {
    %c2_i32 = arith.constant 2 : i32
    %c0_i32 = arith.constant 0 : i32
    %c0_i32_0 = arith.constant 0 : i32
    %c0_i32_1 = arith.constant 0 : i32
    return %c2_i32, %arg1, %arg0, %c0_i32, %c0_i32_0 : i32, i32, i32, i32, i32
  }
  func.func @transform_3(%arg0: i32, %arg1: i32, %arg2: i32) -> (i32, i32) {
    %c0_i32 = arith.constant 0 : i32
    %c0_i32_0 = arith.constant 0 : i32
    return %arg2, %c0_i32 : i32, i32
  }
  func.func @transform_4(%arg0: i32, %arg1: i32, %arg2: i32) -> (i32, i32, i32) {
    %c0_i32 = arith.constant 0 : i32
    %c0_i32_0 = arith.constant 0 : i32
    %c0_i32_1 = arith.constant 0 : i32
    return %arg0, %c0_i32, %c0_i32_0 : i32, i32, i32
  }
  func.func @transform_5(%arg0: i32, %arg1: i32, %arg2: i32) -> (i32, i32, i32, i32) {
    %c0_i32 = arith.constant 0 : i32
    %c0_i32_0 = arith.constant 0 : i32
    return %arg1, %arg0, %arg2, %c0_i32 : i32, i32, i32, i32
  }
}

module attributes {stable_mosaic.version = 11 : i64} {
  func.func @_head_proj_kernel(%arg0: i32, %arg1: i32, %arg2: i32, %arg3: i32, %arg4: memref<16x32xbf16, #tpu.memory_space<vmem>>, %arg5: memref<1x1x32x8xbf16, #tpu.memory_space<vmem>>, %arg6: memref<1x1x1x8xf32, #tpu.memory_space<vmem>>, %arg7: memref<1x1x16x8xbf16, #tpu.memory_space<vmem>>, %arg8: memref<16x8xf32, #tpu.memory_space<vmem>>) attributes {dimension_semantics = [#tpu.dimension_semantics<parallel>, #tpu.dimension_semantics<parallel>, #tpu.dimension_semantics<parallel>, #tpu.dimension_semantics<arbitrary>], iteration_bounds = array<i64: 1, 4, 1, 1>, scalar_prefetch = 0 : i64, scratch_operands = 1 : i64, tpu.core_type = #tpu.core_type<tc>, window_params = [{transform_indices = @transform_0, window_bounds = array<i64: 16, 32>}, {transform_indices = @transform_1, window_bounds = array<i64: 1, 1, 32, 8>}, {transform_indices = @transform_2, window_bounds = array<i64: 1, 1, 1, 8>}, {transform_indices = @transform_3, window_bounds = array<i64: 1, 1, 16, 8>}]} {
    %c0_i32 = arith.constant 0 : i32
    %0 = arith.cmpi eq, %arg3, %c0_i32 : i32
    %1 = arith.extui %0 : i1 to i32
    %c0_i32_0 = arith.constant 0 : i32
    %2 = arith.cmpi ne, %1, %c0_i32_0 : i32
    scf.if %2 {
      %cst_12 = arith.constant 0.000000e+00 : f32
      %13 = vector.broadcast %cst_12 : f32 to vector<16x8xf32>
      %c0_13 = arith.constant 0 : index
      %c0_14 = arith.constant 0 : index
      %14 = vector.load %arg8[%c0_13, %c0_14] : memref<16x8xf32, #tpu.memory_space<vmem>>, vector<16x8xf32>
      tpu.vector_store %arg8[%c0_13, %c0_14], %13 {strides = array<i32>} : memref<16x8xf32, #tpu.memory_space<vmem>>, vector<16x8xf32>,
    } else {
    }
    %c0 = arith.constant 0 : index
    %c0_1 = arith.constant 0 : index
    %3 = vector.load %arg8[%c0, %c0_1] : memref<16x8xf32, #tpu.memory_space<vmem>>, vector<16x8xf32>
    %c0_2 = arith.constant 0 : index
    %c0_3 = arith.constant 0 : index
    %4 = vector.load %arg4[%c0_2, %c0_3] : memref<16x32xbf16, #tpu.memory_space<vmem>>, vector<16x32xbf16>
    %c0_4 = arith.constant 0 : index
    %c0_5 = arith.constant 0 : index
    %c0_6 = arith.constant 0 : index
    %c0_7 = arith.constant 0 : index
    %5 = vector.load %arg5[%c0_4, %c0_5, %c0_6, %c0_7] : memref<1x1x32x8xbf16, #tpu.memory_space<vmem>>, vector<1x1x32x8xbf16>
    %6 = vector.shape_cast %5 : vector<1x1x32x8xbf16> to vector<32x8xbf16>
    %cst = arith.constant dense<0.000000e+00> : vector<16x8xf32>
    %7 = tpu.matmul %4, %6, %cst {dimension_numbers = #tpu.dot_dimension_numbers<[1], [0], [0], [1], [0, 0, 1, 1], [], []>} : vector<16x32xbf16>, vector<32x8xbf16>, vector<16x8xf32> -> vector<16x8xf32>
    %8 = arith.addf %3, %7 : vector<16x8xf32>
    %c0_8 = arith.constant 0 : index
    %c0_9 = arith.constant 0 : index
    %9 = vector.load %arg8[%c0_8, %c0_9] : memref<16x8xf32, #tpu.memory_space<vmem>>, vector<16x8xf32>
    tpu.vector_store %arg8[%c0_8, %c0_9], %8 {strides = array<i32>} : memref<16x8xf32, #tpu.memory_space<vmem>>, vector<16x8xf32>,
    %c0_i32_10 = arith.constant 0 : i32
    %10 = arith.cmpi eq, %arg3, %c0_i32_10 : i32
    %11 = arith.extui %10 : i1 to i32
    %c0_i32_11 = arith.constant 0 : i32
    %12 = arith.cmpi ne, %11, %c0_i32_11 : i32
    scf.if %12 {
      %c0_12 = arith.constant 0 : index
      %c0_13 = arith.constant 0 : index
      %13 = vector.load %arg8[%c0_12, %c0_13] : memref<16x8xf32, #tpu.memory_space<vmem>>, vector<16x8xf32>
      %c0_14 = arith.constant 0 : index
      %c0_15 = arith.constant 0 : index
      %c0_16 = arith.constant 0 : index
      %c0_17 = arith.constant 0 : index
      %14 = vector.load %arg6[%c0_14, %c0_15, %c0_16, %c0_17] : memref<1x1x1x8xf32, #tpu.memory_space<vmem>>, vector<1x1x1x8xf32>
      %15 = vector.shape_cast %14 : vector<1x1x1x8xf32> to vector<1x8xf32>
      %16 = vector.broadcast %15 : vector<1x8xf32> to vector<16x8xf32>
      %17 = arith.addf %13, %16 : vector<16x8xf32>
      %18 = arith.truncf %17 : vector<16x8xf32> to vector<16x8xbf16>
      %c0_18 = arith.constant 0 : index
      %c0_19 = arith.constant 0 : index
      %c0_20 = arith.constant 0 : index
      %c0_21 = arith.constant 0 : index
      %19 = vector.load %arg7[%c0_18, %c0_19, %c0_20, %c0_21] : memref<1x1x16x8xbf16, #tpu.memory_space<vmem>>, vector<1x1x16x8xbf16>
      %20 = vector.shape_cast %19 : vector<1x1x16x8xbf16> to vector<16x8xbf16>
      %21 = vector.shape_cast %18 : vector<16x8xbf16> to vector<1x1x16x8xbf16>
      tpu.vector_store %arg7[%c0_18, %c0_19, %c0_20, %c0_21], %21 {strides = array<i32>} : memref<1x1x16x8xbf16, #tpu.memory_space<vmem>>, vector<1x1x16x8xbf16>,
    } else {
    }
    return
  }
  func.func @transform_0(%arg0: i32, %arg1: i32, %arg2: i32, %arg3: i32) -> (i32, i32) {
    %c0_i32 = arith.constant 0 : i32
    return %arg2, %arg3 : i32, i32
  }
  func.func @transform_1(%arg0: i32, %arg1: i32, %arg2: i32, %arg3: i32) -> (i32, i32, i32, i32) {
    %c0_i32 = arith.constant 0 : i32
    %c0_i32_0 = arith.constant 0 : i32
    return %arg0, %arg1, %arg3, %c0_i32 : i32, i32, i32, i32
  }
  func.func @transform_2(%arg0: i32, %arg1: i32, %arg2: i32, %arg3: i32) -> (i32, i32, i32, i32) {
    %c0_i32 = arith.constant 0 : i32
    %c0_i32_0 = arith.constant 0 : i32
    %c0_i32_1 = arith.constant 0 : i32
    return %arg0, %arg1, %c0_i32, %c0_i32_0 : i32, i32, i32, i32
  }
  func.func @transform_3(%arg0: i32, %arg1: i32, %arg2: i32, %arg3: i32) -> (i32, i32, i32, i32) {
    %c0_i32 = arith.constant 0 : i32
    %c0_i32_0 = arith.constant 0 : i32
    return %arg0, %arg1, %arg2, %c0_i32 : i32, i32, i32, i32
  }
}

module attributes {stable_mosaic.version = 11 : i64} {
  func.func @_mha_kernel(%arg0: i32, %arg1: i32, %arg2: i32, %arg3: memref<1x1x1x8x8xbf16, #tpu.memory_space<vmem>>, %arg4: memref<1x1x1x8x8xbf16, #tpu.memory_space<vmem>>, %arg5: memref<1x1x1x8x8xbf16, #tpu.memory_space<vmem>>, %arg6: memref<8x8xf32, #tpu.memory_space<vmem>>, %arg7: memref<1x1x8xf32, #tpu.memory_space<vmem>>, %arg8: memref<1x1x8x8xbf16, #tpu.memory_space<vmem>>) attributes {dimension_semantics = [#tpu.dimension_semantics<parallel>, #tpu.dimension_semantics<parallel>, #tpu.dimension_semantics<parallel>], iteration_bounds = array<i64: 2, 4, 1>, scalar_prefetch = 0 : i64, scratch_operands = 0 : i64, tpu.core_type = #tpu.core_type<tc>, window_params = [{transform_indices = @transform_0, window_bounds = array<i64: 1, 1, 1, 8, 8>}, {transform_indices = @transform_1, window_bounds = array<i64: 1, 1, 1, 8, 8>}, {transform_indices = @transform_2, window_bounds = array<i64: 1, 1, 1, 8, 8>}, {transform_indices = @transform_3, window_bounds = array<i64: 8, 8>}, {transform_indices = @transform_4, window_bounds = array<i64: 1, 1, 8>}, {transform_indices = @transform_5, window_bounds = array<i64: 1, 1, 8, 8>}]} {
    %c0 = arith.constant 0 : index
    %c0_0 = arith.constant 0 : index
    %c0_1 = arith.constant 0 : index
    %c0_2 = arith.constant 0 : index
    %c0_3 = arith.constant 0 : index
    %0 = vector.load %arg3[%c0, %c0_0, %c0_1, %c0_2, %c0_3] : memref<1x1x1x8x8xbf16, #tpu.memory_space<vmem>>, vector<1x1x1x8x8xbf16>
    %1 = vector.shape_cast %0 : vector<1x1x1x8x8xbf16> to vector<8x8xbf16>
    %c0_4 = arith.constant 0 : index
    %c0_5 = arith.constant 0 : index
    %c0_6 = arith.constant 0 : index
    %c0_7 = arith.constant 0 : index
    %c0_8 = arith.constant 0 : index
    %2 = vector.load %arg4[%c0_4, %c0_5, %c0_6, %c0_7, %c0_8] : memref<1x1x1x8x8xbf16, #tpu.memory_space<vmem>>, vector<1x1x1x8x8xbf16>
    %3 = vector.shape_cast %2 : vector<1x1x1x8x8xbf16> to vector<8x8xbf16>
    %c0_9 = arith.constant 0 : index
    %c0_10 = arith.constant 0 : index
    %c0_11 = arith.constant 0 : index
    %c0_12 = arith.constant 0 : index
    %c0_13 = arith.constant 0 : index
    %4 = vector.load %arg5[%c0_9, %c0_10, %c0_11, %c0_12, %c0_13] : memref<1x1x1x8x8xbf16, #tpu.memory_space<vmem>>, vector<1x1x1x8x8xbf16>
    %5 = vector.shape_cast %4 : vector<1x1x1x8x8xbf16> to vector<8x8xbf16>
    %c0_14 = arith.constant 0 : index
    %c0_15 = arith.constant 0 : index
    %6 = vector.load %arg6[%c0_14, %c0_15] : memref<8x8xf32, #tpu.memory_space<vmem>>, vector<8x8xf32>
    %c0_16 = arith.constant 0 : index
    %c0_17 = arith.constant 0 : index
    %c0_18 = arith.constant 0 : index
    %7 = vector.load %arg7[%c0_16, %c0_17, %c0_18] : memref<1x1x8xf32, #tpu.memory_space<vmem>>, vector<1x1x8xf32>
    %8 = vector.shape_cast %7 : vector<1x1x8xf32> to vector<1x8xf32>
    %9 = vector.broadcast %8 : vector<1x8xf32> to vector<8x8xf32>
    %10 = arith.addf %6, %9 : vector<8x8xf32>
    %cst = arith.constant dense<0.000000e+00> : vector<8x8xf32>
    %11 = tpu.matmul %1, %3, %cst {dimension_numbers = #tpu.dot_dimension_numbers<[1], [1], [0], [0], [0, 0, 1, 0], [], []>} : vector<8x8xbf16>, vector<8x8xbf16>, vector<8x8xf32> -> vector<8x8xf32>
    %cst_19 = arith.constant 0.353553385 : f32
    %12 = vector.broadcast %cst_19 : f32 to vector<8x8xf32>
    %13 = arith.mulf %11, %12 : vector<8x8xf32>
    %14 = arith.addf %13, %10 : vector<8x8xf32>
    %cst_20 = arith.constant dense<0xFF800000> : vector<8xf32>
    %15 = vector.multi_reduction <maximumf>, %14, %cst_20 [1] : vector<8x8xf32> to vector<8xf32>
    %16 = vector.shape_cast %15 : vector<8xf32> to vector<8x1xf32>
    %17 = vector.broadcast %16 : vector<8x1xf32> to vector<8x8xf32>
    %18 = arith.subf %14, %17 : vector<8x8xf32>
    %19 = math.exp %18 : vector<8x8xf32>
    %cst_21 = arith.constant dense<0.000000e+00> : vector<8xf32>
    %20 = vector.multi_reduction <add>, %19, %cst_21 [1] : vector<8x8xf32> to vector<8xf32>
    %21 = vector.shape_cast %20 : vector<8xf32> to vector<8x1xf32>
    %22 = tpu.reciprocal %21 {approx = true} : vector<8x1xf32> -> vector<8x1xf32>
    %23 = vector.broadcast %22 : vector<8x1xf32> to vector<8x8xf32>
    %24 = arith.mulf %19, %23 : vector<8x8xf32>
    %25 = arith.truncf %24 : vector<8x8xf32> to vector<8x8xbf16>
    %cst_22 = arith.constant dense<0.000000e+00> : vector<8x8xf32>
    %26 = tpu.matmul %25, %5, %cst_22 {dimension_numbers = #tpu.dot_dimension_numbers<[1], [0], [0], [1], [0, 0, 1, 1], [], []>} : vector<8x8xbf16>, vector<8x8xbf16>, vector<8x8xf32> -> vector<8x8xf32>
    %27 = arith.truncf %26 : vector<8x8xf32> to vector<8x8xbf16>
    %c0_23 = arith.constant 0 : index
    %c0_24 = arith.constant 0 : index
    %c0_25 = arith.constant 0 : index
    %c0_26 = arith.constant 0 : index
    %28 = vector.load %arg8[%c0_23, %c0_24, %c0_25, %c0_26] : memref<1x1x8x8xbf16, #tpu.memory_space<vmem>>, vector<1x1x8x8xbf16>
    %29 = vector.shape_cast %28 : vector<1x1x8x8xbf16> to vector<8x8xbf16>
    %30 = vector.shape_cast %27 : vector<8x8xbf16> to vector<1x1x8x8xbf16>
    tpu.vector_store %arg8[%c0_23, %c0_24, %c0_25, %c0_26], %30 {strides = array<i32>} : memref<1x1x8x8xbf16, #tpu.memory_space<vmem>>, vector<1x1x8x8xbf16>,
    return
  }
  func.func @transform_0(%arg0: i32, %arg1: i32, %arg2: i32) -> (i32, i32, i32, i32, i32) {
    %c0_i32 = arith.constant 0 : i32
    %c0_i32_0 = arith.constant 0 : i32
    %c0_i32_1 = arith.constant 0 : i32
    return %c0_i32, %arg1, %arg0, %arg2, %c0_i32_0 : i32, i32, i32, i32, i32
  }
  func.func @transform_1(%arg0: i32, %arg1: i32, %arg2: i32) -> (i32, i32, i32, i32, i32) {
    %c0_i32 = arith.constant 0 : i32
    %c0_i32_0 = arith.constant 0 : i32
    %c0_i32_1 = arith.constant 0 : i32
    %c0_i32_2 = arith.constant 0 : i32
    return %c0_i32, %arg1, %arg0, %c0_i32_0, %c0_i32_1 : i32, i32, i32, i32, i32
  }
  func.func @transform_2(%arg0: i32, %arg1: i32, %arg2: i32) -> (i32, i32, i32, i32, i32) {
    %c1_i32 = arith.constant 1 : i32
    %c0_i32 = arith.constant 0 : i32
    %c0_i32_0 = arith.constant 0 : i32
    %c0_i32_1 = arith.constant 0 : i32
    return %c1_i32, %arg1, %arg0, %c0_i32, %c0_i32_0 : i32, i32, i32, i32, i32
  }
  func.func @transform_3(%arg0: i32, %arg1: i32, %arg2: i32) -> (i32, i32) {
    %c0_i32 = arith.constant 0 : i32
    %c0_i32_0 = arith.constant 0 : i32
    return %arg2, %c0_i32 : i32, i32
  }
  func.func @transform_4(%arg0: i32, %arg1: i32, %arg2: i32) -> (i32, i32, i32) {
    %c0_i32 = arith.constant 0 : i32
    %c0_i32_0 = arith.constant 0 : i32
    %c0_i32_1 = arith.constant 0 : i32
    return %arg0, %c0_i32, %c0_i32_0 : i32, i32, i32
  }
  func.func @transform_5(%arg0: i32, %arg1: i32, %arg2: i32) -> (i32, i32, i32, i32) {
    %c0_i32 = arith.constant 0 : i32
    %c0_i32_0 = arith.constant 0 : i32
    return %arg1, %arg0, %arg2, %c0_i32 : i32, i32, i32, i32
  }
}

module attributes {stable_mosaic.version = 11 : i64} {
  func.func @_head_proj_kernel(%arg0: i32, %arg1: i32, %arg2: i32, %arg3: i32, %arg4: memref<16x32xbf16, #tpu.memory_space<vmem>>, %arg5: memref<1x1x32x8xbf16, #tpu.memory_space<vmem>>, %arg6: memref<1x1x1x8xf32, #tpu.memory_space<vmem>>, %arg7: memref<1x1x16x8xbf16, #tpu.memory_space<vmem>>, %arg8: memref<16x8xf32, #tpu.memory_space<vmem>>) attributes {dimension_semantics = [#tpu.dimension_semantics<parallel>, #tpu.dimension_semantics<parallel>, #tpu.dimension_semantics<parallel>, #tpu.dimension_semantics<arbitrary>], iteration_bounds = array<i64: 2, 4, 1, 1>, scalar_prefetch = 0 : i64, scratch_operands = 1 : i64, tpu.core_type = #tpu.core_type<tc>, window_params = [{transform_indices = @transform_0, window_bounds = array<i64: 16, 32>}, {transform_indices = @transform_1, window_bounds = array<i64: 1, 1, 32, 8>}, {transform_indices = @transform_2, window_bounds = array<i64: 1, 1, 1, 8>}, {transform_indices = @transform_3, window_bounds = array<i64: 1, 1, 16, 8>}]} {
    %c0_i32 = arith.constant 0 : i32
    %0 = arith.cmpi eq, %arg3, %c0_i32 : i32
    %1 = arith.extui %0 : i1 to i32
    %c0_i32_0 = arith.constant 0 : i32
    %2 = arith.cmpi ne, %1, %c0_i32_0 : i32
    scf.if %2 {
      %cst_12 = arith.constant 0.000000e+00 : f32
      %13 = vector.broadcast %cst_12 : f32 to vector<16x8xf32>
      %c0_13 = arith.constant 0 : index
      %c0_14 = arith.constant 0 : index
      %14 = vector.load %arg8[%c0_13, %c0_14] : memref<16x8xf32, #tpu.memory_space<vmem>>, vector<16x8xf32>
      tpu.vector_store %arg8[%c0_13, %c0_14], %13 {strides = array<i32>} : memref<16x8xf32, #tpu.memory_space<vmem>>, vector<16x8xf32>,
    } else {
    }
    %c0 = arith.constant 0 : index
    %c0_1 = arith.constant 0 : index
    %3 = vector.load %arg8[%c0, %c0_1] : memref<16x8xf32, #tpu.memory_space<vmem>>, vector<16x8xf32>
    %c0_2 = arith.constant 0 : index
    %c0_3 = arith.constant 0 : index
    %4 = vector.load %arg4[%c0_2, %c0_3] : memref<16x32xbf16, #tpu.memory_space<vmem>>, vector<16x32xbf16>
    %c0_4 = arith.constant 0 : index
    %c0_5 = arith.constant 0 : index
    %c0_6 = arith.constant 0 : index
    %c0_7 = arith.constant 0 : index
    %5 = vector.load %arg5[%c0_4, %c0_5, %c0_6, %c0_7] : memref<1x1x32x8xbf16, #tpu.memory_space<vmem>>, vector<1x1x32x8xbf16>
    %6 = vector.shape_cast %5 : vector<1x1x32x8xbf16> to vector<32x8xbf16>
    %cst = arith.constant dense<0.000000e+00> : vector<16x8xf32>
    %7 = tpu.matmul %4, %6, %cst {dimension_numbers = #tpu.dot_dimension_numbers<[1], [0], [0], [1], [0, 0, 1, 1], [], []>} : vector<16x32xbf16>, vector<32x8xbf16>, vector<16x8xf32> -> vector<16x8xf32>
    %8 = arith.addf %3, %7 : vector<16x8xf32>
    %c0_8 = arith.constant 0 : index
    %c0_9 = arith.constant 0 : index
    %9 = vector.load %arg8[%c0_8, %c0_9] : memref<16x8xf32, #tpu.memory_space<vmem>>, vector<16x8xf32>
    tpu.vector_store %arg8[%c0_8, %c0_9], %8 {strides = array<i32>} : memref<16x8xf32, #tpu.memory_space<vmem>>, vector<16x8xf32>,
    %c0_i32_10 = arith.constant 0 : i32
    %10 = arith.cmpi eq, %arg3, %c0_i32_10 : i32
    %11 = arith.extui %10 : i1 to i32
    %c0_i32_11 = arith.constant 0 : i32
    %12 = arith.cmpi ne, %11, %c0_i32_11 : i32
    scf.if %12 {
      %c0_12 = arith.constant 0 : index
      %c0_13 = arith.constant 0 : index
      %13 = vector.load %arg8[%c0_12, %c0_13] : memref<16x8xf32, #tpu.memory_space<vmem>>, vector<16x8xf32>
      %c0_14 = arith.constant 0 : index
      %c0_15 = arith.constant 0 : index
      %c0_16 = arith.constant 0 : index
      %c0_17 = arith.constant 0 : index
      %14 = vector.load %arg6[%c0_14, %c0_15, %c0_16, %c0_17] : memref<1x1x1x8xf32, #tpu.memory_space<vmem>>, vector<1x1x1x8xf32>
      %15 = vector.shape_cast %14 : vector<1x1x1x8xf32> to vector<1x8xf32>
      %16 = vector.broadcast %15 : vector<1x8xf32> to vector<16x8xf32>
      %17 = arith.addf %13, %16 : vector<16x8xf32>
      %18 = arith.truncf %17 : vector<16x8xf32> to vector<16x8xbf16>
      %c0_18 = arith.constant 0 : index
      %c0_19 = arith.constant 0 : index
      %c0_20 = arith.constant 0 : index
      %c0_21 = arith.constant 0 : index
      %19 = vector.load %arg7[%c0_18, %c0_19, %c0_20, %c0_21] : memref<1x1x16x8xbf16, #tpu.memory_space<vmem>>, vector<1x1x16x8xbf16>
      %20 = vector.shape_cast %19 : vector<1x1x16x8xbf16> to vector<16x8xbf16>
      %21 = vector.shape_cast %18 : vector<16x8xbf16> to vector<1x1x16x8xbf16>
      tpu.vector_store %arg7[%c0_18, %c0_19, %c0_20, %c0_21], %21 {strides = array<i32>} : memref<1x1x16x8xbf16, #tpu.memory_space<vmem>>, vector<1x1x16x8xbf16>,
    } else {
    }
    return
  }
  func.func @transform_0(%arg0: i32, %arg1: i32, %arg2: i32, %arg3: i32) -> (i32, i32) {
    %c0_i32 = arith.constant 0 : i32
    return %arg2, %arg3 : i32, i32
  }
  func.func @transform_1(%arg0: i32, %arg1: i32, %arg2: i32, %arg3: i32) -> (i32, i32, i32, i32) {
    %c0_i32 = arith.constant 0 : i32
    %c0_i32_0 = arith.constant 0 : i32
    return %arg0, %arg1, %arg3, %c0_i32 : i32, i32, i32, i32
  }
  func.func @transform_2(%arg0: i32, %arg1: i32, %arg2: i32, %arg3: i32) -> (i32, i32, i32, i32) {
    %c0_i32 = arith.constant 0 : i32
    %c0_i32_0 = arith.constant 0 : i32
    %c0_i32_1 = arith.constant 0 : i32
    return %arg0, %arg1, %c0_i32, %c0_i32_0 : i32, i32, i32, i32
  }
  func.func @transform_3(%arg0: i32, %arg1: i32, %arg2: i32, %arg3: i32) -> (i32, i32, i32, i32) {
    %c0_i32 = arith.constant 0 : i32
    %c0_i32_0 = arith.constant 0 : i32
    return %arg0, %arg1, %arg2, %c0_i32 : i32, i32, i32, i32
  }
}

module attributes {stable_mosaic.version = 11 : i64} {
  func.func @_matmul_kernel(%arg0: i32, %arg1: i32, %arg2: i32, %arg3: memref<16x32xbf16, #tpu.memory_space<vmem>>, %arg4: memref<32x50xbf16, #tpu.memory_space<vmem>>, %arg5: memref<1x50xf32, #tpu.memory_space<vmem>>, %arg6: memref<16x50xf32, #tpu.memory_space<vmem>>, %arg7: memref<16x50xf32, #tpu.memory_space<vmem>>) attributes {dimension_semantics = [#tpu.dimension_semantics<parallel>, #tpu.dimension_semantics<parallel>, #tpu.dimension_semantics<arbitrary>], iteration_bounds = array<i64: 1, 1, 1>, scalar_prefetch = 0 : i64, scratch_operands = 1 : i64, tpu.core_type = #tpu.core_type<tc>, window_params = [{transform_indices = @transform_0, window_bounds = array<i64: 16, 32>}, {transform_indices = @transform_1, window_bounds = array<i64: 32, 50>}, {transform_indices = @transform_2, window_bounds = array<i64: 1, 50>}, {transform_indices = @transform_3, window_bounds = array<i64: 16, 50>}]} {
    %c0_i32 = arith.constant 0 : i32
    %0 = arith.cmpi eq, %arg2, %c0_i32 : i32
    %1 = arith.extui %0 : i1 to i32
    %c0_i32_0 = arith.constant 0 : i32
    %2 = arith.cmpi ne, %1, %c0_i32_0 : i32
    scf.if %2 {
      %cst_10 = arith.constant 0.000000e+00 : f32
      %12 = vector.broadcast %cst_10 : f32 to vector<16x50xf32>
      %c0_11 = arith.constant 0 : index
      %c0_12 = arith.constant 0 : index
      %13 = vector.load %arg7[%c0_11, %c0_12] : memref<16x50xf32, #tpu.memory_space<vmem>>, vector<16x50xf32>
      tpu.vector_store %arg7[%c0_11, %c0_12], %12 {strides = array<i32>} : memref<16x50xf32, #tpu.memory_space<vmem>>, vector<16x50xf32>,
    } else {
    }
    %c0 = arith.constant 0 : index
    %c0_1 = arith.constant 0 : index
    %3 = vector.load %arg7[%c0, %c0_1] : memref<16x50xf32, #tpu.memory_space<vmem>>, vector<16x50xf32>
    %c0_2 = arith.constant 0 : index
    %c0_3 = arith.constant 0 : index
    %4 = vector.load %arg3[%c0_2, %c0_3] : memref<16x32xbf16, #tpu.memory_space<vmem>>, vector<16x32xbf16>
    %c0_4 = arith.constant 0 : index
    %c0_5 = arith.constant 0 : index
    %5 = vector.load %arg4[%c0_4, %c0_5] : memref<32x50xbf16, #tpu.memory_space<vmem>>, vector<32x50xbf16>
    %cst = arith.constant dense<0.000000e+00> : vector<16x50xf32>
    %6 = tpu.matmul %4, %5, %cst {dimension_numbers = #tpu.dot_dimension_numbers<[1], [0], [0], [1], [0, 0, 1, 1], [], []>} : vector<16x32xbf16>, vector<32x50xbf16>, vector<16x50xf32> -> vector<16x50xf32>
    %7 = arith.addf %3, %6 : vector<16x50xf32>
    %c0_6 = arith.constant 0 : index
    %c0_7 = arith.constant 0 : index
    %8 = vector.load %arg7[%c0_6, %c0_7] : memref<16x50xf32, #tpu.memory_space<vmem>>, vector<16x50xf32>
    tpu.vector_store %arg7[%c0_6, %c0_7], %7 {strides = array<i32>} : memref<16x50xf32, #tpu.memory_space<vmem>>, vector<16x50xf32>,
    %c0_i32_8 = arith.constant 0 : i32
    %9 = arith.cmpi eq, %arg2, %c0_i32_8 : i32
    %10 = arith.extui %9 : i1 to i32
    %c0_i32_9 = arith.constant 0 : i32
    %11 = arith.cmpi ne, %10, %c0_i32_9 : i32
    scf.if %11 {
      %c0_10 = arith.constant 0 : index
      %c0_11 = arith.constant 0 : index
      %12 = vector.load %arg7[%c0_10, %c0_11] : memref<16x50xf32, #tpu.memory_space<vmem>>, vector<16x50xf32>
      %c0_12 = arith.constant 0 : index
      %c0_13 = arith.constant 0 : index
      %13 = vector.load %arg5[%c0_12, %c0_13] : memref<1x50xf32, #tpu.memory_space<vmem>>, vector<1x50xf32>
      %14 = vector.broadcast %13 : vector<1x50xf32> to vector<16x50xf32>
      %15 = arith.addf %12, %14 : vector<16x50xf32>
      %c0_14 = arith.constant 0 : index
      %c0_15 = arith.constant 0 : index
      %16 = vector.load %arg6[%c0_14, %c0_15] : memref<16x50xf32, #tpu.memory_space<vmem>>, vector<16x50xf32>
      tpu.vector_store %arg6[%c0_14, %c0_15], %15 {strides = array<i32>} : memref<16x50xf32, #tpu.memory_space<vmem>>, vector<16x50xf32>,
    } else {
    }
    return
  }
  func.func @transform_0(%arg0: i32, %arg1: i32, %arg2: i32) -> (i32, i32) {
    %c0_i32 = arith.constant 0 : i32
    return %arg0, %arg2 : i32, i32
  }
  func.func @transform_1(%arg0: i32, %arg1: i32, %arg2: i32) -> (i32, i32) {
    %c0_i32 = arith.constant 0 : i32
    return %arg2, %arg1 : i32, i32
  }
  func.func @transform_2(%arg0: i32, %arg1: i32, %arg2: i32) -> (i32, i32) {
    %c0_i32 = arith.constant 0 : i32
    %c0_i32_0 = arith.constant 0 : i32
    return %c0_i32, %arg1 : i32, i32
  }
  func.func @transform_3(%arg0: i32, %arg1: i32, %arg2: i32) -> (i32, i32) {
    %c0_i32 = arith.constant 0 : i32
    return %arg0, %arg1 : i32, i32
  }
}

module attributes {stable_mosaic.version = 11 : i64} {
  func.func @_ffn_ln_kernel(%arg0: i32, %arg1: i32, %arg2: memref<16x32xbf16, #tpu.memory_space<vmem>>, %arg3: memref<32x64xbf16, #tpu.memory_space<vmem>>, %arg4: memref<1x64xf32, #tpu.memory_space<vmem>>, %arg5: memref<64x32xbf16, #tpu.memory_space<vmem>>, %arg6: memref<1x32xf32, #tpu.memory_space<vmem>>, %arg7: memref<1x32xf32, #tpu.memory_space<vmem>>, %arg8: memref<1x32xf32, #tpu.memory_space<vmem>>, %arg9: memref<16x32xbf16, #tpu.memory_space<vmem>>, %arg10: memref<16x32xf32, #tpu.memory_space<vmem>>) attributes {dimension_semantics = [#tpu.dimension_semantics<parallel>, #tpu.dimension_semantics<arbitrary>], iteration_bounds = array<i64: 1, 1>, scalar_prefetch = 0 : i64, scratch_operands = 1 : i64, tpu.core_type = #tpu.core_type<tc>, window_params = [{transform_indices = @transform_0, window_bounds = array<i64: 16, 32>}, {transform_indices = @transform_1, window_bounds = array<i64: 32, 64>}, {transform_indices = @transform_2, window_bounds = array<i64: 1, 64>}, {transform_indices = @transform_3, window_bounds = array<i64: 64, 32>}, {pipeline_mode = #tpu.pipeline_mode<synchronous>, transform_indices = @transform_4, window_bounds = array<i64: 1, 32>}, {pipeline_mode = #tpu.pipeline_mode<synchronous>, transform_indices = @transform_5, window_bounds = array<i64: 1, 32>}, {pipeline_mode = #tpu.pipeline_mode<synchronous>, transform_indices = @transform_6, window_bounds = array<i64: 1, 32>}, {transform_indices = @transform_7, window_bounds = array<i64: 16, 32>}]} {
    %c0_i32 = arith.constant 0 : i32
    %0 = arith.cmpi eq, %arg1, %c0_i32 : i32
    %1 = arith.extui %0 : i1 to i32
    %c0_i32_0 = arith.constant 0 : i32
    %2 = arith.cmpi ne, %1, %c0_i32_0 : i32
    scf.if %2 {
      %cst_16 = arith.constant 0.000000e+00 : f32
      %20 = vector.broadcast %cst_16 : f32 to vector<16x32xf32>
      %c0_17 = arith.constant 0 : index
      %c0_18 = arith.constant 0 : index
      %21 = vector.load %arg10[%c0_17, %c0_18] : memref<16x32xf32, #tpu.memory_space<vmem>>, vector<16x32xf32>
      tpu.vector_store %arg10[%c0_17, %c0_18], %20 {strides = array<i32>} : memref<16x32xf32, #tpu.memory_space<vmem>>, vector<16x32xf32>,
    } else {
    }
    %c0 = arith.constant 0 : index
    %c0_1 = arith.constant 0 : index
    %3 = vector.load %arg2[%c0, %c0_1] : memref<16x32xbf16, #tpu.memory_space<vmem>>, vector<16x32xbf16>
    %c0_2 = arith.constant 0 : index
    %c0_3 = arith.constant 0 : index
    %4 = vector.load %arg3[%c0_2, %c0_3] : memref<32x64xbf16, #tpu.memory_space<vmem>>, vector<32x64xbf16>
    %cst = arith.constant dense<0.000000e+00> : vector<16x64xf32>
    %5 = tpu.matmul %3, %4, %cst {dimension_numbers = #tpu.dot_dimension_numbers<[1], [0], [0], [1], [0, 0, 1, 1], [], []>} : vector<16x32xbf16>, vector<32x64xbf16>, vector<16x64xf32> -> vector<16x64xf32>
    %c0_4 = arith.constant 0 : index
    %c0_5 = arith.constant 0 : index
    %6 = vector.load %arg4[%c0_4, %c0_5] : memref<1x64xf32, #tpu.memory_space<vmem>>, vector<1x64xf32>
    %7 = vector.broadcast %6 : vector<1x64xf32> to vector<16x64xf32>
    %8 = arith.addf %5, %7 : vector<16x64xf32>
    %cst_6 = arith.constant 0.000000e+00 : f32
    %9 = vector.broadcast %cst_6 : f32 to vector<16x64xf32>
    %10 = arith.maximumf %8, %9 : vector<16x64xf32>
    %c0_7 = arith.constant 0 : index
    %c0_8 = arith.constant 0 : index
    %11 = vector.load %arg10[%c0_7, %c0_8] : memref<16x32xf32, #tpu.memory_space<vmem>>, vector<16x32xf32>
    %12 = arith.truncf %10 : vector<16x64xf32> to vector<16x64xbf16>
    %c0_9 = arith.constant 0 : index
    %c0_10 = arith.constant 0 : index
    %13 = vector.load %arg5[%c0_9, %c0_10] : memref<64x32xbf16, #tpu.memory_space<vmem>>, vector<64x32xbf16>
    %cst_11 = arith.constant dense<0.000000e+00> : vector<16x32xf32>
    %14 = tpu.matmul %12, %13, %cst_11 {dimension_numbers = #tpu.dot_dimension_numbers<[1], [0], [0], [1], [0, 0, 1, 1], [], []>} : vector<16x64xbf16>, vector<64x32xbf16>, vector<16x32xf32> -> vector<16x32xf32>
    %15 = arith.addf %11, %14 : vector<16x32xf32>
    %c0_12 = arith.constant 0 : index
    %c0_13 = arith.constant 0 : index
    %16 = vector.load %arg10[%c0_12, %c0_13] : memref<16x32xf32, #tpu.memory_space<vmem>>, vector<16x32xf32>
    tpu.vector_store %arg10[%c0_12, %c0_13], %15 {strides = array<i32>} : memref<16x32xf32, #tpu.memory_space<vmem>>, vector<16x32xf32>,
    %c0_i32_14 = arith.constant 0 : i32
    %17 = arith.cmpi eq, %arg1, %c0_i32_14 : i32
    %18 = arith.extui %17 : i1 to i32
    %c0_i32_15 = arith.constant 0 : i32
    %19 = arith.cmpi ne, %18, %c0_i32_15 : i32
    scf.if %19 {
      %c0_16 = arith.constant 0 : index
      %c0_17 = arith.constant 0 : index
      %20 = vector.load %arg10[%c0_16, %c0_17] : memref<16x32xf32, #tpu.memory_space<vmem>>, vector<16x32xf32>
      %c0_18 = arith.constant 0 : index
      %c0_19 = arith.constant 0 : index
      %21 = vector.load %arg6[%c0_18, %c0_19] : memref<1x32xf32, #tpu.memory_space<vmem>>, vector<1x32xf32>
      %22 = vector.broadcast %21 : vector<1x32xf32> to vector<16x32xf32>
      %23 = arith.addf %20, %22 : vector<16x32xf32>
      %c0_20 = arith.constant 0 : index
      %c0_21 = arith.constant 0 : index
      %24 = vector.load %arg2[%c0_20, %c0_21] : memref<16x32xbf16, #tpu.memory_space<vmem>>, vector<16x32xbf16>
      %25 = arith.extf %24 : vector<16x32xbf16> to vector<16x32xf32>
      %26 = arith.addf %23, %25 : vector<16x32xf32>
      %cst_22 = arith.constant dense<0.000000e+00> : vector<16xf32>
      %27 = vector.multi_reduction <add>, %26, %cst_22 [1] : vector<16x32xf32> to vector<16xf32>
      %28 = vector.shape_cast %27 : vector<16xf32> to vector<16x1xf32>
      %cst_23 = arith.constant 3.200000e+01 : f32
      %29 = vector.broadcast %cst_23 : f32 to vector<16x1xf32>
      %30 = arith.divf %28, %29 : vector<16x1xf32>
      %31 = vector.broadcast %30 : vector<16x1xf32> to vector<16x32xf32>
      %32 = arith.subf %26, %31 : vector<16x32xf32>
      %33 = arith.mulf %32, %32 : vector<16x32xf32>
      %cst_24 = arith.constant dense<0.000000e+00> : vector<16xf32>
      %34 = vector.multi_reduction <add>, %33, %cst_24 [1] : vector<16x32xf32> to vector<16xf32>
      %35 = vector.shape_cast %34 : vector<16xf32> to vector<16x1xf32>
      %cst_25 = arith.constant 3.200000e+01 : f32
      %36 = vector.broadcast %cst_25 : f32 to vector<16x1xf32>
      %37 = arith.divf %35, %36 : vector<16x1xf32>
      %38 = vector.broadcast %30 : vector<16x1xf32> to vector<16x32xf32>
      %39 = arith.subf %26, %38 : vector<16x32xf32>
      %cst_26 = arith.constant 9.99999974E-6 : f32
      %40 = vector.broadcast %cst_26 : f32 to vector<16x1xf32>
      %41 = arith.addf %37, %40 : vector<16x1xf32>
      %42 = math.rsqrt %41 : vector<16x1xf32>
      %43 = vector.broadcast %42 : vector<16x1xf32> to vector<16x32xf32>
      %44 = arith.mulf %39, %43 : vector<16x32xf32>
      %c0_27 = arith.constant 0 : index
      %c0_28 = arith.constant 0 : index
      %45 = vector.load %arg7[%c0_27, %c0_28] : memref<1x32xf32, #tpu.memory_space<vmem>>, vector<1x32xf32>
      %46 = vector.broadcast %45 : vector<1x32xf32> to vector<16x32xf32>
      %47 = arith.mulf %44, %46 : vector<16x32xf32>
      %c0_29 = arith.constant 0 : index
      %c0_30 = arith.constant 0 : index
      %48 = vector.load %arg8[%c0_29, %c0_30] : memref<1x32xf32, #tpu.memory_space<vmem>>, vector<1x32xf32>
      %49 = vector.broadcast %48 : vector<1x32xf32> to vector<16x32xf32>
      %50 = arith.addf %47, %49 : vector<16x32xf32>
      %51 = arith.truncf %50 : vector<16x32xf32> to vector<16x32xbf16>
      %c0_31 = arith.constant 0 : index
      %c0_32 = arith.constant 0 : index
      %52 = vector.load %arg9[%c0_31, %c0_32] : memref<16x32xbf16, #tpu.memory_space<vmem>>, vector<16x32xbf16>
      tpu.vector_store %arg9[%c0_31, %c0_32], %51 {strides = array<i32>} : memref<16x32xbf16, #tpu.memory_space<vmem>>, vector<16x32xbf16>,
    } else {
    }
    return
  }
  func.func @transform_0(%arg0: i32, %arg1: i32) -> (i32, i32) {
    %c0_i32 = arith.constant 0 : i32
    %c0_i32_0 = arith.constant 0 : i32
    return %arg0, %c0_i32 : i32, i32
  }
  func.func @transform_1(%arg0: i32, %arg1: i32) -> (i32, i32) {
    %c0_i32 = arith.constant 0 : i32
    %c0_i32_0 = arith.constant 0 : i32
    return %c0_i32, %arg1 : i32, i32
  }
  func.func @transform_2(%arg0: i32, %arg1: i32) -> (i32, i32) {
    %c0_i32 = arith.constant 0 : i32
    %c0_i32_0 = arith.constant 0 : i32
    return %c0_i32, %arg1 : i32, i32
  }
  func.func @transform_3(%arg0: i32, %arg1: i32) -> (i32, i32) {
    %c0_i32 = arith.constant 0 : i32
    %c0_i32_0 = arith.constant 0 : i32
    return %arg1, %c0_i32 : i32, i32
  }
  func.func @transform_4(%arg0: i32, %arg1: i32) -> (i32, i32) {
    %c0_i32 = arith.constant 0 : i32
    %c0_i32_0 = arith.constant 0 : i32
    %c0_i32_1 = arith.constant 0 : i32
    return %c0_i32, %c0_i32_0 : i32, i32
  }
  func.func @transform_5(%arg0: i32, %arg1: i32) -> (i32, i32) {
    %c0_i32 = arith.constant 0 : i32
    %c0_i32_0 = arith.constant 0 : i32
    %c0_i32_1 = arith.constant 0 : i32
    return %c0_i32, %c0_i32_0 : i32, i32
  }
  func.func @transform_6(%arg0: i32, %arg1: i32) -> (i32, i32) {
    %c0_i32 = arith.constant 0 : i32
    %c0_i32_0 = arith.constant 0 : i32
    %c0_i32_1 = arith.constant 0 : i32
    return %c0_i32, %c0_i32_0 : i32, i32
  }
  func.func @transform_7(%arg0: i32, %arg1: i32) -> (i32, i32) {
    %c0_i32 = arith.constant 0 : i32
    %c0_i32_0 = arith.constant 0 : i32
    return %arg0, %c0_i32 : i32, i32
  }
}

</mosaic_0001>

<llo_original>
// kernel: transformer_forward.34
$region0: #{transformer_forward.34}
  #allocation0 [shape = 'u32[]', space=smem, size = 0x4, offset = 0x4, fixed_abs, tag = 'smem constant byte address 0x4 - core index']
  #allocation1 [shape = 'u32[72,128]{1,0:T(1,128)}', space=vmem, size = 0x9000, scoped, tag = 'internal scratch']
  %s0 = inlined_call_operand.vmem [shape: bf16[3,4,2,8,8], index: 0, kind: input, shape index: {}, may-alias: {0,1,2}]
  %s1 = inlined_call_operand.vmem [shape: bf16[3,4,2,8,8], index: 1, kind: input, shape index: {}, may-alias: {0,1,2}]
  %s2 = inlined_call_operand.vmem [shape: bf16[3,4,2,8,8], index: 2, kind: input, shape index: {}, may-alias: {0,1,2}]
  %s3 = inlined_call_operand.vmem [shape: f32[8,8], index: 3, kind: input, shape index: {}]
  %s4 = inlined_call_operand.vmem [shape: f32[2,1,8], index: 4, kind: input, shape index: {}]
  %s5 = inlined_call_operand.vmem [shape: bf16[4,2,8,8], index: 5, kind: output, shape index: {}]
  %s6 = sld [smem:[#allocation0]]
  $region53: #{transformer_forward.34} parent=0
    _
  %s8 = ssub.s32 1, %s6
  %s9 = scalar_select 0, %s8, %s6
  loop: start=0, step=1, limit=10
  $region2: #{transformer_forward.34} parent=0 // loop_pre_header
    _
  $region3: #{transformer_forward.34} parent=0 // loop_header
    %s11 = sphi 0, %s15
    %p12 = scmp.ge.s32.totalorder %s11, 10
    %s18 = sphi 0, %s37
    %s19 = sphi 0, %s33
    %s20 = sphi 0, %s29
    %s21 = sphi 0, %s18
    %s22 = sphi 0, %s19
    %s23 = sphi 0, %s20
    %s24 = sphi 0, %s21
    %s25 = sphi 0, %s22
    %s26 = sphi 0, %s23
    %s44 = sphi 0, %s46
    %s47 = sphi 0, %s44
    %s48 = sphi 0, %s47
    %s64 = sphi 0, %s48
    %s72 = sphi 0, %s74
    %s75 = sphi 0, %s72
    %s76 = sphi 0, %s75
    %s92 = sphi 0, %s76
    %s100 = sphi 0, %s102
    %s103 = sphi 0, %s100
    %s104 = sphi 0, %s103
    %s120 = sphi 0, %s104
    %s126 = sphi 0, %s128
    %s129 = sphi 0, %s126
    %s130 = sphi 0, %s129
    %s146 = sphi 0, %s130
    %s152 = sphi 0, %s154
    %s155 = sphi 0, %s152
    %s156 = sphi 0, %s155
    %s172 = sphi 0, %s156
    %s182 = sphi 0, %s184
    %s185 = sphi 0, %s182
    %s186 = sphi 0, %s185
    %s202 = sphi 0, %s186
  $region4: #{transformer_forward.34} parent=0 // loop_header_branch
    %14 = sbr.rel (%p12) target = $region8
  $region5: #{transformer_forward.34} parent=0 // loop_body
    %s16 = ssub.s32 %s11, 1
    %s17 = ssub.s32 %s11, 2
    %s27 = sadd.s32 1, %s20
    %p28 = scmp.ge.s32.totalorder %s27, 1
    %s29 = scalar_select %p28, 0, %s27
    %s30 = sadd.s32 1, %s19
    %s31 = scalar_select %p28, %s30, %s19
    %p32 = scmp.ge.s32.totalorder %s31, 4
    %s33 = scalar_select %p32, 0, %s31
    %s34 = sadd.s32 1, %s18
    %s35 = scalar_select %p32, %s34, %s18
    %p36 = scmp.ge.s32.totalorder %s35, 2
    %s37 = scalar_select %p36, 0, %s35
    %s38 = ssub.s32 %s19, %s33
    %s39 = ssub.s32 %s18, %s37
    %s40 = sor.u32 %s38, %s39
    %s41 = ssub.s32 %s20, %s29
    %s42 = sor.u32 %s40, %s41
    %p43 = scmp.eq.s32.totalorder %s42, 0
    %s45 = sadd.s32 %s44, 1
    %s46 = scalar_select %p43, %s44, %s45
    %p49 = pneg %p43
    %p50 = scmp.eq.s32.totalorder %s11, 7
    %p51 = por %p49, %p50
    %p52 = scmp.ne.s32.totalorder %s44, %s47
    %p53 = scmp.eq.s32.totalorder %s11, 0
    %p54 = por %p52, %p53
    %p55 = scmp.ne.s32.totalorder %s44, %s47
    %p56 = scmp.eq.s32.totalorder %s16, 7
    %p57 = por %p55, %p56
    %p58 = scmp.ne.s32.totalorder %s47, %s48
    %p59 = scmp.eq.s32.totalorder %s16, 0
    %p60 = por %p58, %p59
    %p61 = scmp.ne.s32.totalorder %s47, %s48
    %p62 = scmp.eq.s32.totalorder %s17, 7
    %p63 = por %p61, %p62
    %p65 = scmp.ne.s32.totalorder %s48, %s64
    %p66 = scmp.eq.s32.totalorder %s17, 0
    %p67 = por %p65, %p66
    %s68 = ssub.s32 %s19, %s33
    %s69 = ssub.s32 %s18, %s37
    %s70 = sor.u32 %s68, %s69
    %p71 = scmp.eq.s32.totalorder %s70, 0
    %s73 = sadd.s32 %s72, 1
    %s74 = scalar_select %p71, %s72, %s73
    %p77 = pneg %p71
    %p78 = scmp.eq.s32.totalorder %s11, 7
    %p79 = por %p77, %p78
    %p80 = scmp.ne.s32.totalorder %s72, %s75
    %p81 = scmp.eq.s32.totalorder %s11, 0
    %p82 = por %p80, %p81
    %p83 = scmp.ne.s32.totalorder %s72, %s75
    %p84 = scmp.eq.s32.totalorder %s16, 7
    %p85 = por %p83, %p84
    %p86 = scmp.ne.s32.totalorder %s75, %s76
    %p87 = scmp.eq.s32.totalorder %s16, 0
    %p88 = por %p86, %p87
    %p89 = scmp.ne.s32.totalorder %s75, %s76
    %p90 = scmp.eq.s32.totalorder %s17, 7
    %p91 = por %p89, %p90
    %p93 = scmp.ne.s32.totalorder %s76, %s92
    %p94 = scmp.eq.s32.totalorder %s17, 0
    %p95 = por %p93, %p94
    %s96 = ssub.s32 %s19, %s33
    %s97 = ssub.s32 %s18, %s37
    %s98 = sor.u32 %s96, %s97
    %p99 = scmp.eq.s32.totalorder %s98, 0
    %s101 = sadd.s32 %s100, 1
    %s102 = scalar_select %p99, %s100, %s101
    %p105 = pneg %p99
    %p106 = scmp.eq.s32.totalorder %s11, 7
    %p107 = por %p105, %p106
    %p108 = scmp.ne.s32.totalorder %s100, %s103
    %p109 = scmp.eq.s32.totalorder %s11, 0
    %p110 = por %p108, %p109
    %p111 = scmp.ne.s32.totalorder %s100, %s103
    %p112 = scmp.eq.s32.totalorder %s16, 7
    %p113 = por %p111, %p112
    %p114 = scmp.ne.s32.totalorder %s103, %s104
    %p115 = scmp.eq.s32.totalorder %s16, 0
    %p116 = por %p114, %p115
    %p117 = scmp.ne.s32.totalorder %s103, %s104
    %p118 = scmp.eq.s32.totalorder %s17, 7
    %p119 = por %p117, %p118
    %p121 = scmp.ne.s32.totalorder %s104, %s120
    %p122 = scmp.eq.s32.totalorder %s17, 0
    %p123 = por %p121, %p122
    %s124 = ssub.s32 %s20, %s29
    %p125 = scmp.eq.s32.totalorder %s124, 0
    %s127 = sadd.s32 %s126, 1
    %s128 = scalar_select %p125, %s126, %s127
    %p131 = pneg %p125
    %p132 = scmp.eq.s32.totalorder %s11, 7
    %p133 = por %p131, %p132
    %p134 = scmp.ne.s32.totalorder %s126, %s129
    %p135 = scmp.eq.s32.totalorder %s11, 0
    %p136 = por %p134, %p135
    %p137 = scmp.ne.s32.totalorder %s126, %s129
    %p138 = scmp.eq.s32.totalorder %s16, 7
    %p139 = por %p137, %p138
    %p140 = scmp.ne.s32.totalorder %s129, %s130
    %p141 = scmp.eq.s32.totalorder %s16, 0
    %p142 = por %p140, %p141
    %p143 = scmp.ne.s32.totalorder %s129, %s130
    %p144 = scmp.eq.s32.totalorder %s17, 7
    %p145 = por %p143, %p144
    %p147 = scmp.ne.s32.totalorder %s130, %s146
    %p148 = scmp.eq.s32.totalorder %s17, 0
    %p149 = por %p147, %p148
    %s150 = ssub.s32 %s18, %s37
    %p151 = scmp.eq.s32.totalorder %s150, 0
    %s153 = sadd.s32 %s152, 1
    %s154 = scalar_select %p151, %s152, %s153
    %p157 = pneg %p151
    %p158 = scmp.eq.s32.totalorder %s11, 7
    %p159 = por %p157, %p158
    %p160 = scmp.ne.s32.totalorder %s152, %s155
    %p161 = scmp.eq.s32.totalorder %s11, 0
    %p162 = por %p160, %p161
    %p163 = scmp.ne.s32.totalorder %s152, %s155
    %p164 = scmp.eq.s32.totalorder %s16, 7
    %p165 = por %p163, %p164
    %p166 = scmp.ne.s32.totalorder %s155, %s156
    %p167 = scmp.eq.s32.totalorder %s16, 0
    %p168 = por %p166, %p167
    %p169 = scmp.ne.s32.totalorder %s155, %s156
    %p170 = scmp.eq.s32.totalorder %s17, 7
    %p171 = por %p169, %p170
    %p173 = scmp.ne.s32.totalorder %s156, %s172
    %p174 = scmp.eq.s32.totalorder %s17, 0
    %p175 = por %p173, %p174
    %s176 = ssub.s32 %s19, %s33
    %s177 = ssub.s32 %s18, %s37
    %s178 = sor.u32 %s176, %s177
    %s179 = ssub.s32 %s20, %s29
    %s180 = sor.u32 %s178, %s179
    %p181 = scmp.eq.s32.totalorder %s180, 0
    %s183 = sadd.s32 %s182, 1
    %s184 = scalar_select %p181, %s182, %s183
    %p187 = pneg %p181
    %p188 = scmp.eq.s32.totalorder %s11, 7
    %p189 = por %p187, %p188
    %p190 = scmp.ne.s32.totalorder %s182, %s185
    %p191 = scmp.eq.s32.totalorder %s11, 0
    %p192 = por %p190, %p191
    %p193 = scmp.ne.s32.totalorder %s182, %s185
    %p194 = scmp.eq.s32.totalorder %s16, 7
    %p195 = por %p193, %p194
    %p196 = scmp.ne.s32.totalorder %s185, %s186
    %p197 = scmp.eq.s32.totalorder %s16, 0
    %p198 = por %p196, %p197
    %p199 = scmp.ne.s32.totalorder %s185, %s186
    %p200 = scmp.eq.s32.totalorder %s17, 7
    %p201 = por %p199, %p200
    %p203 = scmp.ne.s32.totalorder %s186, %s202
    %p204 = scmp.eq.s32.totalorder %s17, 0
    %p205 = por %p203, %p204
    %p206 = scmp.le.s32.totalorder 1, %s11
    %p207 = scmp.lt.s32.totalorder %s11, 9
    %p208 = pnand %p206, %p207
    %p209 = pneg %p208
    // Predicated region
    $region9: #{transformer_forward.34} parent=5 // pred_check
      _
    $region10: #{transformer_forward.34} parent=5 // pred_check_branch
      %211 = sbr.rel (%p208) target = $region12
    $region11: #{transformer_forward.34} parent=5 // pred_region
      %s212 = ssub.s32 %s11, 1
      // Predicated region
      $region13: #{transformer_forward.34} parent=11 // pred_check
        %p213 = pneg %p142
      $region14: #{transformer_forward.34} parent=11 // pred_check_branch
        %215 = sbr.rel (%p213) target = $region16
      $region15: #{transformer_forward.34} parent=11 // pred_region
        %p216 = scmp.lt.s32.totalorder %s23, 0
        %s217 = scalar_select %p216, %s23, 0
        %s218 = smul.addr %s217, 8
        %s219 = scalar_lea.vmem %s3, %s218
      $region16: #{transformer_forward.34} parent=11 // pred_fallthru
        _
    $region12: #{transformer_forward.34} parent=5 // pred_fallthru
      _
    %p220 = scmp.lt.s32.totalorder %s11, 8
    // Predicated region
    $region17: #{transformer_forward.34} parent=5 // pred_check
      %p221 = pneg %p220
    $region18: #{transformer_forward.34} parent=5 // pred_check_branch
      %223 = sbr.rel (%p221) target = $region20
    $region19: #{transformer_forward.34} parent=5 // pred_region
      // Predicated region
      $region21: #{transformer_forward.34} parent=19 // pred_check
        %p224 = pneg %p54
      $region22: #{transformer_forward.34} parent=19 // pred_check_branch
        %226 = sbr.rel (%p224) target = $region24
      $region23: #{transformer_forward.34} parent=19 // pred_region
        %p227 = scmp.lt.s32.totalorder %s19, 3
        %s228 = scalar_select %p227, %s19, 3
        %p229 = scmp.lt.s32.totalorder %s18, 1
        %s230 = scalar_select %p229, %s18, 1
        %p231 = scmp.lt.s32.totalorder %s20, 0
        %s232 = scalar_select %p231, %s20, 0
        %s233 = sadd.s32 %s232, %s230
        %s234 = smul.addr %s228, 2
        %s235 = sadd.s32 %s233, %s234
        %s236 = smul.addr %s235, 4
        %s237 = scalar_lea.vmem %s0, %s236
      $region24: #{transformer_forward.34} parent=19 // pred_fallthru
        _
      // Predicated region
      $region25: #{transformer_forward.34} parent=19 // pred_check
        %p238 = pneg %p82
      $region26: #{transformer_forward.34} parent=19 // pred_check_branch
        %240 = sbr.rel (%p238) target = $region28
      $region27: #{transformer_forward.34} parent=19 // pred_region
        %p241 = scmp.lt.s32.totalorder %s19, 3
        %s242 = scalar_select %p241, %s19, 3
        %p243 = scmp.lt.s32.totalorder %s18, 1
        %s244 = scalar_select %p243, %s18, 1
        %s245 = smul.addr %s242, 2
        %s246 = sadd.s32 %s244, %s245
        %s247 = sadd.s32 %s246, 8
        %s248 = smul.addr %s247, 4
        %s249 = scalar_lea.vmem %s1, %s248
      $region28: #{transformer_forward.34} parent=19 // pred_fallthru
        _
      // Predicated region
      $region29: #{transformer_forward.34} parent=19 // pred_check
        %p250 = pneg %p110
      $region30: #{transformer_forward.34} parent=19 // pred_check_branch
        %252 = sbr.rel (%p250) target = $region32
      $region31: #{transformer_forward.34} parent=19 // pred_region
        %p253 = scmp.lt.s32.totalorder %s19, 3
        %s254 = scalar_select %p253, %s19, 3
        %p255 = scmp.lt.s32.totalorder %s18, 1
        %s256 = scalar_select %p255, %s18, 1
        %s257 = smul.addr %s254, 2
        %s258 = sadd.s32 %s256, %s257
        %s259 = sadd.s32 %s258, 16
        %s260 = smul.addr %s259, 4
        %s261 = scalar_lea.vmem %s2, %s260
      $region32: #{transformer_forward.34} parent=19 // pred_fallthru
        _
      // Predicated region
      $region33: #{transformer_forward.34} parent=19 // pred_check
        %p262 = pneg %p162
      $region34: #{transformer_forward.34} parent=19 // pred_check_branch
        %264 = sbr.rel (%p262) target = $region36
      $region35: #{transformer_forward.34} parent=19 // pred_region
        %p265 = scmp.lt.s32.totalorder %s18, 1
        %s266 = scalar_select %p265, %s18, 1
        %s267 = scalar_lea.vmem %s4, %s266
      $region36: #{transformer_forward.34} parent=19 // pred_fallthru
        _
    $region20: #{transformer_forward.34} parent=5 // pred_fallthru
      _
    %p268 = scmp.le.s32.totalorder 1, %s11
    %p269 = scmp.lt.s32.totalorder %s11, 9
    %p270 = pnand %p268, %p269
    %p271 = pneg %p270
    // Predicated region
    $region37: #{transformer_forward.34} parent=5 // pred_check
      _
    $region38: #{transformer_forward.34} parent=5 // pred_check_branch
      %273 = sbr.rel (%p270) target = $region40
    $region39: #{transformer_forward.34} parent=5 // pred_region
      %s274 = ssub.s32 %s11, 1
      %p275 = scmp.lt.s32.totalorder %s22, 3
      %s276 = scalar_select %p275, %s22, 3
      %p277 = scmp.lt.s32.totalorder %s21, 1
      %s278 = scalar_select %p277, %s21, 1
      %p279 = scmp.lt.s32.totalorder %s23, 0
      %s280 = scalar_select %p279, %s23, 0
      %s281 = sadd.s32 %s280, %s278
      %s282 = smul.addr %s276, 2
      %s283 = sadd.s32 %s281, %s282
      %s284 = smul.addr %s283, 4
      %s285 = scalar_lea.vmem %s0, %s284
      %p286 = pneg %p60
      %p287 = pneg %p57
      %p288 = scmp.lt.s32.totalorder %s22, 3
      %s289 = scalar_select %p288, %s22, 3
      %p290 = scmp.lt.s32.totalorder %s21, 1
      %s291 = scalar_select %p290, %s21, 1
      %s292 = smul.addr %s289, 2
      %s293 = sadd.s32 %s291, %s292
      %s294 = sadd.s32 %s293, 8
      %s295 = smul.addr %s294, 4
      %s296 = scalar_lea.vmem %s1, %s295
      %p297 = pneg %p88
      %p298 = pneg %p85
      %p299 = scmp.lt.s32.totalorder %s22, 3
      %s300 = scalar_select %p299, %s22, 3
      %p301 = scmp.lt.s32.totalorder %s21, 1
      %s302 = scalar_select %p301, %s21, 1
      %s303 = smul.addr %s300, 2
      %s304 = sadd.s32 %s302, %s303
      %s305 = sadd.s32 %s304, 16
      %s306 = smul.addr %s305, 4
      %s307 = scalar_lea.vmem %s2, %s306
      %p308 = pneg %p116
      %p309 = pneg %p113
      %p310 = scmp.lt.s32.totalorder %s23, 0
      %s311 = scalar_select %p310, %s23, 0
      %s312 = smul.addr %s311, 8
      %s313 = scalar_lea.vmem %s3, %s312
      %p314 = pneg %p142
      %p315 = pneg %p139
      %p316 = scmp.lt.s32.totalorder %s21, 1
      %s317 = scalar_select %p316, %s21, 1
      %s318 = scalar_lea.vmem %s4, %s317
      %p319 = pneg %p168
      %p320 = pneg %p165
      %p321 = pneg %p198
      %p322 = pneg %p195
      %p323 = scmp.lt.s32.totalorder %s22, 3
      %s324 = scalar_select %p323, %s22, 3
      %p325 = scmp.lt.s32.totalorder %s21, 1
      %s326 = scalar_select %p325, %s21, 1
      %p327 = scmp.lt.s32.totalorder %s23, 0
      %s328 = scalar_select %p327, %s23, 0
      %s329 = sadd.s32 %s328, %s326
      %s330 = smul.addr %s324, 2
      %s331 = sadd.s32 %s329, %s330
      %s332 = smul.addr %s331, 4
      %s333 = scalar_lea.vmem %s5, %s332
      %p334 = scmp.lt.s32.totalorder %s22, 3
      %s335 = scalar_select %p334, %s22, 3
      %p336 = scmp.lt.s32.totalorder %s21, 1
      %s337 = scalar_select %p336, %s21, 1
      %p338 = scmp.lt.s32.totalorder %s23, 0
      %s339 = scalar_select %p338, %s23, 0
      %s340 = sadd.s32 %s339, %s337
      %s341 = smul.addr %s335, 2
      %s342 = sadd.s32 %s340, %s341
      %s343 = smul.addr %s342, 4
      %s344 = scalar_lea.vmem %s0, %s343
      %p345 = scmp.lt.s32.totalorder %s22, 3
      %s346 = scalar_select %p345, %s22, 3
      %p347 = scmp.lt.s32.totalorder %s21, 1
      %s348 = scalar_select %p347, %s21, 1
      %s349 = smul.addr %s346, 2
      %s350 = sadd.s32 %s348, %s349
      %s351 = sadd.s32 %s350, 8
      %s352 = smul.addr %s351, 4
      %s353 = scalar_lea.vmem %s1, %s352
      %p354 = scmp.lt.s32.totalorder %s22, 3
      %s355 = scalar_select %p354, %s22, 3
      %p356 = scmp.lt.s32.totalorder %s21, 1
      %s357 = scalar_select %p356, %s21, 1
      %s358 = smul.addr %s355, 2
      %s359 = sadd.s32 %s357, %s358
      %s360 = sadd.s32 %s359, 16
      %s361 = smul.addr %s360, 4
      %s362 = scalar_lea.vmem %s2, %s361
      %p363 = scmp.lt.s32.totalorder %s23, 0
      %s364 = scalar_select %p363, %s23, 0
      %s365 = smul.addr %s364, 8
      %s366 = scalar_lea.vmem %s3, %s365
      %p367 = scmp.lt.s32.totalorder %s21, 1
      %s368 = scalar_select %p367, %s21, 1
      %s369 = scalar_lea.vmem %s4, %s368
      %p370 = scmp.lt.s32.totalorder %s22, 3
      %s371 = scalar_select %p370, %s22, 3
      %p372 = scmp.lt.s32.totalorder %s21, 1
      %s373 = scalar_select %p372, %s21, 1
      %p374 = scmp.lt.s32.totalorder %s23, 0
      %s375 = scalar_select %p374, %s23, 0
      %s376 = sadd.s32 %s375, %s373
      %s377 = smul.addr %s371, 2
      %s378 = sadd.s32 %s376, %s377
      %s379 = smul.addr %s378, 4
      %s380 = scalar_lea.vmem %s5, %s379
      %v382 = vld [vmem:[%s344] sm:$0xf]
      %v383 = vld [vmem:[%s353] sm:$0xf]
      %v384 = vld [vmem:[%s362] sm:$0xf]
      %v385 = vld [vmem:[%s366] sm:$0xff]
      %v386 = vld [vmem:[%s369] sm:$0x1]
      %v388 = vperm.slane %v386, 0
      %v390 = vadd.f32 %v385, %v388
      %vm391 = vcmask 64512
      %v393 = vsel %vm391, %v382, 0
      %v396 = vsel %vm391, %v383, 0
      %398 = vmatpush.bf16.xpose.msra.mxu0 0
      %399 = vmatpush.bf16.xpose.msra.mxu0 0
      %400 = vmatpush.bf16.xpose.msra.mxu0 0
      %401 = vmatpush.bf16.xpose.msra.mxu0 0
      %402 = vmatpush.bf16.xpose.msra.mxu0 0
      %403 = vmatpush.bf16.xpose.msra.mxu0 0
      %404 = vmatpush.bf16.xpose.msra.mxu0 0
      %405 = vmatpush.bf16.xpose.msra.mxu0 %v396
      %406 = vmatmul.bf16.gmra.mxu0 %v393
      %v407 = vpop.f32.mrf.mxu0
      %v408 = vadd.f32 0.0, %v407
      %v409 = vpop.f32.mrf.mxu0
      %410 = vdwg.mxu0
      %v411 = vmul.f32 %v408, 0.35355338
      %v412 = vadd.f32 %v411, %v390
      %v413 = vsel %vm391, %v412, -inf
      %414 = vmax.xlane.f32.xlu0 %v413
      %v415 = vpop.xlane.xlu0 %414
      %v416 = vsub.f32 %v412, %v415
      %v417 = vmul.f32 %v416, 1.442695
      %v418 = vpow.pop %v417
      %v419 = vsel %vm391, %v418, 0.0
      %420 = vadd.xlane.f32.xlu0 %v419
      %v421 = vpop.xlane.xlu0 %420
      %v422 = vrcp.pop %v421
      %v423 = vmul.f32 %v418, %v422
      %v424 = vpack.c.bf16 %v423, %v423
      %v426 = vsel %vm391, %v424, 0
      %vm428 = vcmask 1043456
      %v430 = vsel %vm428, %v384, 0
      %432 = vmatpush.bf16.msra.mxu0 0
      %433 = vmatpush.bf16.msra.mxu0 0
      %434 = vmatpush.bf16.msra.mxu0 0
      %435 = vmatpush.bf16.msra.mxu0 0
      %436 = vmatpush.bf16.msra.mxu0 0
      %437 = vmatpush.bf16.msra.mxu0 0
      %438 = vmatpush.bf16.msra.mxu0 0
      %439 = vmatpush.bf16.msra.mxu0 %v430
      %440 = vmatmul.bf16.gmra.mxu0 %v426
      %v441 = vpop.f32.mrf.mxu0
      %v442 = vadd.f32 0.0, %v441
      %v443 = vpop.f32.mrf.mxu0
      %444 = vdwg.mxu0
      %v445 = vpack.c.bf16 %v442, %v442
      %vm446 = vcmask 60416
      %447 = vst.msk [vmem:[%s380] sm:$0xf] %vm446, %v445
      %p448 = scmp.lt.s32.totalorder %s22, 3
      %s449 = scalar_select %p448, %s22, 3
      %p450 = scmp.lt.s32.totalorder %s21, 1
      %s451 = scalar_select %p450, %s21, 1
      %p452 = scmp.lt.s32.totalorder %s23, 0
      %s453 = scalar_select %p452, %s23, 0
      %s454 = sadd.s32 %s453, %s451
      %s455 = smul.addr %s449, 2
      %s456 = sadd.s32 %s454, %s455
      %s457 = smul.addr %s456, 4
      %s458 = scalar_lea.vmem %s5, %s457
      // Predicated region
      $region41: #{transformer_forward.34} parent=39 // pred_check
        %p459 = pneg %p195
      $region42: #{transformer_forward.34} parent=39 // pred_check_branch
        %461 = sbr.rel (%p459) target = $region44
      $region43: #{transformer_forward.34} parent=39 // pred_region
        _
      $region44: #{transformer_forward.34} parent=39 // pred_fallthru
        _
    $region40: #{transformer_forward.34} parent=5 // pred_fallthru
      _
    %p462 = scmp.le.s32.totalorder 2, %s11
    // Predicated region
    $region45: #{transformer_forward.34} parent=5 // pred_check
      %p463 = pneg %p462
    $region46: #{transformer_forward.34} parent=5 // pred_check_branch
      %465 = sbr.rel (%p463) target = $region48
    $region47: #{transformer_forward.34} parent=5 // pred_region
      %s466 = ssub.s32 %s11, 2
      // Predicated region
      $region49: #{transformer_forward.34} parent=47 // pred_check
        %p467 = pneg %p201
      $region50: #{transformer_forward.34} parent=47 // pred_check_branch
        %469 = sbr.rel (%p467) target = $region52
      $region51: #{transformer_forward.34} parent=47 // pred_region
        %p470 = scmp.lt.s32.totalorder %s25, 3
        %s471 = scalar_select %p470, %s25, 3
        %p472 = scmp.lt.s32.totalorder %s24, 1
        %s473 = scalar_select %p472, %s24, 1
        %p474 = scmp.lt.s32.totalorder %s26, 0
        %s475 = scalar_select %p474, %s26, 0
        %s476 = sadd.s32 %s475, %s473
        %s477 = smul.addr %s471, 2
        %s478 = sadd.s32 %s476, %s477
        %s479 = smul.addr %s478, 4
        %s480 = scalar_lea.vmem %s5, %s479
      $region52: #{transformer_forward.34} parent=47 // pred_fallthru
        _
    $region48: #{transformer_forward.34} parent=5 // pred_fallthru
      _
  $region6: #{transformer_forward.34} parent=0 // loop_footer
    %s15 = sadd.s32 1, %s11
  $region7: #{transformer_forward.34} parent=0 // loop_footer_branch
    %10 = sbr.rel target = $region3
  $region8: #{transformer_forward.34} parent=0 // loop_exit
    _

// kernel: transformer_forward.33
$region0: #{transformer_forward.33}
  #allocation0 [shape = 'u32[]', space=smem, size = 0x4, offset = 0x4, fixed_abs, tag = 'smem constant byte address 0x4 - core index']
  #allocation1 [shape = 'u32[72,128]{1,0:T(1,128)}', space=vmem, size = 0x9000, scoped, tag = 'internal scratch']
  #allocation2 [shape = 'f32[16,8]{1,0:T(8,128)}', space=vmem, size = 0x2000, scoped, tag = 'scratch operand']
  %s0 = inlined_call_operand.vmem [shape: bf16[16,32], index: 0, kind: input, shape index: {}]
  %s1 = inlined_call_operand.vmem [shape: bf16[3,4,32,8], index: 1, kind: input, shape index: {}]
  %s2 = inlined_call_operand.vmem [shape: f32[3,4,1,8], index: 2, kind: input, shape index: {}]
  %s3 = inlined_call_operand.vmem [shape: bf16[3,4,16,8], index: 3, kind: output, shape index: {}]
  %s4 = sld [smem:[#allocation0]]
  $region53: #{transformer_forward.33} parent=0
    _
  %s6 = ssub.s32 1, %s4
  %s7 = scalar_select 0, %s6, %s4
  loop: start=0, step=1, limit=14
  $region2: #{transformer_forward.33} parent=0 // loop_pre_header
    _
  $region3: #{transformer_forward.33} parent=0 // loop_header
    %s9 = sphi 0, %s13
    %p10 = scmp.ge.s32.totalorder %s9, 14
    %s16 = sphi 0, %s42
    %s17 = sphi 0, %s38
    %s18 = sphi 0, %s34
    %s19 = sphi 0, %s30
    %s20 = sphi 0, %s16
    %s21 = sphi 0, %s17
    %s22 = sphi 0, %s18
    %s23 = sphi 0, %s19
    %s24 = sphi 0, %s20
    %s25 = sphi 0, %s21
    %s26 = sphi 0, %s22
    %s27 = sphi 0, %s23
    %s47 = sphi 0, %s49
    %s50 = sphi 0, %s47
    %s51 = sphi 0, %s50
    %s67 = sphi 0, %s51
    %s77 = sphi 0, %s79
    %s80 = sphi 0, %s77
    %s81 = sphi 0, %s80
    %s97 = sphi 0, %s81
    %s105 = sphi 0, %s107
    %s108 = sphi 0, %s105
    %s109 = sphi 0, %s108
    %s125 = sphi 0, %s109
    %s135 = sphi 0, %s137
    %s138 = sphi 0, %s135
    %s139 = sphi 0, %s138
    %s155 = sphi 0, %s139
  $region4: #{transformer_forward.33} parent=0 // loop_header_branch
    %12 = sbr.rel (%p10) target = $region8
  $region5: #{transformer_forward.33} parent=0 // loop_body
    %s14 = ssub.s32 %s9, 1
    %s15 = ssub.s32 %s9, 2
    %s28 = sadd.s32 1, %s19
    %p29 = scmp.ge.s32.totalorder %s28, 1
    %s30 = scalar_select %p29, 0, %s28
    %s31 = sadd.s32 1, %s18
    %s32 = scalar_select %p29, %s31, %s18
    %p33 = scmp.ge.s32.totalorder %s32, 1
    %s34 = scalar_select %p33, 0, %s32
    %s35 = sadd.s32 1, %s17
    %s36 = scalar_select %p33, %s35, %s17
    %p37 = scmp.ge.s32.totalorder %s36, 4
    %s38 = scalar_select %p37, 0, %s36
    %s39 = sadd.s32 1, %s16
    %s40 = scalar_select %p37, %s39, %s16
    %p41 = scmp.ge.s32.totalorder %s40, 3
    %s42 = scalar_select %p41, 0, %s40
    %s43 = ssub.s32 %s18, %s34
    %s44 = ssub.s32 %s19, %s30
    %s45 = sor.u32 %s43, %s44
    %p46 = scmp.eq.s32.totalorder %s45, 0
    %s48 = sadd.s32 %s47, 1
    %s49 = scalar_select %p46, %s47, %s48
    %p52 = pneg %p46
    %p53 = scmp.eq.s32.totalorder %s9, 11
    %p54 = por %p52, %p53
    %p55 = scmp.ne.s32.totalorder %s47, %s50
    %p56 = scmp.eq.s32.totalorder %s9, 0
    %p57 = por %p55, %p56
    %p58 = scmp.ne.s32.totalorder %s47, %s50
    %p59 = scmp.eq.s32.totalorder %s14, 11
    %p60 = por %p58, %p59
    %p61 = scmp.ne.s32.totalorder %s50, %s51
    %p62 = scmp.eq.s32.totalorder %s14, 0
    %p63 = por %p61, %p62
    %p64 = scmp.ne.s32.totalorder %s50, %s51
    %p65 = scmp.eq.s32.totalorder %s15, 11
    %p66 = por %p64, %p65
    %p68 = scmp.ne.s32.totalorder %s51, %s67
    %p69 = scmp.eq.s32.totalorder %s15, 0
    %p70 = por %p68, %p69
    %s71 = ssub.s32 %s16, %s42
    %s72 = ssub.s32 %s17, %s38
    %s73 = sor.u32 %s71, %s72
    %s74 = ssub.s32 %s19, %s30
    %s75 = sor.u32 %s73, %s74
    %p76 = scmp.eq.s32.totalorder %s75, 0
    %s78 = sadd.s32 %s77, 1
    %s79 = scalar_select %p76, %s77, %s78
    %p82 = pneg %p76
    %p83 = scmp.eq.s32.totalorder %s9, 11
    %p84 = por %p82, %p83
    %p85 = scmp.ne.s32.totalorder %s77, %s80
    %p86 = scmp.eq.s32.totalorder %s9, 0
    %p87 = por %p85, %p86
    %p88 = scmp.ne.s32.totalorder %s77, %s80
    %p89 = scmp.eq.s32.totalorder %s14, 11
    %p90 = por %p88, %p89
    %p91 = scmp.ne.s32.totalorder %s80, %s81
    %p92 = scmp.eq.s32.totalorder %s14, 0
    %p93 = por %p91, %p92
    %p94 = scmp.ne.s32.totalorder %s80, %s81
    %p95 = scmp.eq.s32.totalorder %s15, 11
    %p96 = por %p94, %p95
    %p98 = scmp.ne.s32.totalorder %s81, %s97
    %p99 = scmp.eq.s32.totalorder %s15, 0
    %p100 = por %p98, %p99
    %s101 = ssub.s32 %s16, %s42
    %s102 = ssub.s32 %s17, %s38
    %s103 = sor.u32 %s101, %s102
    %p104 = scmp.eq.s32.totalorder %s103, 0
    %s106 = sadd.s32 %s105, 1
    %s107 = scalar_select %p104, %s105, %s106
    %p110 = pneg %p104
    %p111 = scmp.eq.s32.totalorder %s9, 11
    %p112 = por %p110, %p111
    %p113 = scmp.ne.s32.totalorder %s105, %s108
    %p114 = scmp.eq.s32.totalorder %s9, 0
    %p115 = por %p113, %p114
    %p116 = scmp.ne.s32.totalorder %s105, %s108
    %p117 = scmp.eq.s32.totalorder %s14, 11
    %p118 = por %p116, %p117
    %p119 = scmp.ne.s32.totalorder %s108, %s109
    %p120 = scmp.eq.s32.totalorder %s14, 0
    %p121 = por %p119, %p120
    %p122 = scmp.ne.s32.totalorder %s108, %s109
    %p123 = scmp.eq.s32.totalorder %s15, 11
    %p124 = por %p122, %p123
    %p126 = scmp.ne.s32.totalorder %s109, %s125
    %p127 = scmp.eq.s32.totalorder %s15, 0
    %p128 = por %p126, %p127
    %s129 = ssub.s32 %s16, %s42
    %s130 = ssub.s32 %s17, %s38
    %s131 = sor.u32 %s129, %s130
    %s132 = ssub.s32 %s18, %s34
    %s133 = sor.u32 %s131, %s132
    %p134 = scmp.eq.s32.totalorder %s133, 0
    %s136 = sadd.s32 %s135, 1
    %s137 = scalar_select %p134, %s135, %s136
    %p140 = pneg %p134
    %p141 = scmp.eq.s32.totalorder %s9, 11
    %p142 = por %p140, %p141
    %p143 = scmp.ne.s32.totalorder %s135, %s138
    %p144 = scmp.eq.s32.totalorder %s9, 0
    %p145 = por %p143, %p144
    %p146 = scmp.ne.s32.totalorder %s135, %s138
    %p147 = scmp.eq.s32.totalorder %s14, 11
    %p148 = por %p146, %p147
    %p149 = scmp.ne.s32.totalorder %s138, %s139
    %p150 = scmp.eq.s32.totalorder %s14, 0
    %p151 = por %p149, %p150
    %p152 = scmp.ne.s32.totalorder %s138, %s139
    %p153 = scmp.eq.s32.totalorder %s15, 11
    %p154 = por %p152, %p153
    %p156 = scmp.ne.s32.totalorder %s139, %s155
    %p157 = scmp.eq.s32.totalorder %s15, 0
    %p158 = por %p156, %p157
    %p159 = scmp.le.s32.totalorder 1, %s9
    %p160 = scmp.lt.s32.totalorder %s9, 13
    %p161 = pnand %p159, %p160
    %p162 = pneg %p161
    // Predicated region
    $region9: #{transformer_forward.33} parent=5 // pred_check
      _
    $region10: #{transformer_forward.33} parent=5 // pred_check_branch
      %164 = sbr.rel (%p161) target = $region12
    $region11: #{transformer_forward.33} parent=5 // pred_region
      %s165 = ssub.s32 %s9, 1
      // Predicated region
      $region13: #{transformer_forward.33} parent=11 // pred_check
        %p166 = pneg %p63
      $region14: #{transformer_forward.33} parent=11 // pred_check_branch
        %168 = sbr.rel (%p166) target = $region16
      $region15: #{transformer_forward.33} parent=11 // pred_region
        %s169 = smul.u32 2, %s22
        %p170 = scmp.lt.s32.totalorder %s169, 1
        %s171 = scalar_select %p170, %s169, 1
        %p172 = scmp.lt.s32.totalorder %s23, 0
        %s173 = scalar_select %p172, %s23, 0
        %s174 = sadd.s32 %s173, %s171
        %s175 = smul.addr %s174, 4
        %s176 = scalar_lea.vmem %s0, %s175
        %s177 = smul.u32 2, %s22
      $region16: #{transformer_forward.33} parent=11 // pred_fallthru
        _
    $region12: #{transformer_forward.33} parent=5 // pred_fallthru
      _
    %p178 = scmp.lt.s32.totalorder %s9, 12
    // Predicated region
    $region17: #{transformer_forward.33} parent=5 // pred_check
      %p179 = pneg %p178
    $region18: #{transformer_forward.33} parent=5 // pred_check_branch
      %181 = sbr.rel (%p179) target = $region20
    $region19: #{transformer_forward.33} parent=5 // pred_region
      // Predicated region
      $region21: #{transformer_forward.33} parent=19 // pred_check
        %p182 = pneg %p87
      $region22: #{transformer_forward.33} parent=19 // pred_check_branch
        %184 = sbr.rel (%p182) target = $region24
      $region23: #{transformer_forward.33} parent=19 // pred_region
        %s185 = smul.u32 4, %s19
        %p186 = scmp.lt.s32.totalorder %s16, 2
        %s187 = scalar_select %p186, %s16, 2
        %p188 = scmp.lt.s32.totalorder %s17, 3
        %s189 = scalar_select %p188, %s17, 3
        %p190 = scmp.lt.s32.totalorder %s185, 3
        %s191 = scalar_select %p190, %s185, 3
        %s192 = smul.addr %s189, 4
        %s193 = sadd.s32 %s191, %s192
        %s194 = smul.addr %s187, 16
        %s195 = sadd.s32 %s193, %s194
        %s196 = smul.addr %s195, 4
        %s197 = scalar_lea.vmem %s1, %s196
        %s198 = smul.u32 4, %s19
      $region24: #{transformer_forward.33} parent=19 // pred_fallthru
        _
      // Predicated region
      $region25: #{transformer_forward.33} parent=19 // pred_check
        %p199 = pneg %p115
      $region26: #{transformer_forward.33} parent=19 // pred_check_branch
        %201 = sbr.rel (%p199) target = $region28
      $region27: #{transformer_forward.33} parent=19 // pred_region
        %p202 = scmp.lt.s32.totalorder %s16, 2
        %s203 = scalar_select %p202, %s16, 2
        %p204 = scmp.lt.s32.totalorder %s17, 3
        %s205 = scalar_select %p204, %s17, 3
        %s206 = smul.addr %s203, 4
        %s207 = sadd.s32 %s205, %s206
        %s208 = scalar_lea.vmem %s2, %s207
      $region28: #{transformer_forward.33} parent=19 // pred_fallthru
        _
    $region20: #{transformer_forward.33} parent=5 // pred_fallthru
      _
    %p209 = scmp.le.s32.totalorder 1, %s9
    %p210 = scmp.lt.s32.totalorder %s9, 13
    %p211 = pnand %p209, %p210
    %p212 = pneg %p211
    // Predicated region
    $region29: #{transformer_forward.33} parent=5 // pred_check
      _
    $region30: #{transformer_forward.33} parent=5 // pred_check_branch
      %214 = sbr.rel (%p211) target = $region32
    $region31: #{transformer_forward.33} parent=5 // pred_region
      %s215 = ssub.s32 %s9, 1
      %s216 = smul.u32 2, %s22
      %p217 = scmp.lt.s32.totalorder %s216, 1
      %s218 = scalar_select %p217, %s216, 1
      %p219 = scmp.lt.s32.totalorder %s23, 0
      %s220 = scalar_select %p219, %s23, 0
      %s221 = sadd.s32 %s220, %s218
      %s222 = smul.addr %s221, 4
      %s223 = scalar_lea.vmem %s0, %s222
      %p224 = pneg %p63
      %p225 = pneg %p60
      %s226 = smul.u32 4, %s23
      %p227 = scmp.lt.s32.totalorder %s20, 2
      %s228 = scalar_select %p227, %s20, 2
      %p229 = scmp.lt.s32.totalorder %s21, 3
      %s230 = scalar_select %p229, %s21, 3
      %p231 = scmp.lt.s32.totalorder %s226, 3
      %s232 = scalar_select %p231, %s226, 3
      %s233 = smul.addr %s230, 4
      %s234 = sadd.s32 %s232, %s233
      %s235 = smul.addr %s228, 16
      %s236 = sadd.s32 %s234, %s235
      %s237 = smul.addr %s236, 4
      %s238 = scalar_lea.vmem %s1, %s237
      %p239 = pneg %p93
      %p240 = pneg %p90
      %p241 = scmp.lt.s32.totalorder %s20, 2
      %s242 = scalar_select %p241, %s20, 2
      %p243 = scmp.lt.s32.totalorder %s21, 3
      %s244 = scalar_select %p243, %s21, 3
      %s245 = smul.addr %s242, 4
      %s246 = sadd.s32 %s244, %s245
      %s247 = scalar_lea.vmem %s2, %s246
      %p248 = pneg %p121
      %p249 = pneg %p118
      %p250 = pneg %p151
      %p251 = pneg %p148
      %s252 = smul.u32 2, %s22
      %p253 = scmp.lt.s32.totalorder %s20, 2
      %s254 = scalar_select %p253, %s20, 2
      %p255 = scmp.lt.s32.totalorder %s21, 3
      %s256 = scalar_select %p255, %s21, 3
      %p257 = scmp.lt.s32.totalorder %s252, 1
      %s258 = scalar_select %p257, %s252, 1
      %s259 = smul.addr %s256, 2
      %s260 = sadd.s32 %s258, %s259
      %s261 = smul.addr %s254, 8
      %s262 = sadd.s32 %s260, %s261
      %s263 = smul.addr %s262, 4
      %s264 = scalar_lea.vmem %s3, %s263
      %s265 = smul.u32 2, %s22
      %p266 = scmp.lt.s32.totalorder %s265, 1
      %s267 = scalar_select %p266, %s265, 1
      %p268 = scmp.lt.s32.totalorder %s23, 0
      %s269 = scalar_select %p268, %s23, 0
      %s270 = sadd.s32 %s269, %s267
      %s271 = smul.addr %s270, 4
      %s272 = scalar_lea.vmem %s0, %s271
      %s273 = smul.u32 2, %s22
      %s274 = smul.u32 4, %s23
      %p275 = scmp.lt.s32.totalorder %s20, 2
      %s276 = scalar_select %p275, %s20, 2
      %p277 = scmp.lt.s32.totalorder %s21, 3
      %s278 = scalar_select %p277, %s21, 3
      %p279 = scmp.lt.s32.totalorder %s274, 3
      %s280 = scalar_select %p279, %s274, 3
      %s281 = smul.addr %s278, 4
      %s282 = sadd.s32 %s280, %s281
      %s283 = smul.addr %s276, 16
      %s284 = sadd.s32 %s282, %s283
      %s285 = smul.addr %s284, 4
      %s286 = scalar_lea.vmem %s1, %s285
      %s287 = smul.u32 4, %s23
      %p288 = scmp.lt.s32.totalorder %s20, 2
      %s289 = scalar_select %p288, %s20, 2
      %p290 = scmp.lt.s32.totalorder %s21, 3
      %s291 = scalar_select %p290, %s21, 3
      %s292 = smul.addr %s289, 4
      %s293 = sadd.s32 %s291, %s292
      %s294 = scalar_lea.vmem %s2, %s293
      %s295 = smul.u32 2, %s22
      %p296 = scmp.lt.s32.totalorder %s20, 2
      %s297 = scalar_select %p296, %s20, 2
      %p298 = scmp.lt.s32.totalorder %s21, 3
      %s299 = scalar_select %p298, %s21, 3
      %p300 = scmp.lt.s32.totalorder %s295, 1
      %s301 = scalar_select %p300, %s295, 1
      %s302 = smul.addr %s299, 2
      %s303 = sadd.s32 %s301, %s302
      %s304 = smul.addr %s297, 8
      %s305 = sadd.s32 %s303, %s304
      %s306 = smul.addr %s305, 4
      %s307 = scalar_lea.vmem %s3, %s306
      %s308 = smul.u32 2, %s22
      %p310 = scmp.eq.s32.totalorder %s23, 0
      // Predicated region
      $region33: #{transformer_forward.33} parent=31 // pred_check
        %p311 = pneg %p310
      $region34: #{transformer_forward.33} parent=31 // pred_check_branch
        %313 = sbr.rel (%p311) target = $region36
      $region35: #{transformer_forward.33} parent=31 // pred_region
        %vm314 = vcmask 64512
        %315 = vst.msk [vmem:[#allocation2] sm:$0xff] %vm314, 0.0
        %316 = vst.msk [vmem:[#allocation2 + $0x8] sm:$0xff] %vm314, 0.0
      $region36: #{transformer_forward.33} parent=31 // pred_fallthru
        _
      %v317 = vld [vmem:[#allocation2] sm:$0xff]
      %v318 = vld [vmem:[#allocation2 + $0x8] sm:$0xff]
      %v319 = vld [vmem:[%s272] sm:$0xf]
      %v320 = vld [vmem:[%s272 + $0x4] sm:$0xf]
      %v321 = vld [vmem:[%s286] sm:$0xf]
      %v322 = vld [vmem:[%s286 + $0x4] sm:$0xf]
      %v323 = vld [vmem:[%s286 + $0x8] sm:$0xf]
      %v324 = vld [vmem:[%s286 + $0xc] sm:$0xf]
      %v327 = vunpack.c.l.b16 %v319
      %v328 = vunpack.c.l.b16 %v320
      %v329 = vpack.c.b16 %v328, %v327
      %v334 = vunpack.c.l.b16 %v321
      %v335 = vunpack.c.l.b16 %v322
      %v336 = vunpack.c.l.b16 %v323
      %v337 = vunpack.c.l.b16 %v324
      %v338 = vpack.c.b16 %v335, %v334
      %v339 = vpack.c.b16 %v337, %v336
      %vm342 = vcmask 261120
      %v344 = vsel %vm342, %v329, 0
      %346 = vmatpush.bf16.msra.mxu0 0
      %347 = vmatpush.bf16.msra.mxu0 0
      %348 = vmatpush.bf16.msra.mxu0 0
      %349 = vmatpush.bf16.msra.mxu0 0
      %350 = vmatpush.bf16.msra.mxu0 0
      %351 = vmatpush.bf16.msra.mxu0 0
      %352 = vmatpush.bf16.msra.mxu0 %v339
      %353 = vmatpush.bf16.msra.mxu0 %v338
      %354 = vmatmul.bf16.gmra.mxu0 %v344
      %v355 = vpop.f32.mrf.mxu0
      %v356 = vadd.f32 0.0, %v355
      %v357 = vpop.f32.mrf.mxu0
      %v358 = vadd.f32 0.0, %v357
      %359 = vdwg.mxu0
      %v360 = vadd.f32 %v317, %v356
      %v361 = vadd.f32 %v318, %v358
      %vm362 = vcmask 64512
      %363 = vst.msk [vmem:[#allocation2] sm:$0xff] %vm362, %v360
      %364 = vst.msk [vmem:[#allocation2 + $0x8] sm:$0xff] %vm362, %v361
      // Predicated region
      $region37: #{transformer_forward.33} parent=31 // pred_check
        %p365 = pneg %p310
      $region38: #{transformer_forward.33} parent=31 // pred_check_branch
        %367 = sbr.rel (%p365) target = $region40
      $region39: #{transformer_forward.33} parent=31 // pred_region
        %v368 = vld [vmem:[#allocation2] sm:$0xff]
        %v369 = vld [vmem:[#allocation2 + $0x8] sm:$0xff]
        %v370 = vld [vmem:[%s294] sm:$0x1]
        %v372 = vperm.slane %v370, 0
        %v374 = vadd.f32 %v368, %v372
        %v375 = vadd.f32 %v369, %v372
        %v376 = vpack.c.bf16 %v374, %v374
        %v377 = vpack.c.bf16 %v375, %v375
        %vm378 = vcmask 60416
        %379 = vst.msk [vmem:[%s307] sm:$0xf] %vm378, %v376
        %380 = vst.msk [vmem:[%s307 + $0x4] sm:$0xf] %vm378, %v377
      $region40: #{transformer_forward.33} parent=31 // pred_fallthru
        _
      %s381 = smul.u32 2, %s22
      %p382 = scmp.lt.s32.totalorder %s20, 2
      %s383 = scalar_select %p382, %s20, 2
      %p384 = scmp.lt.s32.totalorder %s21, 3
      %s385 = scalar_select %p384, %s21, 3
      %p386 = scmp.lt.s32.totalorder %s381, 1
      %s387 = scalar_select %p386, %s381, 1
      %s388 = smul.addr %s385, 2
      %s389 = sadd.s32 %s387, %s388
      %s390 = smul.addr %s383, 8
      %s391 = sadd.s32 %s389, %s390
      %s392 = smul.addr %s391, 4
      %s393 = scalar_lea.vmem %s3, %s392
      // Predicated region
      $region41: #{transformer_forward.33} parent=31 // pred_check
        %p394 = pneg %p148
      $region42: #{transformer_forward.33} parent=31 // pred_check_branch
        %396 = sbr.rel (%p394) target = $region44
      $region43: #{transformer_forward.33} parent=31 // pred_region
        %s397 = smul.u32 2, %s22
      $region44: #{transformer_forward.33} parent=31 // pred_fallthru
        _
    $region32: #{transformer_forward.33} parent=5 // pred_fallthru
      _
    %p398 = scmp.le.s32.totalorder 2, %s9
    // Predicated region
    $region45: #{transformer_forward.33} parent=5 // pred_check
      %p399 = pneg %p398
    $region46: #{transformer_forward.33} parent=5 // pred_check_branch
      %401 = sbr.rel (%p399) target = $region48
    $region47: #{transformer_forward.33} parent=5 // pred_region
      %s402 = ssub.s32 %s9, 2
      // Predicated region
      $region49: #{transformer_forward.33} parent=47 // pred_check
        %p403 = pneg %p154
      $region50: #{transformer_forward.33} parent=47 // pred_check_branch
        %405 = sbr.rel (%p403) target = $region52
      $region51: #{transformer_forward.33} parent=47 // pred_region
        %s406 = smul.u32 2, %s26
        %p407 = scmp.lt.s32.totalorder %s24, 2
        %s408 = scalar_select %p407, %s24, 2
        %p409 = scmp.lt.s32.totalorder %s25, 3
        %s410 = scalar_select %p409, %s25, 3
        %p411 = scmp.lt.s32.totalorder %s406, 1
        %s412 = scalar_select %p411, %s406, 1
        %s413 = smul.addr %s410, 2
        %s414 = sadd.s32 %s412, %s413
        %s415 = smul.addr %s408, 8
        %s416 = sadd.s32 %s414, %s415
        %s417 = smul.addr %s416, 4
        %s418 = scalar_lea.vmem %s3, %s417
      $region52: #{transformer_forward.33} parent=47 // pred_fallthru
        _
    $region48: #{transformer_forward.33} parent=5 // pred_fallthru
      _
  $region6: #{transformer_forward.33} parent=0 // loop_footer
    %s13 = sadd.s32 1, %s9
  $region7: #{transformer_forward.33} parent=0 // loop_footer_branch
    %8 = sbr.rel target = $region3
  $region8: #{transformer_forward.33} parent=0 // loop_exit
    _

// kernel: transformer_forward.35
$region0: #{transformer_forward.35}
  #allocation0 [shape = 'u32[]', space=smem, size = 0x4, offset = 0x4, fixed_abs, tag = 'smem constant byte address 0x4 - core index']
  #allocation1 [shape = 'u32[72,128]{1,0:T(1,128)}', space=vmem, size = 0x9000, scoped, tag = 'internal scratch']
  #allocation2 [shape = 'f32[16,32]{1,0:T(8,128)}', space=vmem, size = 0x2000, scoped, tag = 'scratch operand']
  %s0 = inlined_call_operand.vmem [shape: bf16[4,16,8], index: 0, kind: input, shape index: {}]
  %s1 = inlined_call_operand.vmem [shape: bf16[4,8,32], index: 1, kind: input, shape index: {}]
  %s2 = inlined_call_operand.vmem [shape: f32[1,32], index: 2, kind: input, shape index: {}]
  %s3 = inlined_call_operand.vmem [shape: bf16[16,32], index: 3, kind: input, shape index: {}]
  %s4 = inlined_call_operand.vmem [shape: f32[1,32], index: 4, kind: input, shape index: {}]
  %s5 = inlined_call_operand.vmem [shape: f32[1,32], index: 5, kind: input, shape index: {}]
  %s6 = inlined_call_operand.vmem [shape: bf16[16,32], index: 6, kind: output, shape index: {}]
  %s7 = sld [smem:[#allocation0]]
  $region65: #{transformer_forward.35} parent=0
    _
  %s9 = ssub.s32 1, %s7
  %s10 = scalar_select 0, %s9, %s7
  loop: start=0, step=1, limit=6
  $region2: #{transformer_forward.35} parent=0 // loop_pre_header
    _
  $region3: #{transformer_forward.35} parent=0 // loop_header
    %s12 = sphi 0, %s16
    %p13 = scmp.ge.s32.totalorder %s12, 6
    %s19 = sphi 0, %s31
    %s20 = sphi 0, %s27
    %s21 = sphi 0, %s19
    %s22 = sphi 0, %s20
    %s23 = sphi 0, %s21
    %s24 = sphi 0, %s22
    %s36 = sphi 0, %s38
    %s39 = sphi 0, %s36
    %s40 = sphi 0, %s39
    %s56 = sphi 0, %s40
    %s62 = sphi 0, %s64
    %s65 = sphi 0, %s62
    %s66 = sphi 0, %s65
    %s82 = sphi 0, %s66
    %s86 = sphi 0, %s86
    %s88 = sphi 0, %s86
    %s89 = sphi 0, %s88
    %s103 = sphi 0, %s89
    %s109 = sphi 0, %s111
    %s112 = sphi 0, %s109
    %s113 = sphi 0, %s112
    %s129 = sphi 0, %s113
    %s133 = sphi 0, %s133
    %s135 = sphi 0, %s133
    %s136 = sphi 0, %s135
    %s150 = sphi 0, %s136
    %s154 = sphi 0, %s154
    %s156 = sphi 0, %s154
    %s157 = sphi 0, %s156
    %s171 = sphi 0, %s157
    %s177 = sphi 0, %s179
    %s180 = sphi 0, %s177
    %s181 = sphi 0, %s180
    %s197 = sphi 0, %s181
  $region4: #{transformer_forward.35} parent=0 // loop_header_branch
    %15 = sbr.rel (%p13) target = $region8
  $region5: #{transformer_forward.35} parent=0 // loop_body
    %s17 = ssub.s32 %s12, 1
    %s18 = ssub.s32 %s12, 2
    %s25 = sadd.s32 1, %s20
    %p26 = scmp.ge.s32.totalorder %s25, 4
    %s27 = scalar_select %p26, 0, %s25
    %s28 = sadd.s32 1, %s19
    %s29 = scalar_select %p26, %s28, %s19
    %p30 = scmp.ge.s32.totalorder %s29, 1
    %s31 = scalar_select %p30, 0, %s29
    %s32 = ssub.s32 %s20, %s27
    %s33 = ssub.s32 %s19, %s31
    %s34 = sor.u32 %s32, %s33
    %p35 = scmp.eq.s32.totalorder %s34, 0
    %s37 = sadd.s32 %s36, 1
    %s38 = scalar_select %p35, %s36, %s37
    %p41 = pneg %p35
    %p42 = scmp.eq.s32.totalorder %s12, 3
    %p43 = por %p41, %p42
    %p44 = scmp.ne.s32.totalorder %s36, %s39
    %p45 = scmp.eq.s32.totalorder %s12, 0
    %p46 = por %p44, %p45
    %p47 = scmp.ne.s32.totalorder %s36, %s39
    %p48 = scmp.eq.s32.totalorder %s17, 3
    %p49 = por %p47, %p48
    %p50 = scmp.ne.s32.totalorder %s39, %s40
    %p51 = scmp.eq.s32.totalorder %s17, 0
    %p52 = por %p50, %p51
    %p53 = scmp.ne.s32.totalorder %s39, %s40
    %p54 = scmp.eq.s32.totalorder %s18, 3
    %p55 = por %p53, %p54
    %p57 = scmp.ne.s32.totalorder %s40, %s56
    %p58 = scmp.eq.s32.totalorder %s18, 0
    %p59 = por %p57, %p58
    %s60 = ssub.s32 %s20, %s27
    %p61 = scmp.eq.s32.totalorder %s60, 0
    %s63 = sadd.s32 %s62, 1
    %s64 = scalar_select %p61, %s62, %s63
    %p67 = pneg %p61
    %p68 = scmp.eq.s32.totalorder %s12, 3
    %p69 = por %p67, %p68
    %p70 = scmp.ne.s32.totalorder %s62, %s65
    %p71 = scmp.eq.s32.totalorder %s12, 0
    %p72 = por %p70, %p71
    %p73 = scmp.ne.s32.totalorder %s62, %s65
    %p74 = scmp.eq.s32.totalorder %s17, 3
    %p75 = por %p73, %p74
    %p76 = scmp.ne.s32.totalorder %s65, %s66
    %p77 = scmp.eq.s32.totalorder %s17, 0
    %p78 = por %p76, %p77
    %p79 = scmp.ne.s32.totalorder %s65, %s66
    %p80 = scmp.eq.s32.totalorder %s18, 3
    %p81 = por %p79, %p80
    %p83 = scmp.ne.s32.totalorder %s66, %s82
    %p84 = scmp.eq.s32.totalorder %s18, 0
    %p85 = por %p83, %p84
    %s87 = sadd.s32 %s86, 1
    %p90 = scmp.eq.s32.totalorder %s12, 3
    %p91 = scmp.ne.s32.totalorder %s86, %s88
    %p92 = scmp.eq.s32.totalorder %s12, 0
    %p93 = por %p91, %p92
    %p94 = scmp.ne.s32.totalorder %s86, %s88
    %p95 = scmp.eq.s32.totalorder %s17, 3
    %p96 = por %p94, %p95
    %p97 = scmp.ne.s32.totalorder %s88, %s89
    %p98 = scmp.eq.s32.totalorder %s17, 0
    %p99 = por %p97, %p98
    %p100 = scmp.ne.s32.totalorder %s88, %s89
    %p101 = scmp.eq.s32.totalorder %s18, 3
    %p102 = por %p100, %p101
    %p104 = scmp.ne.s32.totalorder %s89, %s103
    %p105 = scmp.eq.s32.totalorder %s18, 0
    %p106 = por %p104, %p105
    %s107 = ssub.s32 %s19, %s31
    %p108 = scmp.eq.s32.totalorder %s107, 0
    %s110 = sadd.s32 %s109, 1
    %s111 = scalar_select %p108, %s109, %s110
    %p114 = pneg %p108
    %p115 = scmp.eq.s32.totalorder %s12, 3
    %p116 = por %p114, %p115
    %p117 = scmp.ne.s32.totalorder %s109, %s112
    %p118 = scmp.eq.s32.totalorder %s12, 0
    %p119 = por %p117, %p118
    %p120 = scmp.ne.s32.totalorder %s109, %s112
    %p121 = scmp.eq.s32.totalorder %s17, 3
    %p122 = por %p120, %p121
    %p123 = scmp.ne.s32.totalorder %s112, %s113
    %p124 = scmp.eq.s32.totalorder %s17, 0
    %p125 = por %p123, %p124
    %p126 = scmp.ne.s32.totalorder %s112, %s113
    %p127 = scmp.eq.s32.totalorder %s18, 3
    %p128 = por %p126, %p127
    %p130 = scmp.ne.s32.totalorder %s113, %s129
    %p131 = scmp.eq.s32.totalorder %s18, 0
    %p132 = por %p130, %p131
    %s134 = sadd.s32 %s133, 1
    %p137 = scmp.eq.s32.totalorder %s12, 3
    %p138 = scmp.ne.s32.totalorder %s133, %s135
    %p139 = scmp.eq.s32.totalorder %s12, 0
    %p140 = por %p138, %p139
    %p141 = scmp.ne.s32.totalorder %s133, %s135
    %p142 = scmp.eq.s32.totalorder %s17, 3
    %p143 = por %p141, %p142
    %p144 = scmp.ne.s32.totalorder %s135, %s136
    %p145 = scmp.eq.s32.totalorder %s17, 0
    %p146 = por %p144, %p145
    %p147 = scmp.ne.s32.totalorder %s135, %s136
    %p148 = scmp.eq.s32.totalorder %s18, 3
    %p149 = por %p147, %p148
    %p151 = scmp.ne.s32.totalorder %s136, %s150
    %p152 = scmp.eq.s32.totalorder %s18, 0
    %p153 = por %p151, %p152
    %s155 = sadd.s32 %s154, 1
    %p158 = scmp.eq.s32.totalorder %s12, 3
    %p159 = scmp.ne.s32.totalorder %s154, %s156
    %p160 = scmp.eq.s32.totalorder %s12, 0
    %p161 = por %p159, %p160
    %p162 = scmp.ne.s32.totalorder %s154, %s156
    %p163 = scmp.eq.s32.totalorder %s17, 3
    %p164 = por %p162, %p163
    %p165 = scmp.ne.s32.totalorder %s156, %s157
    %p166 = scmp.eq.s32.totalorder %s17, 0
    %p167 = por %p165, %p166
    %p168 = scmp.ne.s32.totalorder %s156, %s157
    %p169 = scmp.eq.s32.totalorder %s18, 3
    %p170 = por %p168, %p169
    %p172 = scmp.ne.s32.totalorder %s157, %s171
    %p173 = scmp.eq.s32.totalorder %s18, 0
    %p174 = por %p172, %p173
    %s175 = ssub.s32 %s19, %s31
    %p176 = scmp.eq.s32.totalorder %s175, 0
    %s178 = sadd.s32 %s177, 1
    %s179 = scalar_select %p176, %s177, %s178
    %p182 = pneg %p176
    %p183 = scmp.eq.s32.totalorder %s12, 3
    %p184 = por %p182, %p183
    %p185 = scmp.ne.s32.totalorder %s177, %s180
    %p186 = scmp.eq.s32.totalorder %s12, 0
    %p187 = por %p185, %p186
    %p188 = scmp.ne.s32.totalorder %s177, %s180
    %p189 = scmp.eq.s32.totalorder %s17, 3
    %p190 = por %p188, %p189
    %p191 = scmp.ne.s32.totalorder %s180, %s181
    %p192 = scmp.eq.s32.totalorder %s17, 0
    %p193 = por %p191, %p192
    %p194 = scmp.ne.s32.totalorder %s180, %s181
    %p195 = scmp.eq.s32.totalorder %s18, 3
    %p196 = por %p194, %p195
    %p198 = scmp.ne.s32.totalorder %s181, %s197
    %p199 = scmp.eq.s32.totalorder %s18, 0
    %p200 = por %p198, %p199
    %p201 = scmp.le.s32.totalorder 1, %s12
    %p202 = scmp.lt.s32.totalorder %s12, 5
    %p203 = pnand %p201, %p202
    %p204 = pneg %p203
    // Predicated region
    $region9: #{transformer_forward.35} parent=5 // pred_check
      _
    $region10: #{transformer_forward.35} parent=5 // pred_check_branch
      %206 = sbr.rel (%p203) target = $region12
    $region11: #{transformer_forward.35} parent=5 // pred_region
      %s207 = ssub.s32 %s12, 1
      // Predicated region
      $region13: #{transformer_forward.35} parent=11 // pred_check
        %p208 = pneg %p99
      $region14: #{transformer_forward.35} parent=11 // pred_check_branch
        %210 = sbr.rel (%p208) target = $region16
      $region15: #{transformer_forward.35} parent=11 // pred_region
        _
      $region16: #{transformer_forward.35} parent=11 // pred_fallthru
        _
      // Predicated region
      $region17: #{transformer_forward.35} parent=11 // pred_check
        %p211 = pneg %p125
      $region18: #{transformer_forward.35} parent=11 // pred_check_branch
        %213 = sbr.rel (%p211) target = $region20
      $region19: #{transformer_forward.35} parent=11 // pred_region
        %s214 = smul.u32 2, %s21
        %p215 = scmp.lt.s32.totalorder %s214, 1
        %s216 = scalar_select %p215, %s214, 1
        %s217 = smul.addr %s216, 4
        %s218 = scalar_lea.vmem %s3, %s217
        %s219 = smul.u32 2, %s21
      $region20: #{transformer_forward.35} parent=11 // pred_fallthru
        _
      // Predicated region
      $region21: #{transformer_forward.35} parent=11 // pred_check
        %p220 = pneg %p146
      $region22: #{transformer_forward.35} parent=11 // pred_check_branch
        %222 = sbr.rel (%p220) target = $region24
      $region23: #{transformer_forward.35} parent=11 // pred_region
        _
      $region24: #{transformer_forward.35} parent=11 // pred_fallthru
        _
      // Predicated region
      $region25: #{transformer_forward.35} parent=11 // pred_check
        %p223 = pneg %p167
      $region26: #{transformer_forward.35} parent=11 // pred_check_branch
        %225 = sbr.rel (%p223) target = $region28
      $region27: #{transformer_forward.35} parent=11 // pred_region
        _
      $region28: #{transformer_forward.35} parent=11 // pred_fallthru
        _
    $region12: #{transformer_forward.35} parent=5 // pred_fallthru
      _
    %p226 = scmp.lt.s32.totalorder %s12, 4
    // Predicated region
    $region29: #{transformer_forward.35} parent=5 // pred_check
      %p227 = pneg %p226
    $region30: #{transformer_forward.35} parent=5 // pred_check_branch
      %229 = sbr.rel (%p227) target = $region32
    $region31: #{transformer_forward.35} parent=5 // pred_region
      // Predicated region
      $region33: #{transformer_forward.35} parent=31 // pred_check
        %p230 = pneg %p46
      $region34: #{transformer_forward.35} parent=31 // pred_check_branch
        %232 = sbr.rel (%p230) target = $region36
      $region35: #{transformer_forward.35} parent=31 // pred_region
        %s233 = smul.u32 2, %s19
        %p234 = scmp.lt.s32.totalorder %s20, 3
        %s235 = scalar_select %p234, %s20, 3
        %p236 = scmp.lt.s32.totalorder %s233, 1
        %s237 = scalar_select %p236, %s233, 1
        %s238 = smul.addr %s235, 2
        %s239 = sadd.s32 %s237, %s238
        %s240 = smul.addr %s239, 4
        %s241 = scalar_lea.vmem %s0, %s240
        %s242 = smul.u32 2, %s19
      $region36: #{transformer_forward.35} parent=31 // pred_fallthru
        _
      // Predicated region
      $region37: #{transformer_forward.35} parent=31 // pred_check
        %p243 = pneg %p72
      $region38: #{transformer_forward.35} parent=31 // pred_check_branch
        %245 = sbr.rel (%p243) target = $region40
      $region39: #{transformer_forward.35} parent=31 // pred_region
        %p246 = scmp.lt.s32.totalorder %s20, 3
        %s247 = scalar_select %p246, %s20, 3
        %s248 = smul.addr %s247, 4
        %s249 = scalar_lea.vmem %s1, %s248
      $region40: #{transformer_forward.35} parent=31 // pred_fallthru
        _
    $region32: #{transformer_forward.35} parent=5 // pred_fallthru
      _
    %p250 = scmp.le.s32.totalorder 1, %s12
    %p251 = scmp.lt.s32.totalorder %s12, 5
    %p252 = pnand %p250, %p251
    %p253 = pneg %p252
    // Predicated region
    $region41: #{transformer_forward.35} parent=5 // pred_check
      _
    $region42: #{transformer_forward.35} parent=5 // pred_check_branch
      %255 = sbr.rel (%p252) target = $region44
    $region43: #{transformer_forward.35} parent=5 // pred_region
      %s256 = ssub.s32 %s12, 1
      %s257 = smul.u32 2, %s21
      %p258 = scmp.lt.s32.totalorder %s22, 3
      %s259 = scalar_select %p258, %s22, 3
      %p260 = scmp.lt.s32.totalorder %s257, 1
      %s261 = scalar_select %p260, %s257, 1
      %s262 = smul.addr %s259, 2
      %s263 = sadd.s32 %s261, %s262
      %s264 = smul.addr %s263, 4
      %s265 = scalar_lea.vmem %s0, %s264
      %p266 = pneg %p52
      %p267 = pneg %p49
      %p268 = scmp.lt.s32.totalorder %s22, 3
      %s269 = scalar_select %p268, %s22, 3
      %s270 = smul.addr %s269, 4
      %s271 = scalar_lea.vmem %s1, %s270
      %p272 = pneg %p78
      %p273 = pneg %p75
      %p274 = pneg %p99
      %p275 = pneg %p96
      %s276 = smul.u32 2, %s21
      %p277 = scmp.lt.s32.totalorder %s276, 1
      %s278 = scalar_select %p277, %s276, 1
      %s279 = smul.addr %s278, 4
      %s280 = scalar_lea.vmem %s3, %s279
      %p281 = pneg %p125
      %p282 = pneg %p122
      %p283 = pneg %p146
      %p284 = pneg %p143
      %p285 = pneg %p167
      %p286 = pneg %p164
      %p287 = pneg %p193
      %p288 = pneg %p190
      %s289 = smul.u32 2, %s21
      %p290 = scmp.lt.s32.totalorder %s289, 1
      %s291 = scalar_select %p290, %s289, 1
      %s292 = smul.addr %s291, 4
      %s293 = scalar_lea.vmem %s6, %s292
      %s294 = smul.u32 2, %s21
      %p295 = scmp.lt.s32.totalorder %s22, 3
      %s296 = scalar_select %p295, %s22, 3
      %p297 = scmp.lt.s32.totalorder %s294, 1
      %s298 = scalar_select %p297, %s294, 1
      %s299 = smul.addr %s296, 2
      %s300 = sadd.s32 %s298, %s299
      %s301 = smul.addr %s300, 4
      %s302 = scalar_lea.vmem %s0, %s301
      %s303 = smul.u32 2, %s21
      %p304 = scmp.lt.s32.totalorder %s22, 3
      %s305 = scalar_select %p304, %s22, 3
      %s306 = smul.addr %s305, 4
      %s307 = scalar_lea.vmem %s1, %s306
      %s308 = smul.u32 2, %s21
      %p309 = scmp.lt.s32.totalorder %s308, 1
      %s310 = scalar_select %p309, %s308, 1
      %s311 = smul.addr %s310, 4
      %s312 = scalar_lea.vmem %s3, %s311
      %s313 = smul.u32 2, %s21
      %s314 = smul.u32 2, %s21
      %p315 = scmp.lt.s32.totalorder %s314, 1
      %s316 = scalar_select %p315, %s314, 1
      %s317 = smul.addr %s316, 4
      %s318 = scalar_lea.vmem %s6, %s317
      %s319 = smul.u32 2, %s21
      %p321 = scmp.eq.s32.totalorder %s22, 0
      // Predicated region
      $region45: #{transformer_forward.35} parent=43 // pred_check
        %p322 = pneg %p321
      $region46: #{transformer_forward.35} parent=43 // pred_check_branch
        %324 = sbr.rel (%p322) target = $region48
      $region47: #{transformer_forward.35} parent=43 // pred_region
        %vm325 = vcmask 261120
        %326 = vst.msk [vmem:[#allocation2] sm:$0xff] %vm325, 0.0
        %327 = vst.msk [vmem:[#allocation2 + $0x8] sm:$0xff] %vm325, 0.0
      $region48: #{transformer_forward.35} parent=43 // pred_fallthru
        _
      %v328 = vld [vmem:[#allocation2] sm:$0xff]
      %v329 = vld [vmem:[#allocation2 + $0x8] sm:$0xff]
      %v330 = vld [vmem:[%s302] sm:$0xf]
      %v331 = vld [vmem:[%s302 + $0x4] sm:$0xf]
      %v332 = vld [vmem:[%s307] sm:$0xf]
      %v335 = vunpack.c.l.b16 %v330
      %v336 = vunpack.c.l.b16 %v331
      %v337 = vpack.c.b16 %v336, %v335
      %vm338 = vcmask 64512
      %v340 = vsel %vm338, %v337, 0
      %vm342 = vcmask 1043456
      %v344 = vsel %vm342, %v332, 0
      %346 = vmatpush.bf16.msra.mxu0 0
      %347 = vmatpush.bf16.msra.mxu0 0
      %348 = vmatpush.bf16.msra.mxu0 0
      %349 = vmatpush.bf16.msra.mxu0 0
      %350 = vmatpush.bf16.msra.mxu0 0
      %351 = vmatpush.bf16.msra.mxu0 0
      %352 = vmatpush.bf16.msra.mxu0 0
      %353 = vmatpush.bf16.msra.mxu0 %v344
      %354 = vmatmul.bf16.gmra.mxu0 %v340
      %v355 = vpop.f32.mrf.mxu0
      %v356 = vadd.f32 0.0, %v355
      %v357 = vpop.f32.mrf.mxu0
      %v358 = vadd.f32 0.0, %v357
      %359 = vdwg.mxu0
      %v360 = vadd.f32 %v328, %v356
      %v361 = vadd.f32 %v329, %v358
      %vm362 = vcmask 261120
      %363 = vst.msk [vmem:[#allocation2] sm:$0xff] %vm362, %v360
      %364 = vst.msk [vmem:[#allocation2 + $0x8] sm:$0xff] %vm362, %v361
      %p365 = scmp.eq.s32.totalorder %s22, 3
      // Predicated region
      $region49: #{transformer_forward.35} parent=43 // pred_check
        %p366 = pneg %p365
      $region50: #{transformer_forward.35} parent=43 // pred_check_branch
        %368 = sbr.rel (%p366) target = $region52
      $region51: #{transformer_forward.35} parent=43 // pred_region
        %v369 = vld [vmem:[#allocation2] sm:$0xff]
        %v370 = vld [vmem:[#allocation2 + $0x8] sm:$0xff]
        %v371 = vld [vmem:[%s2] sm:$0x1]
        %v373 = vperm.slane %v371, 0
        %v375 = vadd.f32 %v369, %v373
        %v376 = vadd.f32 %v370, %v373
        %v377 = vld [vmem:[%s312] sm:$0xf]
        %v378 = vld [vmem:[%s312 + $0x4] sm:$0xf]
        %v379 = vunpack.c.l.bf16 %v377
        %v380 = vunpack.c.l.bf16 %v378
        %v381 = vadd.f32 %v375, %v379
        %v382 = vadd.f32 %v376, %v380
        %v383 = vsel %vm362, %v381, 0.0
        %384 = vadd.xlane.f32.xlu0 %v383
        %v385 = vpop.xlane.xlu0 %384
        %v386 = vsel %vm362, %v382, 0.0
        %387 = vadd.xlane.f32.xlu0 %v386
        %v388 = vpop.xlane.xlu0 %387
        %v389 = vrcp.pop 32.0
        %v390 = vmul.f32 32.0, %v389
        %v391 = vsub.f32 1.0, %v390
        %v392 = vmul.f32 %v389, %v391
        %v393 = vadd.f32 %v389, %v392
        %vm394 = vweird.f32 %v389
        %v395 = vsel %vm394, %v389, %v393
        %v396 = vmul.f32 %v385, %v395
        %v397 = vmul.f32 %v388, %v395
        %v398 = vsub.f32 %v381, %v396
        %v399 = vsub.f32 %v382, %v397
        %v400 = vmul.f32 %v398, %v398
        %v401 = vmul.f32 %v399, %v399
        %v402 = vsel %vm362, %v400, 0.0
        %403 = vadd.xlane.f32.xlu0 %v402
        %v404 = vpop.xlane.xlu0 %403
        %v405 = vsel %vm362, %v401, 0.0
        %406 = vadd.xlane.f32.xlu0 %v405
        %v407 = vpop.xlane.xlu0 %406
        %v408 = vmul.f32 %v404, %v395
        %v409 = vmul.f32 %v407, %v395
        %v410 = vadd.f32 %v408, 1e-05
        %v411 = vadd.f32 %v409, 1e-05
        %v412 = vrsqrt.pop %v410
        %v413 = vmul.f32 %v412, %v410
        %v414 = vmul.f32 %v413, %v412
        %v415 = vmul.f32 0.5, %v414
        %v416 = vsub.f32 1.5, %v415
        %v417 = vmul.f32 %v412, %v416
        %vm418 = vweird.f32 %v410
        %vm419 = vweird.f32 %v412
        %vm420 = vmor %vm418, %vm419
        %v421 = vsel %vm420, %v412, %v417
        %v422 = vrsqrt.pop %v411
        %v423 = vmul.f32 %v422, %v411
        %v424 = vmul.f32 %v423, %v422
        %v425 = vmul.f32 0.5, %v424
        %v426 = vsub.f32 1.5, %v425
        %v427 = vmul.f32 %v422, %v426
        %vm428 = vweird.f32 %v411
        %vm429 = vweird.f32 %v422
        %vm430 = vmor %vm428, %vm429
        %v431 = vsel %vm430, %v422, %v427
        %v432 = vmul.f32 %v398, %v421
        %v433 = vmul.f32 %v399, %v431
        %v434 = vld [vmem:[%s4] sm:$0x1]
        %v436 = vperm.slane %v434, 0
        %v438 = vmul.f32 %v432, %v436
        %v439 = vmul.f32 %v433, %v436
        %v440 = vld [vmem:[%s5] sm:$0x1]
        %v442 = vperm.slane %v440, 0
        %v444 = vadd.f32 %v438, %v442
        %v445 = vadd.f32 %v439, %v442
        %v446 = vpack.c.bf16 %v444, %v444
        %v447 = vpack.c.bf16 %v445, %v445
        %vm448 = vcmask 257024
        %449 = vst.msk [vmem:[%s318] sm:$0xf] %vm448, %v446
        %450 = vst.msk [vmem:[%s318 + $0x4] sm:$0xf] %vm448, %v447
      $region52: #{transformer_forward.35} parent=43 // pred_fallthru
        _
      %s451 = smul.u32 2, %s21
      %p452 = scmp.lt.s32.totalorder %s451, 1
      %s453 = scalar_select %p452, %s451, 1
      %s454 = smul.addr %s453, 4
      %s455 = scalar_lea.vmem %s6, %s454
      // Predicated region
      $region53: #{transformer_forward.35} parent=43 // pred_check
        %p456 = pneg %p190
      $region54: #{transformer_forward.35} parent=43 // pred_check_branch
        %458 = sbr.rel (%p456) target = $region56
      $region55: #{transformer_forward.35} parent=43 // pred_region
        %s459 = smul.u32 2, %s21
      $region56: #{transformer_forward.35} parent=43 // pred_fallthru
        _
      // Predicated region
      $region57: #{transformer_forward.35} parent=43 // pred_check
        %p460 = pneg %p190
      $region58: #{transformer_forward.35} parent=43 // pred_check_branch
        %462 = sbr.rel (%p460) target = $region60
      $region59: #{transformer_forward.35} parent=43 // pred_region
        %s463 = smul.u32 2, %s21
        %p464 = scmp.lt.s32.totalorder %s463, 1
        %s465 = scalar_select %p464, %s463, 1
        %s466 = smul.addr %s465, 4
        %s467 = scalar_lea.vmem %s6, %s466
      $region60: #{transformer_forward.35} parent=43 // pred_fallthru
        _
    $region44: #{transformer_forward.35} parent=5 // pred_fallthru
      _
    %p468 = scmp.le.s32.totalorder 2, %s12
    // Predicated region
    $region61: #{transformer_forward.35} parent=5 // pred_check
      %p469 = pneg %p468
    $region62: #{transformer_forward.35} parent=5 // pred_check_branch
      %471 = sbr.rel (%p469) target = $region64
    $region63: #{transformer_forward.35} parent=5 // pred_region
      %s472 = ssub.s32 %s12, 2
    $region64: #{transformer_forward.35} parent=5 // pred_fallthru
      _
  $region6: #{transformer_forward.35} parent=0 // loop_footer
    %s16 = sadd.s32 1, %s12
  $region7: #{transformer_forward.35} parent=0 // loop_footer_branch
    %11 = sbr.rel target = $region3
  $region8: #{transformer_forward.35} parent=0 // loop_exit
    _

// kernel: transformer_forward.36
$region0: #{transformer_forward.36}
  #allocation0 [shape = 'u32[]', space=smem, size = 0x4, offset = 0x4, fixed_abs, tag = 'smem constant byte address 0x4 - core index']
  #allocation1 [shape = 'u32[72,128]{1,0:T(1,128)}', space=vmem, size = 0x9000, scoped, tag = 'internal scratch']
  #allocation2 [shape = 'f32[16,8]{1,0:T(8,128)}', space=vmem, size = 0x2000, scoped, tag = 'scratch operand']
  %s0 = inlined_call_operand.vmem [shape: bf16[16,32], index: 0, kind: input, shape index: {}]
  %s1 = inlined_call_operand.vmem [shape: bf16[1,4,32,8], index: 1, kind: input, shape index: {}]
  %s2 = inlined_call_operand.vmem [shape: f32[1,4,1,8], index: 2, kind: input, shape index: {}]
  %s3 = inlined_call_operand.vmem [shape: bf16[1,4,16,8], index: 3, kind: output, shape index: {}]
  %s4 = sld [smem:[#allocation0]]
  $region53: #{transformer_forward.36} parent=0
    _
  %s6 = ssub.s32 1, %s4
  %s7 = scalar_select 0, %s6, %s4
  loop: start=0, step=1, limit=6
  $region2: #{transformer_forward.36} parent=0 // loop_pre_header
    _
  $region3: #{transformer_forward.36} parent=0 // loop_header
    %s9 = sphi 0, %s13
    %p10 = scmp.ge.s32.totalorder %s9, 6
    %s16 = sphi 0, %s42
    %s17 = sphi 0, %s38
    %s18 = sphi 0, %s34
    %s19 = sphi 0, %s30
    %s20 = sphi 0, %s16
    %s21 = sphi 0, %s17
    %s22 = sphi 0, %s18
    %s23 = sphi 0, %s19
    %s24 = sphi 0, %s20
    %s25 = sphi 0, %s21
    %s26 = sphi 0, %s22
    %s27 = sphi 0, %s23
    %s47 = sphi 0, %s49
    %s50 = sphi 0, %s47
    %s51 = sphi 0, %s50
    %s67 = sphi 0, %s51
    %s77 = sphi 0, %s79
    %s80 = sphi 0, %s77
    %s81 = sphi 0, %s80
    %s97 = sphi 0, %s81
    %s105 = sphi 0, %s107
    %s108 = sphi 0, %s105
    %s109 = sphi 0, %s108
    %s125 = sphi 0, %s109
    %s135 = sphi 0, %s137
    %s138 = sphi 0, %s135
    %s139 = sphi 0, %s138
    %s155 = sphi 0, %s139
  $region4: #{transformer_forward.36} parent=0 // loop_header_branch
    %12 = sbr.rel (%p10) target = $region8
  $region5: #{transformer_forward.36} parent=0 // loop_body
    %s14 = ssub.s32 %s9, 1
    %s15 = ssub.s32 %s9, 2
    %s28 = sadd.s32 1, %s19
    %p29 = scmp.ge.s32.totalorder %s28, 1
    %s30 = scalar_select %p29, 0, %s28
    %s31 = sadd.s32 1, %s18
    %s32 = scalar_select %p29, %s31, %s18
    %p33 = scmp.ge.s32.totalorder %s32, 1
    %s34 = scalar_select %p33, 0, %s32
    %s35 = sadd.s32 1, %s17
    %s36 = scalar_select %p33, %s35, %s17
    %p37 = scmp.ge.s32.totalorder %s36, 4
    %s38 = scalar_select %p37, 0, %s36
    %s39 = sadd.s32 1, %s16
    %s40 = scalar_select %p37, %s39, %s16
    %p41 = scmp.ge.s32.totalorder %s40, 1
    %s42 = scalar_select %p41, 0, %s40
    %s43 = ssub.s32 %s18, %s34
    %s44 = ssub.s32 %s19, %s30
    %s45 = sor.u32 %s43, %s44
    %p46 = scmp.eq.s32.totalorder %s45, 0
    %s48 = sadd.s32 %s47, 1
    %s49 = scalar_select %p46, %s47, %s48
    %p52 = pneg %p46
    %p53 = scmp.eq.s32.totalorder %s9, 3
    %p54 = por %p52, %p53
    %p55 = scmp.ne.s32.totalorder %s47, %s50
    %p56 = scmp.eq.s32.totalorder %s9, 0
    %p57 = por %p55, %p56
    %p58 = scmp.ne.s32.totalorder %s47, %s50
    %p59 = scmp.eq.s32.totalorder %s14, 3
    %p60 = por %p58, %p59
    %p61 = scmp.ne.s32.totalorder %s50, %s51
    %p62 = scmp.eq.s32.totalorder %s14, 0
    %p63 = por %p61, %p62
    %p64 = scmp.ne.s32.totalorder %s50, %s51
    %p65 = scmp.eq.s32.totalorder %s15, 3
    %p66 = por %p64, %p65
    %p68 = scmp.ne.s32.totalorder %s51, %s67
    %p69 = scmp.eq.s32.totalorder %s15, 0
    %p70 = por %p68, %p69
    %s71 = ssub.s32 %s16, %s42
    %s72 = ssub.s32 %s17, %s38
    %s73 = sor.u32 %s71, %s72
    %s74 = ssub.s32 %s19, %s30
    %s75 = sor.u32 %s73, %s74
    %p76 = scmp.eq.s32.totalorder %s75, 0
    %s78 = sadd.s32 %s77, 1
    %s79 = scalar_select %p76, %s77, %s78
    %p82 = pneg %p76
    %p83 = scmp.eq.s32.totalorder %s9, 3
    %p84 = por %p82, %p83
    %p85 = scmp.ne.s32.totalorder %s77, %s80
    %p86 = scmp.eq.s32.totalorder %s9, 0
    %p87 = por %p85, %p86
    %p88 = scmp.ne.s32.totalorder %s77, %s80
    %p89 = scmp.eq.s32.totalorder %s14, 3
    %p90 = por %p88, %p89
    %p91 = scmp.ne.s32.totalorder %s80, %s81
    %p92 = scmp.eq.s32.totalorder %s14, 0
    %p93 = por %p91, %p92
    %p94 = scmp.ne.s32.totalorder %s80, %s81
    %p95 = scmp.eq.s32.totalorder %s15, 3
    %p96 = por %p94, %p95
    %p98 = scmp.ne.s32.totalorder %s81, %s97
    %p99 = scmp.eq.s32.totalorder %s15, 0
    %p100 = por %p98, %p99
    %s101 = ssub.s32 %s16, %s42
    %s102 = ssub.s32 %s17, %s38
    %s103 = sor.u32 %s101, %s102
    %p104 = scmp.eq.s32.totalorder %s103, 0
    %s106 = sadd.s32 %s105, 1
    %s107 = scalar_select %p104, %s105, %s106
    %p110 = pneg %p104
    %p111 = scmp.eq.s32.totalorder %s9, 3
    %p112 = por %p110, %p111
    %p113 = scmp.ne.s32.totalorder %s105, %s108
    %p114 = scmp.eq.s32.totalorder %s9, 0
    %p115 = por %p113, %p114
    %p116 = scmp.ne.s32.totalorder %s105, %s108
    %p117 = scmp.eq.s32.totalorder %s14, 3
    %p118 = por %p116, %p117
    %p119 = scmp.ne.s32.totalorder %s108, %s109
    %p120 = scmp.eq.s32.totalorder %s14, 0
    %p121 = por %p119, %p120
    %p122 = scmp.ne.s32.totalorder %s108, %s109
    %p123 = scmp.eq.s32.totalorder %s15, 3
    %p124 = por %p122, %p123
    %p126 = scmp.ne.s32.totalorder %s109, %s125
    %p127 = scmp.eq.s32.totalorder %s15, 0
    %p128 = por %p126, %p127
    %s129 = ssub.s32 %s16, %s42
    %s130 = ssub.s32 %s17, %s38
    %s131 = sor.u32 %s129, %s130
    %s132 = ssub.s32 %s18, %s34
    %s133 = sor.u32 %s131, %s132
    %p134 = scmp.eq.s32.totalorder %s133, 0
    %s136 = sadd.s32 %s135, 1
    %s137 = scalar_select %p134, %s135, %s136
    %p140 = pneg %p134
    %p141 = scmp.eq.s32.totalorder %s9, 3
    %p142 = por %p140, %p141
    %p143 = scmp.ne.s32.totalorder %s135, %s138
    %p144 = scmp.eq.s32.totalorder %s9, 0
    %p145 = por %p143, %p144
    %p146 = scmp.ne.s32.totalorder %s135, %s138
    %p147 = scmp.eq.s32.totalorder %s14, 3
    %p148 = por %p146, %p147
    %p149 = scmp.ne.s32.totalorder %s138, %s139
    %p150 = scmp.eq.s32.totalorder %s14, 0
    %p151 = por %p149, %p150
    %p152 = scmp.ne.s32.totalorder %s138, %s139
    %p153 = scmp.eq.s32.totalorder %s15, 3
    %p154 = por %p152, %p153
    %p156 = scmp.ne.s32.totalorder %s139, %s155
    %p157 = scmp.eq.s32.totalorder %s15, 0
    %p158 = por %p156, %p157
    %p159 = scmp.le.s32.totalorder 1, %s9
    %p160 = scmp.lt.s32.totalorder %s9, 5
    %p161 = pnand %p159, %p160
    %p162 = pneg %p161
    // Predicated region
    $region9: #{transformer_forward.36} parent=5 // pred_check
      _
    $region10: #{transformer_forward.36} parent=5 // pred_check_branch
      %164 = sbr.rel (%p161) target = $region12
    $region11: #{transformer_forward.36} parent=5 // pred_region
      %s165 = ssub.s32 %s9, 1
      // Predicated region
      $region13: #{transformer_forward.36} parent=11 // pred_check
        %p166 = pneg %p63
      $region14: #{transformer_forward.36} parent=11 // pred_check_branch
        %168 = sbr.rel (%p166) target = $region16
      $region15: #{transformer_forward.36} parent=11 // pred_region
        %s169 = smul.u32 2, %s22
        %p170 = scmp.lt.s32.totalorder %s169, 1
        %s171 = scalar_select %p170, %s169, 1
        %p172 = scmp.lt.s32.totalorder %s23, 0
        %s173 = scalar_select %p172, %s23, 0
        %s174 = sadd.s32 %s173, %s171
        %s175 = smul.addr %s174, 4
        %s176 = scalar_lea.vmem %s0, %s175
        %s177 = smul.u32 2, %s22
      $region16: #{transformer_forward.36} parent=11 // pred_fallthru
        _
    $region12: #{transformer_forward.36} parent=5 // pred_fallthru
      _
    %p178 = scmp.lt.s32.totalorder %s9, 4
    // Predicated region
    $region17: #{transformer_forward.36} parent=5 // pred_check
      %p179 = pneg %p178
    $region18: #{transformer_forward.36} parent=5 // pred_check_branch
      %181 = sbr.rel (%p179) target = $region20
    $region19: #{transformer_forward.36} parent=5 // pred_region
      // Predicated region
      $region21: #{transformer_forward.36} parent=19 // pred_check
        %p182 = pneg %p87
      $region22: #{transformer_forward.36} parent=19 // pred_check_branch
        %184 = sbr.rel (%p182) target = $region24
      $region23: #{transformer_forward.36} parent=19 // pred_region
        %s185 = smul.u32 4, %s19
        %p186 = scmp.lt.s32.totalorder %s16, 0
        %s187 = scalar_select %p186, %s16, 0
        %p188 = scmp.lt.s32.totalorder %s17, 3
        %s189 = scalar_select %p188, %s17, 3
        %p190 = scmp.lt.s32.totalorder %s185, 3
        %s191 = scalar_select %p190, %s185, 3
        %s192 = smul.addr %s189, 4
        %s193 = sadd.s32 %s191, %s192
        %s194 = smul.addr %s187, 16
        %s195 = sadd.s32 %s193, %s194
        %s196 = smul.addr %s195, 4
        %s197 = scalar_lea.vmem %s1, %s196
        %s198 = smul.u32 4, %s19
      $region24: #{transformer_forward.36} parent=19 // pred_fallthru
        _
      // Predicated region
      $region25: #{transformer_forward.36} parent=19 // pred_check
        %p199 = pneg %p115
      $region26: #{transformer_forward.36} parent=19 // pred_check_branch
        %201 = sbr.rel (%p199) target = $region28
      $region27: #{transformer_forward.36} parent=19 // pred_region
        %p202 = scmp.lt.s32.totalorder %s16, 0
        %s203 = scalar_select %p202, %s16, 0
        %p204 = scmp.lt.s32.totalorder %s17, 3
        %s205 = scalar_select %p204, %s17, 3
        %s206 = smul.addr %s203, 4
        %s207 = sadd.s32 %s205, %s206
        %s208 = scalar_lea.vmem %s2, %s207
      $region28: #{transformer_forward.36} parent=19 // pred_fallthru
        _
    $region20: #{transformer_forward.36} parent=5 // pred_fallthru
      _
    %p209 = scmp.le.s32.totalorder 1, %s9
    %p210 = scmp.lt.s32.totalorder %s9, 5
    %p211 = pnand %p209, %p210
    %p212 = pneg %p211
    // Predicated region
    $region29: #{transformer_forward.36} parent=5 // pred_check
      _
    $region30: #{transformer_forward.36} parent=5 // pred_check_branch
      %214 = sbr.rel (%p211) target = $region32
    $region31: #{transformer_forward.36} parent=5 // pred_region
      %s215 = ssub.s32 %s9, 1
      %s216 = smul.u32 2, %s22
      %p217 = scmp.lt.s32.totalorder %s216, 1
      %s218 = scalar_select %p217, %s216, 1
      %p219 = scmp.lt.s32.totalorder %s23, 0
      %s220 = scalar_select %p219, %s23, 0
      %s221 = sadd.s32 %s220, %s218
      %s222 = smul.addr %s221, 4
      %s223 = scalar_lea.vmem %s0, %s222
      %p224 = pneg %p63
      %p225 = pneg %p60
      %s226 = smul.u32 4, %s23
      %p227 = scmp.lt.s32.totalorder %s20, 0
      %s228 = scalar_select %p227, %s20, 0
      %p229 = scmp.lt.s32.totalorder %s21, 3
      %s230 = scalar_select %p229, %s21, 3
      %p231 = scmp.lt.s32.totalorder %s226, 3
      %s232 = scalar_select %p231, %s226, 3
      %s233 = smul.addr %s230, 4
      %s234 = sadd.s32 %s232, %s233
      %s235 = smul.addr %s228, 16
      %s236 = sadd.s32 %s234, %s235
      %s237 = smul.addr %s236, 4
      %s238 = scalar_lea.vmem %s1, %s237
      %p239 = pneg %p93
      %p240 = pneg %p90
      %p241 = scmp.lt.s32.totalorder %s20, 0
      %s242 = scalar_select %p241, %s20, 0
      %p243 = scmp.lt.s32.totalorder %s21, 3
      %s244 = scalar_select %p243, %s21, 3
      %s245 = smul.addr %s242, 4
      %s246 = sadd.s32 %s244, %s245
      %s247 = scalar_lea.vmem %s2, %s246
      %p248 = pneg %p121
      %p249 = pneg %p118
      %p250 = pneg %p151
      %p251 = pneg %p148
      %s252 = smul.u32 2, %s22
      %p253 = scmp.lt.s32.totalorder %s20, 0
      %s254 = scalar_select %p253, %s20, 0
      %p255 = scmp.lt.s32.totalorder %s21, 3
      %s256 = scalar_select %p255, %s21, 3
      %p257 = scmp.lt.s32.totalorder %s252, 1
      %s258 = scalar_select %p257, %s252, 1
      %s259 = smul.addr %s256, 2
      %s260 = sadd.s32 %s258, %s259
      %s261 = smul.addr %s254, 8
      %s262 = sadd.s32 %s260, %s261
      %s263 = smul.addr %s262, 4
      %s264 = scalar_lea.vmem %s3, %s263
      %s265 = smul.u32 2, %s22
      %p266 = scmp.lt.s32.totalorder %s265, 1
      %s267 = scalar_select %p266, %s265, 1
      %p268 = scmp.lt.s32.totalorder %s23, 0
      %s269 = scalar_select %p268, %s23, 0
      %s270 = sadd.s32 %s269, %s267
      %s271 = smul.addr %s270, 4
      %s272 = scalar_lea.vmem %s0, %s271
      %s273 = smul.u32 2, %s22
      %s274 = smul.u32 4, %s23
      %p275 = scmp.lt.s32.totalorder %s20, 0
      %s276 = scalar_select %p275, %s20, 0
      %p277 = scmp.lt.s32.totalorder %s21, 3
      %s278 = scalar_select %p277, %s21, 3
      %p279 = scmp.lt.s32.totalorder %s274, 3
      %s280 = scalar_select %p279, %s274, 3
      %s281 = smul.addr %s278, 4
      %s282 = sadd.s32 %s280, %s281
      %s283 = smul.addr %s276, 16
      %s284 = sadd.s32 %s282, %s283
      %s285 = smul.addr %s284, 4
      %s286 = scalar_lea.vmem %s1, %s285
      %s287 = smul.u32 4, %s23
      %p288 = scmp.lt.s32.totalorder %s20, 0
      %s289 = scalar_select %p288, %s20, 0
      %p290 = scmp.lt.s32.totalorder %s21, 3
      %s291 = scalar_select %p290, %s21, 3
      %s292 = smul.addr %s289, 4
      %s293 = sadd.s32 %s291, %s292
      %s294 = scalar_lea.vmem %s2, %s293
      %s295 = smul.u32 2, %s22
      %p296 = scmp.lt.s32.totalorder %s20, 0
      %s297 = scalar_select %p296, %s20, 0
      %p298 = scmp.lt.s32.totalorder %s21, 3
      %s299 = scalar_select %p298, %s21, 3
      %p300 = scmp.lt.s32.totalorder %s295, 1
      %s301 = scalar_select %p300, %s295, 1
      %s302 = smul.addr %s299, 2
      %s303 = sadd.s32 %s301, %s302
      %s304 = smul.addr %s297, 8
      %s305 = sadd.s32 %s303, %s304
      %s306 = smul.addr %s305, 4
      %s307 = scalar_lea.vmem %s3, %s306
      %s308 = smul.u32 2, %s22
      %p310 = scmp.eq.s32.totalorder %s23, 0
      // Predicated region
      $region33: #{transformer_forward.36} parent=31 // pred_check
        %p311 = pneg %p310
      $region34: #{transformer_forward.36} parent=31 // pred_check_branch
        %313 = sbr.rel (%p311) target = $region36
      $region35: #{transformer_forward.36} parent=31 // pred_region
        %vm314 = vcmask 64512
        %315 = vst.msk [vmem:[#allocation2] sm:$0xff] %vm314, 0.0
        %316 = vst.msk [vmem:[#allocation2 + $0x8] sm:$0xff] %vm314, 0.0
      $region36: #{transformer_forward.36} parent=31 // pred_fallthru
        _
      %v317 = vld [vmem:[#allocation2] sm:$0xff]
      %v318 = vld [vmem:[#allocation2 + $0x8] sm:$0xff]
      %v319 = vld [vmem:[%s272] sm:$0xf]
      %v320 = vld [vmem:[%s272 + $0x4] sm:$0xf]
      %v321 = vld [vmem:[%s286] sm:$0xf]
      %v322 = vld [vmem:[%s286 + $0x4] sm:$0xf]
      %v323 = vld [vmem:[%s286 + $0x8] sm:$0xf]
      %v324 = vld [vmem:[%s286 + $0xc] sm:$0xf]
      %v327 = vunpack.c.l.b16 %v319
      %v328 = vunpack.c.l.b16 %v320
      %v329 = vpack.c.b16 %v328, %v327
      %v334 = vunpack.c.l.b16 %v321
      %v335 = vunpack.c.l.b16 %v322
      %v336 = vunpack.c.l.b16 %v323
      %v337 = vunpack.c.l.b16 %v324
      %v338 = vpack.c.b16 %v335, %v334
      %v339 = vpack.c.b16 %v337, %v336
      %vm342 = vcmask 261120
      %v344 = vsel %vm342, %v329, 0
      %346 = vmatpush.bf16.msra.mxu0 0
      %347 = vmatpush.bf16.msra.mxu0 0
      %348 = vmatpush.bf16.msra.mxu0 0
      %349 = vmatpush.bf16.msra.mxu0 0
      %350 = vmatpush.bf16.msra.mxu0 0
      %351 = vmatpush.bf16.msra.mxu0 0
      %352 = vmatpush.bf16.msra.mxu0 %v339
      %353 = vmatpush.bf16.msra.mxu0 %v338
      %354 = vmatmul.bf16.gmra.mxu0 %v344
      %v355 = vpop.f32.mrf.mxu0
      %v356 = vadd.f32 0.0, %v355
      %v357 = vpop.f32.mrf.mxu0
      %v358 = vadd.f32 0.0, %v357
      %359 = vdwg.mxu0
      %v360 = vadd.f32 %v317, %v356
      %v361 = vadd.f32 %v318, %v358
      %vm362 = vcmask 64512
      %363 = vst.msk [vmem:[#allocation2] sm:$0xff] %vm362, %v360
      %364 = vst.msk [vmem:[#allocation2 + $0x8] sm:$0xff] %vm362, %v361
      // Predicated region
      $region37: #{transformer_forward.36} parent=31 // pred_check
        %p365 = pneg %p310
      $region38: #{transformer_forward.36} parent=31 // pred_check_branch
        %367 = sbr.rel (%p365) target = $region40
      $region39: #{transformer_forward.36} parent=31 // pred_region
        %v368 = vld [vmem:[#allocation2] sm:$0xff]
        %v369 = vld [vmem:[#allocation2 + $0x8] sm:$0xff]
        %v370 = vld [vmem:[%s294] sm:$0x1]
        %v372 = vperm.slane %v370, 0
        %v374 = vadd.f32 %v368, %v372
        %v375 = vadd.f32 %v369, %v372
        %v376 = vpack.c.bf16 %v374, %v374
        %v377 = vpack.c.bf16 %v375, %v375
        %vm378 = vcmask 60416
        %379 = vst.msk [vmem:[%s307] sm:$0xf] %vm378, %v376
        %380 = vst.msk [vmem:[%s307 + $0x4] sm:$0xf] %vm378, %v377
      $region40: #{transformer_forward.36} parent=31 // pred_fallthru
        _
      %s381 = smul.u32 2, %s22
      %p382 = scmp.lt.s32.totalorder %s20, 0
      %s383 = scalar_select %p382, %s20, 0
      %p384 = scmp.lt.s32.totalorder %s21, 3
      %s385 = scalar_select %p384, %s21, 3
      %p386 = scmp.lt.s32.totalorder %s381, 1
      %s387 = scalar_select %p386, %s381, 1
      %s388 = smul.addr %s385, 2
      %s389 = sadd.s32 %s387, %s388
      %s390 = smul.addr %s383, 8
      %s391 = sadd.s32 %s389, %s390
      %s392 = smul.addr %s391, 4
      %s393 = scalar_lea.vmem %s3, %s392
      // Predicated region
      $region41: #{transformer_forward.36} parent=31 // pred_check
        %p394 = pneg %p148
      $region42: #{transformer_forward.36} parent=31 // pred_check_branch
        %396 = sbr.rel (%p394) target = $region44
      $region43: #{transformer_forward.36} parent=31 // pred_region
        %s397 = smul.u32 2, %s22
      $region44: #{transformer_forward.36} parent=31 // pred_fallthru
        _
    $region32: #{transformer_forward.36} parent=5 // pred_fallthru
      _
    %p398 = scmp.le.s32.totalorder 2, %s9
    // Predicated region
    $region45: #{transformer_forward.36} parent=5 // pred_check
      %p399 = pneg %p398
    $region46: #{transformer_forward.36} parent=5 // pred_check_branch
      %401 = sbr.rel (%p399) target = $region48
    $region47: #{transformer_forward.36} parent=5 // pred_region
      %s402 = ssub.s32 %s9, 2
      // Predicated region
      $region49: #{transformer_forward.36} parent=47 // pred_check
        %p403 = pneg %p154
      $region50: #{transformer_forward.36} parent=47 // pred_check_branch
        %405 = sbr.rel (%p403) target = $region52
      $region51: #{transformer_forward.36} parent=47 // pred_region
        %s406 = smul.u32 2, %s26
        %p407 = scmp.lt.s32.totalorder %s24, 0
        %s408 = scalar_select %p407, %s24, 0
        %p409 = scmp.lt.s32.totalorder %s25, 3
        %s410 = scalar_select %p409, %s25, 3
        %p411 = scmp.lt.s32.totalorder %s406, 1
        %s412 = scalar_select %p411, %s406, 1
        %s413 = smul.addr %s410, 2
        %s414 = sadd.s32 %s412, %s413
        %s415 = smul.addr %s408, 8
        %s416 = sadd.s32 %s414, %s415
        %s417 = smul.addr %s416, 4
        %s418 = scalar_lea.vmem %s3, %s417
      $region52: #{transformer_forward.36} parent=47 // pred_fallthru
        _
    $region48: #{transformer_forward.36} parent=5 // pred_fallthru
      _
  $region6: #{transformer_forward.36} parent=0 // loop_footer
    %s13 = sadd.s32 1, %s9
  $region7: #{transformer_forward.36} parent=0 // loop_footer_branch
    %8 = sbr.rel target = $region3
  $region8: #{transformer_forward.36} parent=0 // loop_exit
    _

// kernel: transformer_forward.38
$region0: #{transformer_forward.38}
  #allocation0 [shape = 'u32[]', space=smem, size = 0x4, offset = 0x4, fixed_abs, tag = 'smem constant byte address 0x4 - core index']
  #allocation1 [shape = 'u32[72,128]{1,0:T(1,128)}', space=vmem, size = 0x9000, scoped, tag = 'internal scratch']
  %s0 = inlined_call_operand.vmem [shape: bf16[1,4,2,8,8], index: 0, kind: input, shape index: {}]
  %s1 = inlined_call_operand.vmem [shape: bf16[2,4,2,8,8], index: 1, kind: input, shape index: {}, may-alias: {1,2}]
  %s2 = inlined_call_operand.vmem [shape: bf16[2,4,2,8,8], index: 2, kind: input, shape index: {}, may-alias: {1,2}]
  %s3 = inlined_call_operand.vmem [shape: f32[8,8], index: 3, kind: input, shape index: {}]
  %s4 = inlined_call_operand.vmem [shape: f32[2,1,8], index: 4, kind: input, shape index: {}]
  %s5 = inlined_call_operand.vmem [shape: bf16[4,2,8,8], index: 5, kind: output, shape index: {}]
  %s6 = sld [smem:[#allocation0]]
  $region53: #{transformer_forward.38} parent=0
    _
  %s8 = ssub.s32 1, %s6
  %s9 = scalar_select 0, %s8, %s6
  loop: start=0, step=1, limit=10
  $region2: #{transformer_forward.38} parent=0 // loop_pre_header
    _
  $region3: #{transformer_forward.38} parent=0 // loop_header
    %s11 = sphi 0, %s15
    %p12 = scmp.ge.s32.totalorder %s11, 10
    %s18 = sphi 0, %s37
    %s19 = sphi 0, %s33
    %s20 = sphi 0, %s29
    %s21 = sphi 0, %s18
    %s22 = sphi 0, %s19
    %s23 = sphi 0, %s20
    %s24 = sphi 0, %s21
    %s25 = sphi 0, %s22
    %s26 = sphi 0, %s23
    %s44 = sphi 0, %s46
    %s47 = sphi 0, %s44
    %s48 = sphi 0, %s47
    %s64 = sphi 0, %s48
    %s72 = sphi 0, %s74
    %s75 = sphi 0, %s72
    %s76 = sphi 0, %s75
    %s92 = sphi 0, %s76
    %s100 = sphi 0, %s102
    %s103 = sphi 0, %s100
    %s104 = sphi 0, %s103
    %s120 = sphi 0, %s104
    %s126 = sphi 0, %s128
    %s129 = sphi 0, %s126
    %s130 = sphi 0, %s129
    %s146 = sphi 0, %s130
    %s152 = sphi 0, %s154
    %s155 = sphi 0, %s152
    %s156 = sphi 0, %s155
    %s172 = sphi 0, %s156
    %s182 = sphi 0, %s184
    %s185 = sphi 0, %s182
    %s186 = sphi 0, %s185
    %s202 = sphi 0, %s186
  $region4: #{transformer_forward.38} parent=0 // loop_header_branch
    %14 = sbr.rel (%p12) target = $region8
  $region5: #{transformer_forward.38} parent=0 // loop_body
    %s16 = ssub.s32 %s11, 1
    %s17 = ssub.s32 %s11, 2
    %s27 = sadd.s32 1, %s20
    %p28 = scmp.ge.s32.totalorder %s27, 1
    %s29 = scalar_select %p28, 0, %s27
    %s30 = sadd.s32 1, %s19
    %s31 = scalar_select %p28, %s30, %s19
    %p32 = scmp.ge.s32.totalorder %s31, 4
    %s33 = scalar_select %p32, 0, %s31
    %s34 = sadd.s32 1, %s18
    %s35 = scalar_select %p32, %s34, %s18
    %p36 = scmp.ge.s32.totalorder %s35, 2
    %s37 = scalar_select %p36, 0, %s35
    %s38 = ssub.s32 %s19, %s33
    %s39 = ssub.s32 %s18, %s37
    %s40 = sor.u32 %s38, %s39
    %s41 = ssub.s32 %s20, %s29
    %s42 = sor.u32 %s40, %s41
    %p43 = scmp.eq.s32.totalorder %s42, 0
    %s45 = sadd.s32 %s44, 1
    %s46 = scalar_select %p43, %s44, %s45
    %p49 = pneg %p43
    %p50 = scmp.eq.s32.totalorder %s11, 7
    %p51 = por %p49, %p50
    %p52 = scmp.ne.s32.totalorder %s44, %s47
    %p53 = scmp.eq.s32.totalorder %s11, 0
    %p54 = por %p52, %p53
    %p55 = scmp.ne.s32.totalorder %s44, %s47
    %p56 = scmp.eq.s32.totalorder %s16, 7
    %p57 = por %p55, %p56
    %p58 = scmp.ne.s32.totalorder %s47, %s48
    %p59 = scmp.eq.s32.totalorder %s16, 0
    %p60 = por %p58, %p59
    %p61 = scmp.ne.s32.totalorder %s47, %s48
    %p62 = scmp.eq.s32.totalorder %s17, 7
    %p63 = por %p61, %p62
    %p65 = scmp.ne.s32.totalorder %s48, %s64
    %p66 = scmp.eq.s32.totalorder %s17, 0
    %p67 = por %p65, %p66
    %s68 = ssub.s32 %s19, %s33
    %s69 = ssub.s32 %s18, %s37
    %s70 = sor.u32 %s68, %s69
    %p71 = scmp.eq.s32.totalorder %s70, 0
    %s73 = sadd.s32 %s72, 1
    %s74 = scalar_select %p71, %s72, %s73
    %p77 = pneg %p71
    %p78 = scmp.eq.s32.totalorder %s11, 7
    %p79 = por %p77, %p78
    %p80 = scmp.ne.s32.totalorder %s72, %s75
    %p81 = scmp.eq.s32.totalorder %s11, 0
    %p82 = por %p80, %p81
    %p83 = scmp.ne.s32.totalorder %s72, %s75
    %p84 = scmp.eq.s32.totalorder %s16, 7
    %p85 = por %p83, %p84
    %p86 = scmp.ne.s32.totalorder %s75, %s76
    %p87 = scmp.eq.s32.totalorder %s16, 0
    %p88 = por %p86, %p87
    %p89 = scmp.ne.s32.totalorder %s75, %s76
    %p90 = scmp.eq.s32.totalorder %s17, 7
    %p91 = por %p89, %p90
    %p93 = scmp.ne.s32.totalorder %s76, %s92
    %p94 = scmp.eq.s32.totalorder %s17, 0
    %p95 = por %p93, %p94
    %s96 = ssub.s32 %s19, %s33
    %s97 = ssub.s32 %s18, %s37
    %s98 = sor.u32 %s96, %s97
    %p99 = scmp.eq.s32.totalorder %s98, 0
    %s101 = sadd.s32 %s100, 1
    %s102 = scalar_select %p99, %s100, %s101
    %p105 = pneg %p99
    %p106 = scmp.eq.s32.totalorder %s11, 7
    %p107 = por %p105, %p106
    %p108 = scmp.ne.s32.totalorder %s100, %s103
    %p109 = scmp.eq.s32.totalorder %s11, 0
    %p110 = por %p108, %p109
    %p111 = scmp.ne.s32.totalorder %s100, %s103
    %p112 = scmp.eq.s32.totalorder %s16, 7
    %p113 = por %p111, %p112
    %p114 = scmp.ne.s32.totalorder %s103, %s104
    %p115 = scmp.eq.s32.totalorder %s16, 0
    %p116 = por %p114, %p115
    %p117 = scmp.ne.s32.totalorder %s103, %s104
    %p118 = scmp.eq.s32.totalorder %s17, 7
    %p119 = por %p117, %p118
    %p121 = scmp.ne.s32.totalorder %s104, %s120
    %p122 = scmp.eq.s32.totalorder %s17, 0
    %p123 = por %p121, %p122
    %s124 = ssub.s32 %s20, %s29
    %p125 = scmp.eq.s32.totalorder %s124, 0
    %s127 = sadd.s32 %s126, 1
    %s128 = scalar_select %p125, %s126, %s127
    %p131 = pneg %p125
    %p132 = scmp.eq.s32.totalorder %s11, 7
    %p133 = por %p131, %p132
    %p134 = scmp.ne.s32.totalorder %s126, %s129
    %p135 = scmp.eq.s32.totalorder %s11, 0
    %p136 = por %p134, %p135
    %p137 = scmp.ne.s32.totalorder %s126, %s129
    %p138 = scmp.eq.s32.totalorder %s16, 7
    %p139 = por %p137, %p138
    %p140 = scmp.ne.s32.totalorder %s129, %s130
    %p141 = scmp.eq.s32.totalorder %s16, 0
    %p142 = por %p140, %p141
    %p143 = scmp.ne.s32.totalorder %s129, %s130
    %p144 = scmp.eq.s32.totalorder %s17, 7
    %p145 = por %p143, %p144
    %p147 = scmp.ne.s32.totalorder %s130, %s146
    %p148 = scmp.eq.s32.totalorder %s17, 0
    %p149 = por %p147, %p148
    %s150 = ssub.s32 %s18, %s37
    %p151 = scmp.eq.s32.totalorder %s150, 0
    %s153 = sadd.s32 %s152, 1
    %s154 = scalar_select %p151, %s152, %s153
    %p157 = pneg %p151
    %p158 = scmp.eq.s32.totalorder %s11, 7
    %p159 = por %p157, %p158
    %p160 = scmp.ne.s32.totalorder %s152, %s155
    %p161 = scmp.eq.s32.totalorder %s11, 0
    %p162 = por %p160, %p161
    %p163 = scmp.ne.s32.totalorder %s152, %s155
    %p164 = scmp.eq.s32.totalorder %s16, 7
    %p165 = por %p163, %p164
    %p166 = scmp.ne.s32.totalorder %s155, %s156
    %p167 = scmp.eq.s32.totalorder %s16, 0
    %p168 = por %p166, %p167
    %p169 = scmp.ne.s32.totalorder %s155, %s156
    %p170 = scmp.eq.s32.totalorder %s17, 7
    %p171 = por %p169, %p170
    %p173 = scmp.ne.s32.totalorder %s156, %s172
    %p174 = scmp.eq.s32.totalorder %s17, 0
    %p175 = por %p173, %p174
    %s176 = ssub.s32 %s19, %s33
    %s177 = ssub.s32 %s18, %s37
    %s178 = sor.u32 %s176, %s177
    %s179 = ssub.s32 %s20, %s29
    %s180 = sor.u32 %s178, %s179
    %p181 = scmp.eq.s32.totalorder %s180, 0
    %s183 = sadd.s32 %s182, 1
    %s184 = scalar_select %p181, %s182, %s183
    %p187 = pneg %p181
    %p188 = scmp.eq.s32.totalorder %s11, 7
    %p189 = por %p187, %p188
    %p190 = scmp.ne.s32.totalorder %s182, %s185
    %p191 = scmp.eq.s32.totalorder %s11, 0
    %p192 = por %p190, %p191
    %p193 = scmp.ne.s32.totalorder %s182, %s185
    %p194 = scmp.eq.s32.totalorder %s16, 7
    %p195 = por %p193, %p194
    %p196 = scmp.ne.s32.totalorder %s185, %s186
    %p197 = scmp.eq.s32.totalorder %s16, 0
    %p198 = por %p196, %p197
    %p199 = scmp.ne.s32.totalorder %s185, %s186
    %p200 = scmp.eq.s32.totalorder %s17, 7
    %p201 = por %p199, %p200
    %p203 = scmp.ne.s32.totalorder %s186, %s202
    %p204 = scmp.eq.s32.totalorder %s17, 0
    %p205 = por %p203, %p204
    %p206 = scmp.le.s32.totalorder 1, %s11
    %p207 = scmp.lt.s32.totalorder %s11, 9
    %p208 = pnand %p206, %p207
    %p209 = pneg %p208
    // Predicated region
    $region9: #{transformer_forward.38} parent=5 // pred_check
      _
    $region10: #{transformer_forward.38} parent=5 // pred_check_branch
      %211 = sbr.rel (%p208) target = $region12
    $region11: #{transformer_forward.38} parent=5 // pred_region
      %s212 = ssub.s32 %s11, 1
      // Predicated region
      $region13: #{transformer_forward.38} parent=11 // pred_check
        %p213 = pneg %p142
      $region14: #{transformer_forward.38} parent=11 // pred_check_branch
        %215 = sbr.rel (%p213) target = $region16
      $region15: #{transformer_forward.38} parent=11 // pred_region
        %p216 = scmp.lt.s32.totalorder %s23, 0
        %s217 = scalar_select %p216, %s23, 0
        %s218 = smul.addr %s217, 8
        %s219 = scalar_lea.vmem %s3, %s218
      $region16: #{transformer_forward.38} parent=11 // pred_fallthru
        _
    $region12: #{transformer_forward.38} parent=5 // pred_fallthru
      _
    %p220 = scmp.lt.s32.totalorder %s11, 8
    // Predicated region
    $region17: #{transformer_forward.38} parent=5 // pred_check
      %p221 = pneg %p220
    $region18: #{transformer_forward.38} parent=5 // pred_check_branch
      %223 = sbr.rel (%p221) target = $region20
    $region19: #{transformer_forward.38} parent=5 // pred_region
      // Predicated region
      $region21: #{transformer_forward.38} parent=19 // pred_check
        %p224 = pneg %p54
      $region22: #{transformer_forward.38} parent=19 // pred_check_branch
        %226 = sbr.rel (%p224) target = $region24
      $region23: #{transformer_forward.38} parent=19 // pred_region
        %p227 = scmp.lt.s32.totalorder %s19, 3
        %s228 = scalar_select %p227, %s19, 3
        %p229 = scmp.lt.s32.totalorder %s18, 1
        %s230 = scalar_select %p229, %s18, 1
        %p231 = scmp.lt.s32.totalorder %s20, 0
        %s232 = scalar_select %p231, %s20, 0
        %s233 = sadd.s32 %s232, %s230
        %s234 = smul.addr %s228, 2
        %s235 = sadd.s32 %s233, %s234
        %s236 = smul.addr %s235, 4
        %s237 = scalar_lea.vmem %s0, %s236
      $region24: #{transformer_forward.38} parent=19 // pred_fallthru
        _
      // Predicated region
      $region25: #{transformer_forward.38} parent=19 // pred_check
        %p238 = pneg %p82
      $region26: #{transformer_forward.38} parent=19 // pred_check_branch
        %240 = sbr.rel (%p238) target = $region28
      $region27: #{transformer_forward.38} parent=19 // pred_region
        %p241 = scmp.lt.s32.totalorder %s19, 3
        %s242 = scalar_select %p241, %s19, 3
        %p243 = scmp.lt.s32.totalorder %s18, 1
        %s244 = scalar_select %p243, %s18, 1
        %s245 = smul.addr %s242, 2
        %s246 = sadd.s32 %s244, %s245
        %s247 = smul.addr %s246, 4
        %s248 = scalar_lea.vmem %s1, %s247
      $region28: #{transformer_forward.38} parent=19 // pred_fallthru
        _
      // Predicated region
      $region29: #{transformer_forward.38} parent=19 // pred_check
        %p249 = pneg %p110
      $region30: #{transformer_forward.38} parent=19 // pred_check_branch
        %251 = sbr.rel (%p249) target = $region32
      $region31: #{transformer_forward.38} parent=19 // pred_region
        %p252 = scmp.lt.s32.totalorder %s19, 3
        %s253 = scalar_select %p252, %s19, 3
        %p254 = scmp.lt.s32.totalorder %s18, 1
        %s255 = scalar_select %p254, %s18, 1
        %s256 = smul.addr %s253, 2
        %s257 = sadd.s32 %s255, %s256
        %s258 = sadd.s32 %s257, 8
        %s259 = smul.addr %s258, 4
        %s260 = scalar_lea.vmem %s2, %s259
      $region32: #{transformer_forward.38} parent=19 // pred_fallthru
        _
      // Predicated region
      $region33: #{transformer_forward.38} parent=19 // pred_check
        %p261 = pneg %p162
      $region34: #{transformer_forward.38} parent=19 // pred_check_branch
        %263 = sbr.rel (%p261) target = $region36
      $region35: #{transformer_forward.38} parent=19 // pred_region
        %p264 = scmp.lt.s32.totalorder %s18, 1
        %s265 = scalar_select %p264, %s18, 1
        %s266 = scalar_lea.vmem %s4, %s265
      $region36: #{transformer_forward.38} parent=19 // pred_fallthru
        _
    $region20: #{transformer_forward.38} parent=5 // pred_fallthru
      _
    %p267 = scmp.le.s32.totalorder 1, %s11
    %p268 = scmp.lt.s32.totalorder %s11, 9
    %p269 = pnand %p267, %p268
    %p270 = pneg %p269
    // Predicated region
    $region37: #{transformer_forward.38} parent=5 // pred_check
      _
    $region38: #{transformer_forward.38} parent=5 // pred_check_branch
      %272 = sbr.rel (%p269) target = $region40
    $region39: #{transformer_forward.38} parent=5 // pred_region
      %s273 = ssub.s32 %s11, 1
      %p274 = scmp.lt.s32.totalorder %s22, 3
      %s275 = scalar_select %p274, %s22, 3
      %p276 = scmp.lt.s32.totalorder %s21, 1
      %s277 = scalar_select %p276, %s21, 1
      %p278 = scmp.lt.s32.totalorder %s23, 0
      %s279 = scalar_select %p278, %s23, 0
      %s280 = sadd.s32 %s279, %s277
      %s281 = smul.addr %s275, 2
      %s282 = sadd.s32 %s280, %s281
      %s283 = smul.addr %s282, 4
      %s284 = scalar_lea.vmem %s0, %s283
      %p285 = pneg %p60
      %p286 = pneg %p57
      %p287 = scmp.lt.s32.totalorder %s22, 3
      %s288 = scalar_select %p287, %s22, 3
      %p289 = scmp.lt.s32.totalorder %s21, 1
      %s290 = scalar_select %p289, %s21, 1
      %s291 = smul.addr %s288, 2
      %s292 = sadd.s32 %s290, %s291
      %s293 = smul.addr %s292, 4
      %s294 = scalar_lea.vmem %s1, %s293
      %p295 = pneg %p88
      %p296 = pneg %p85
      %p297 = scmp.lt.s32.totalorder %s22, 3
      %s298 = scalar_select %p297, %s22, 3
      %p299 = scmp.lt.s32.totalorder %s21, 1
      %s300 = scalar_select %p299, %s21, 1
      %s301 = smul.addr %s298, 2
      %s302 = sadd.s32 %s300, %s301
      %s303 = sadd.s32 %s302, 8
      %s304 = smul.addr %s303, 4
      %s305 = scalar_lea.vmem %s2, %s304
      %p306 = pneg %p116
      %p307 = pneg %p113
      %p308 = scmp.lt.s32.totalorder %s23, 0
      %s309 = scalar_select %p308, %s23, 0
      %s310 = smul.addr %s309, 8
      %s311 = scalar_lea.vmem %s3, %s310
      %p312 = pneg %p142
      %p313 = pneg %p139
      %p314 = scmp.lt.s32.totalorder %s21, 1
      %s315 = scalar_select %p314, %s21, 1
      %s316 = scalar_lea.vmem %s4, %s315
      %p317 = pneg %p168
      %p318 = pneg %p165
      %p319 = pneg %p198
      %p320 = pneg %p195
      %p321 = scmp.lt.s32.totalorder %s22, 3
      %s322 = scalar_select %p321, %s22, 3
      %p323 = scmp.lt.s32.totalorder %s21, 1
      %s324 = scalar_select %p323, %s21, 1
      %p325 = scmp.lt.s32.totalorder %s23, 0
      %s326 = scalar_select %p325, %s23, 0
      %s327 = sadd.s32 %s326, %s324
      %s328 = smul.addr %s322, 2
      %s329 = sadd.s32 %s327, %s328
      %s330 = smul.addr %s329, 4
      %s331 = scalar_lea.vmem %s5, %s330
      %p332 = scmp.lt.s32.totalorder %s22, 3
      %s333 = scalar_select %p332, %s22, 3
      %p334 = scmp.lt.s32.totalorder %s21, 1
      %s335 = scalar_select %p334, %s21, 1
      %p336 = scmp.lt.s32.totalorder %s23, 0
      %s337 = scalar_select %p336, %s23, 0
      %s338 = sadd.s32 %s337, %s335
      %s339 = smul.addr %s333, 2
      %s340 = sadd.s32 %s338, %s339
      %s341 = smul.addr %s340, 4
      %s342 = scalar_lea.vmem %s0, %s341
      %p343 = scmp.lt.s32.totalorder %s22, 3
      %s344 = scalar_select %p343, %s22, 3
      %p345 = scmp.lt.s32.totalorder %s21, 1
      %s346 = scalar_select %p345, %s21, 1
      %s347 = smul.addr %s344, 2
      %s348 = sadd.s32 %s346, %s347
      %s349 = smul.addr %s348, 4
      %s350 = scalar_lea.vmem %s1, %s349
      %p351 = scmp.lt.s32.totalorder %s22, 3
      %s352 = scalar_select %p351, %s22, 3
      %p353 = scmp.lt.s32.totalorder %s21, 1
      %s354 = scalar_select %p353, %s21, 1
      %s355 = smul.addr %s352, 2
      %s356 = sadd.s32 %s354, %s355
      %s357 = sadd.s32 %s356, 8
      %s358 = smul.addr %s357, 4
      %s359 = scalar_lea.vmem %s2, %s358
      %p360 = scmp.lt.s32.totalorder %s23, 0
      %s361 = scalar_select %p360, %s23, 0
      %s362 = smul.addr %s361, 8
      %s363 = scalar_lea.vmem %s3, %s362
      %p364 = scmp.lt.s32.totalorder %s21, 1
      %s365 = scalar_select %p364, %s21, 1
      %s366 = scalar_lea.vmem %s4, %s365
      %p367 = scmp.lt.s32.totalorder %s22, 3
      %s368 = scalar_select %p367, %s22, 3
      %p369 = scmp.lt.s32.totalorder %s21, 1
      %s370 = scalar_select %p369, %s21, 1
      %p371 = scmp.lt.s32.totalorder %s23, 0
      %s372 = scalar_select %p371, %s23, 0
      %s373 = sadd.s32 %s372, %s370
      %s374 = smul.addr %s368, 2
      %s375 = sadd.s32 %s373, %s374
      %s376 = smul.addr %s375, 4
      %s377 = scalar_lea.vmem %s5, %s376
      %v379 = vld [vmem:[%s342] sm:$0xf]
      %v380 = vld [vmem:[%s350] sm:$0xf]
      %v381 = vld [vmem:[%s359] sm:$0xf]
      %v382 = vld [vmem:[%s363] sm:$0xff]
      %v383 = vld [vmem:[%s366] sm:$0x1]
      %v385 = vperm.slane %v383, 0
      %v387 = vadd.f32 %v382, %v385
      %vm388 = vcmask 64512
      %v390 = vsel %vm388, %v379, 0
      %v393 = vsel %vm388, %v380, 0
      %395 = vmatpush.bf16.xpose.msra.mxu0 0
      %396 = vmatpush.bf16.xpose.msra.mxu0 0
      %397 = vmatpush.bf16.xpose.msra.mxu0 0
      %398 = vmatpush.bf16.xpose.msra.mxu0 0
      %399 = vmatpush.bf16.xpose.msra.mxu0 0
      %400 = vmatpush.bf16.xpose.msra.mxu0 0
      %401 = vmatpush.bf16.xpose.msra.mxu0 0
      %402 = vmatpush.bf16.xpose.msra.mxu0 %v393
      %403 = vmatmul.bf16.gmra.mxu0 %v390
      %v404 = vpop.f32.mrf.mxu0
      %v405 = vadd.f32 0.0, %v404
      %v406 = vpop.f32.mrf.mxu0
      %407 = vdwg.mxu0
      %v408 = vmul.f32 %v405, 0.35355338
      %v409 = vadd.f32 %v408, %v387
      %v410 = vsel %vm388, %v409, -inf
      %411 = vmax.xlane.f32.xlu0 %v410
      %v412 = vpop.xlane.xlu0 %411
      %v413 = vsub.f32 %v409, %v412
      %v414 = vmul.f32 %v413, 1.442695
      %v415 = vpow.pop %v414
      %v416 = vsel %vm388, %v415, 0.0
      %417 = vadd.xlane.f32.xlu0 %v416
      %v418 = vpop.xlane.xlu0 %417
      %v419 = vrcp.pop %v418
      %v420 = vmul.f32 %v415, %v419
      %v421 = vpack.c.bf16 %v420, %v420
      %v423 = vsel %vm388, %v421, 0
      %vm425 = vcmask 1043456
      %v427 = vsel %vm425, %v381, 0
      %429 = vmatpush.bf16.msra.mxu0 0
      %430 = vmatpush.bf16.msra.mxu0 0
      %431 = vmatpush.bf16.msra.mxu0 0
      %432 = vmatpush.bf16.msra.mxu0 0
      %433 = vmatpush.bf16.msra.mxu0 0
      %434 = vmatpush.bf16.msra.mxu0 0
      %435 = vmatpush.bf16.msra.mxu0 0
      %436 = vmatpush.bf16.msra.mxu0 %v427
      %437 = vmatmul.bf16.gmra.mxu0 %v423
      %v438 = vpop.f32.mrf.mxu0
      %v439 = vadd.f32 0.0, %v438
      %v440 = vpop.f32.mrf.mxu0
      %441 = vdwg.mxu0
      %v442 = vpack.c.bf16 %v439, %v439
      %vm443 = vcmask 60416
      %444 = vst.msk [vmem:[%s377] sm:$0xf] %vm443, %v442
      %p445 = scmp.lt.s32.totalorder %s22, 3
      %s446 = scalar_select %p445, %s22, 3
      %p447 = scmp.lt.s32.totalorder %s21, 1
      %s448 = scalar_select %p447, %s21, 1
      %p449 = scmp.lt.s32.totalorder %s23, 0
      %s450 = scalar_select %p449, %s23, 0
      %s451 = sadd.s32 %s450, %s448
      %s452 = smul.addr %s446, 2
      %s453 = sadd.s32 %s451, %s452
      %s454 = smul.addr %s453, 4
      %s455 = scalar_lea.vmem %s5, %s454
      // Predicated region
      $region41: #{transformer_forward.38} parent=39 // pred_check
        %p456 = pneg %p195
      $region42: #{transformer_forward.38} parent=39 // pred_check_branch
        %458 = sbr.rel (%p456) target = $region44
      $region43: #{transformer_forward.38} parent=39 // pred_region
        _
      $region44: #{transformer_forward.38} parent=39 // pred_fallthru
        _
    $region40: #{transformer_forward.38} parent=5 // pred_fallthru
      _
    %p459 = scmp.le.s32.totalorder 2, %s11
    // Predicated region
    $region45: #{transformer_forward.38} parent=5 // pred_check
      %p460 = pneg %p459
    $region46: #{transformer_forward.38} parent=5 // pred_check_branch
      %462 = sbr.rel (%p460) target = $region48
    $region47: #{transformer_forward.38} parent=5 // pred_region
      %s463 = ssub.s32 %s11, 2
      // Predicated region
      $region49: #{transformer_forward.38} parent=47 // pred_check
        %p464 = pneg %p201
      $region50: #{transformer_forward.38} parent=47 // pred_check_branch
        %466 = sbr.rel (%p464) target = $region52
      $region51: #{transformer_forward.38} parent=47 // pred_region
        %p467 = scmp.lt.s32.totalorder %s25, 3
        %s468 = scalar_select %p467, %s25, 3
        %p469 = scmp.lt.s32.totalorder %s24, 1
        %s470 = scalar_select %p469, %s24, 1
        %p471 = scmp.lt.s32.totalorder %s26, 0
        %s472 = scalar_select %p471, %s26, 0
        %s473 = sadd.s32 %s472, %s470
        %s474 = smul.addr %s468, 2
        %s475 = sadd.s32 %s473, %s474
        %s476 = smul.addr %s475, 4
        %s477 = scalar_lea.vmem %s5, %s476
      $region52: #{transformer_forward.38} parent=47 // pred_fallthru
        _
    $region48: #{transformer_forward.38} parent=5 // pred_fallthru
      _
  $region6: #{transformer_forward.38} parent=0 // loop_footer
    %s15 = sadd.s32 1, %s11
  $region7: #{transformer_forward.38} parent=0 // loop_footer_branch
    %10 = sbr.rel target = $region3
  $region8: #{transformer_forward.38} parent=0 // loop_exit
    _

// kernel: transformer_forward.37
$region0: #{transformer_forward.37}
  #allocation0 [shape = 'u32[]', space=smem, size = 0x4, offset = 0x4, fixed_abs, tag = 'smem constant byte address 0x4 - core index']
  #allocation1 [shape = 'u32[72,128]{1,0:T(1,128)}', space=vmem, size = 0x9000, scoped, tag = 'internal scratch']
  #allocation2 [shape = 'f32[16,8]{1,0:T(8,128)}', space=vmem, size = 0x2000, scoped, tag = 'scratch operand']
  %s0 = inlined_call_operand.vmem [shape: bf16[16,32], index: 0, kind: input, shape index: {}]
  %s1 = inlined_call_operand.vmem [shape: bf16[2,4,32,8], index: 1, kind: input, shape index: {}]
  %s2 = inlined_call_operand.vmem [shape: f32[2,4,1,8], index: 2, kind: input, shape index: {}]
  %s3 = inlined_call_operand.vmem [shape: bf16[2,4,16,8], index: 3, kind: output, shape index: {}]
  %s4 = sld [smem:[#allocation0]]
  $region53: #{transformer_forward.37} parent=0
    _
  %s6 = ssub.s32 1, %s4
  %s7 = scalar_select 0, %s6, %s4
  loop: start=0, step=1, limit=10
  $region2: #{transformer_forward.37} parent=0 // loop_pre_header
    _
  $region3: #{transformer_forward.37} parent=0 // loop_header
    %s9 = sphi 0, %s13
    %p10 = scmp.ge.s32.totalorder %s9, 10
    %s16 = sphi 0, %s42
    %s17 = sphi 0, %s38
    %s18 = sphi 0, %s34
    %s19 = sphi 0, %s30
    %s20 = sphi 0, %s16
    %s21 = sphi 0, %s17
    %s22 = sphi 0, %s18
    %s23 = sphi 0, %s19
    %s24 = sphi 0, %s20
    %s25 = sphi 0, %s21
    %s26 = sphi 0, %s22
    %s27 = sphi 0, %s23
    %s47 = sphi 0, %s49
    %s50 = sphi 0, %s47
    %s51 = sphi 0, %s50
    %s67 = sphi 0, %s51
    %s77 = sphi 0, %s79
    %s80 = sphi 0, %s77
    %s81 = sphi 0, %s80
    %s97 = sphi 0, %s81
    %s105 = sphi 0, %s107
    %s108 = sphi 0, %s105
    %s109 = sphi 0, %s108
    %s125 = sphi 0, %s109
    %s135 = sphi 0, %s137
    %s138 = sphi 0, %s135
    %s139 = sphi 0, %s138
    %s155 = sphi 0, %s139
  $region4: #{transformer_forward.37} parent=0 // loop_header_branch
    %12 = sbr.rel (%p10) target = $region8
  $region5: #{transformer_forward.37} parent=0 // loop_body
    %s14 = ssub.s32 %s9, 1
    %s15 = ssub.s32 %s9, 2
    %s28 = sadd.s32 1, %s19
    %p29 = scmp.ge.s32.totalorder %s28, 1
    %s30 = scalar_select %p29, 0, %s28
    %s31 = sadd.s32 1, %s18
    %s32 = scalar_select %p29, %s31, %s18
    %p33 = scmp.ge.s32.totalorder %s32, 1
    %s34 = scalar_select %p33, 0, %s32
    %s35 = sadd.s32 1, %s17
    %s36 = scalar_select %p33, %s35, %s17
    %p37 = scmp.ge.s32.totalorder %s36, 4
    %s38 = scalar_select %p37, 0, %s36
    %s39 = sadd.s32 1, %s16
    %s40 = scalar_select %p37, %s39, %s16
    %p41 = scmp.ge.s32.totalorder %s40, 2
    %s42 = scalar_select %p41, 0, %s40
    %s43 = ssub.s32 %s18, %s34
    %s44 = ssub.s32 %s19, %s30
    %s45 = sor.u32 %s43, %s44
    %p46 = scmp.eq.s32.totalorder %s45, 0
    %s48 = sadd.s32 %s47, 1
    %s49 = scalar_select %p46, %s47, %s48
    %p52 = pneg %p46
    %p53 = scmp.eq.s32.totalorder %s9, 7
    %p54 = por %p52, %p53
    %p55 = scmp.ne.s32.totalorder %s47, %s50
    %p56 = scmp.eq.s32.totalorder %s9, 0
    %p57 = por %p55, %p56
    %p58 = scmp.ne.s32.totalorder %s47, %s50
    %p59 = scmp.eq.s32.totalorder %s14, 7
    %p60 = por %p58, %p59
    %p61 = scmp.ne.s32.totalorder %s50, %s51
    %p62 = scmp.eq.s32.totalorder %s14, 0
    %p63 = por %p61, %p62
    %p64 = scmp.ne.s32.totalorder %s50, %s51
    %p65 = scmp.eq.s32.totalorder %s15, 7
    %p66 = por %p64, %p65
    %p68 = scmp.ne.s32.totalorder %s51, %s67
    %p69 = scmp.eq.s32.totalorder %s15, 0
    %p70 = por %p68, %p69
    %s71 = ssub.s32 %s16, %s42
    %s72 = ssub.s32 %s17, %s38
    %s73 = sor.u32 %s71, %s72
    %s74 = ssub.s32 %s19, %s30
    %s75 = sor.u32 %s73, %s74
    %p76 = scmp.eq.s32.totalorder %s75, 0
    %s78 = sadd.s32 %s77, 1
    %s79 = scalar_select %p76, %s77, %s78
    %p82 = pneg %p76
    %p83 = scmp.eq.s32.totalorder %s9, 7
    %p84 = por %p82, %p83
    %p85 = scmp.ne.s32.totalorder %s77, %s80
    %p86 = scmp.eq.s32.totalorder %s9, 0
    %p87 = por %p85, %p86
    %p88 = scmp.ne.s32.totalorder %s77, %s80
    %p89 = scmp.eq.s32.totalorder %s14, 7
    %p90 = por %p88, %p89
    %p91 = scmp.ne.s32.totalorder %s80, %s81
    %p92 = scmp.eq.s32.totalorder %s14, 0
    %p93 = por %p91, %p92
    %p94 = scmp.ne.s32.totalorder %s80, %s81
    %p95 = scmp.eq.s32.totalorder %s15, 7
    %p96 = por %p94, %p95
    %p98 = scmp.ne.s32.totalorder %s81, %s97
    %p99 = scmp.eq.s32.totalorder %s15, 0
    %p100 = por %p98, %p99
    %s101 = ssub.s32 %s16, %s42
    %s102 = ssub.s32 %s17, %s38
    %s103 = sor.u32 %s101, %s102
    %p104 = scmp.eq.s32.totalorder %s103, 0
    %s106 = sadd.s32 %s105, 1
    %s107 = scalar_select %p104, %s105, %s106
    %p110 = pneg %p104
    %p111 = scmp.eq.s32.totalorder %s9, 7
    %p112 = por %p110, %p111
    %p113 = scmp.ne.s32.totalorder %s105, %s108
    %p114 = scmp.eq.s32.totalorder %s9, 0
    %p115 = por %p113, %p114
    %p116 = scmp.ne.s32.totalorder %s105, %s108
    %p117 = scmp.eq.s32.totalorder %s14, 7
    %p118 = por %p116, %p117
    %p119 = scmp.ne.s32.totalorder %s108, %s109
    %p120 = scmp.eq.s32.totalorder %s14, 0
    %p121 = por %p119, %p120
    %p122 = scmp.ne.s32.totalorder %s108, %s109
    %p123 = scmp.eq.s32.totalorder %s15, 7
    %p124 = por %p122, %p123
    %p126 = scmp.ne.s32.totalorder %s109, %s125
    %p127 = scmp.eq.s32.totalorder %s15, 0
    %p128 = por %p126, %p127
    %s129 = ssub.s32 %s16, %s42
    %s130 = ssub.s32 %s17, %s38
    %s131 = sor.u32 %s129, %s130
    %s132 = ssub.s32 %s18, %s34
    %s133 = sor.u32 %s131, %s132
    %p134 = scmp.eq.s32.totalorder %s133, 0
    %s136 = sadd.s32 %s135, 1
    %s137 = scalar_select %p134, %s135, %s136
    %p140 = pneg %p134
    %p141 = scmp.eq.s32.totalorder %s9, 7
    %p142 = por %p140, %p141
    %p143 = scmp.ne.s32.totalorder %s135, %s138
    %p144 = scmp.eq.s32.totalorder %s9, 0
    %p145 = por %p143, %p144
    %p146 = scmp.ne.s32.totalorder %s135, %s138
    %p147 = scmp.eq.s32.totalorder %s14, 7
    %p148 = por %p146, %p147
    %p149 = scmp.ne.s32.totalorder %s138, %s139
    %p150 = scmp.eq.s32.totalorder %s14, 0
    %p151 = por %p149, %p150
    %p152 = scmp.ne.s32.totalorder %s138, %s139
    %p153 = scmp.eq.s32.totalorder %s15, 7
    %p154 = por %p152, %p153
    %p156 = scmp.ne.s32.totalorder %s139, %s155
    %p157 = scmp.eq.s32.totalorder %s15, 0
    %p158 = por %p156, %p157
    %p159 = scmp.le.s32.totalorder 1, %s9
    %p160 = scmp.lt.s32.totalorder %s9, 9
    %p161 = pnand %p159, %p160
    %p162 = pneg %p161
    // Predicated region
    $region9: #{transformer_forward.37} parent=5 // pred_check
      _
    $region10: #{transformer_forward.37} parent=5 // pred_check_branch
      %164 = sbr.rel (%p161) target = $region12
    $region11: #{transformer_forward.37} parent=5 // pred_region
      %s165 = ssub.s32 %s9, 1
      // Predicated region
      $region13: #{transformer_forward.37} parent=11 // pred_check
        %p166 = pneg %p63
      $region14: #{transformer_forward.37} parent=11 // pred_check_branch
        %168 = sbr.rel (%p166) target = $region16
      $region15: #{transformer_forward.37} parent=11 // pred_region
        %s169 = smul.u32 2, %s22
        %p170 = scmp.lt.s32.totalorder %s169, 1
        %s171 = scalar_select %p170, %s169, 1
        %p172 = scmp.lt.s32.totalorder %s23, 0
        %s173 = scalar_select %p172, %s23, 0
        %s174 = sadd.s32 %s173, %s171
        %s175 = smul.addr %s174, 4
        %s176 = scalar_lea.vmem %s0, %s175
        %s177 = smul.u32 2, %s22
      $region16: #{transformer_forward.37} parent=11 // pred_fallthru
        _
    $region12: #{transformer_forward.37} parent=5 // pred_fallthru
      _
    %p178 = scmp.lt.s32.totalorder %s9, 8
    // Predicated region
    $region17: #{transformer_forward.37} parent=5 // pred_check
      %p179 = pneg %p178
    $region18: #{transformer_forward.37} parent=5 // pred_check_branch
      %181 = sbr.rel (%p179) target = $region20
    $region19: #{transformer_forward.37} parent=5 // pred_region
      // Predicated region
      $region21: #{transformer_forward.37} parent=19 // pred_check
        %p182 = pneg %p87
      $region22: #{transformer_forward.37} parent=19 // pred_check_branch
        %184 = sbr.rel (%p182) target = $region24
      $region23: #{transformer_forward.37} parent=19 // pred_region
        %s185 = smul.u32 4, %s19
        %p186 = scmp.lt.s32.totalorder %s16, 1
        %s187 = scalar_select %p186, %s16, 1
        %p188 = scmp.lt.s32.totalorder %s17, 3
        %s189 = scalar_select %p188, %s17, 3
        %p190 = scmp.lt.s32.totalorder %s185, 3
        %s191 = scalar_select %p190, %s185, 3
        %s192 = smul.addr %s189, 4
        %s193 = sadd.s32 %s191, %s192
        %s194 = smul.addr %s187, 16
        %s195 = sadd.s32 %s193, %s194
        %s196 = smul.addr %s195, 4
        %s197 = scalar_lea.vmem %s1, %s196
        %s198 = smul.u32 4, %s19
      $region24: #{transformer_forward.37} parent=19 // pred_fallthru
        _
      // Predicated region
      $region25: #{transformer_forward.37} parent=19 // pred_check
        %p199 = pneg %p115
      $region26: #{transformer_forward.37} parent=19 // pred_check_branch
        %201 = sbr.rel (%p199) target = $region28
      $region27: #{transformer_forward.37} parent=19 // pred_region
        %p202 = scmp.lt.s32.totalorder %s16, 1
        %s203 = scalar_select %p202, %s16, 1
        %p204 = scmp.lt.s32.totalorder %s17, 3
        %s205 = scalar_select %p204, %s17, 3
        %s206 = smul.addr %s203, 4
        %s207 = sadd.s32 %s205, %s206
        %s208 = scalar_lea.vmem %s2, %s207
      $region28: #{transformer_forward.37} parent=19 // pred_fallthru
        _
    $region20: #{transformer_forward.37} parent=5 // pred_fallthru
      _
    %p209 = scmp.le.s32.totalorder 1, %s9
    %p210 = scmp.lt.s32.totalorder %s9, 9
    %p211 = pnand %p209, %p210
    %p212 = pneg %p211
    // Predicated region
    $region29: #{transformer_forward.37} parent=5 // pred_check
      _
    $region30: #{transformer_forward.37} parent=5 // pred_check_branch
      %214 = sbr.rel (%p211) target = $region32
    $region31: #{transformer_forward.37} parent=5 // pred_region
      %s215 = ssub.s32 %s9, 1
      %s216 = smul.u32 2, %s22
      %p217 = scmp.lt.s32.totalorder %s216, 1
      %s218 = scalar_select %p217, %s216, 1
      %p219 = scmp.lt.s32.totalorder %s23, 0
      %s220 = scalar_select %p219, %s23, 0
      %s221 = sadd.s32 %s220, %s218
      %s222 = smul.addr %s221, 4
      %s223 = scalar_lea.vmem %s0, %s222
      %p224 = pneg %p63
      %p225 = pneg %p60
      %s226 = smul.u32 4, %s23
      %p227 = scmp.lt.s32.totalorder %s20, 1
      %s228 = scalar_select %p227, %s20, 1
      %p229 = scmp.lt.s32.totalorder %s21, 3
      %s230 = scalar_select %p229, %s21, 3
      %p231 = scmp.lt.s32.totalorder %s226, 3
      %s232 = scalar_select %p231, %s226, 3
      %s233 = smul.addr %s230, 4
      %s234 = sadd.s32 %s232, %s233
      %s235 = smul.addr %s228, 16
      %s236 = sadd.s32 %s234, %s235
      %s237 = smul.addr %s236, 4
      %s238 = scalar_lea.vmem %s1, %s237
      %p239 = pneg %p93
      %p240 = pneg %p90
      %p241 = scmp.lt.s32.totalorder %s20, 1
      %s242 = scalar_select %p241, %s20, 1
      %p243 = scmp.lt.s32.totalorder %s21, 3
      %s244 = scalar_select %p243, %s21, 3
      %s245 = smul.addr %s242, 4
      %s246 = sadd.s32 %s244, %s245
      %s247 = scalar_lea.vmem %s2, %s246
      %p248 = pneg %p121
      %p249 = pneg %p118
      %p250 = pneg %p151
      %p251 = pneg %p148
      %s252 = smul.u32 2, %s22
      %p253 = scmp.lt.s32.totalorder %s20, 1
      %s254 = scalar_select %p253, %s20, 1
      %p255 = scmp.lt.s32.totalorder %s21, 3
      %s256 = scalar_select %p255, %s21, 3
      %p257 = scmp.lt.s32.totalorder %s252, 1
      %s258 = scalar_select %p257, %s252, 1
      %s259 = smul.addr %s256, 2
      %s260 = sadd.s32 %s258, %s259
      %s261 = smul.addr %s254, 8
      %s262 = sadd.s32 %s260, %s261
      %s263 = smul.addr %s262, 4
      %s264 = scalar_lea.vmem %s3, %s263
      %s265 = smul.u32 2, %s22
      %p266 = scmp.lt.s32.totalorder %s265, 1
      %s267 = scalar_select %p266, %s265, 1
      %p268 = scmp.lt.s32.totalorder %s23, 0
      %s269 = scalar_select %p268, %s23, 0
      %s270 = sadd.s32 %s269, %s267
      %s271 = smul.addr %s270, 4
      %s272 = scalar_lea.vmem %s0, %s271
      %s273 = smul.u32 2, %s22
      %s274 = smul.u32 4, %s23
      %p275 = scmp.lt.s32.totalorder %s20, 1
      %s276 = scalar_select %p275, %s20, 1
      %p277 = scmp.lt.s32.totalorder %s21, 3
      %s278 = scalar_select %p277, %s21, 3
      %p279 = scmp.lt.s32.totalorder %s274, 3
      %s280 = scalar_select %p279, %s274, 3
      %s281 = smul.addr %s278, 4
      %s282 = sadd.s32 %s280, %s281
      %s283 = smul.addr %s276, 16
      %s284 = sadd.s32 %s282, %s283
      %s285 = smul.addr %s284, 4
      %s286 = scalar_lea.vmem %s1, %s285
      %s287 = smul.u32 4, %s23
      %p288 = scmp.lt.s32.totalorder %s20, 1
      %s289 = scalar_select %p288, %s20, 1
      %p290 = scmp.lt.s32.totalorder %s21, 3
      %s291 = scalar_select %p290, %s21, 3
      %s292 = smul.addr %s289, 4
      %s293 = sadd.s32 %s291, %s292
      %s294 = scalar_lea.vmem %s2, %s293
      %s295 = smul.u32 2, %s22
      %p296 = scmp.lt.s32.totalorder %s20, 1
      %s297 = scalar_select %p296, %s20, 1
      %p298 = scmp.lt.s32.totalorder %s21, 3
      %s299 = scalar_select %p298, %s21, 3
      %p300 = scmp.lt.s32.totalorder %s295, 1
      %s301 = scalar_select %p300, %s295, 1
      %s302 = smul.addr %s299, 2
      %s303 = sadd.s32 %s301, %s302
      %s304 = smul.addr %s297, 8
      %s305 = sadd.s32 %s303, %s304
      %s306 = smul.addr %s305, 4
      %s307 = scalar_lea.vmem %s3, %s306
      %s308 = smul.u32 2, %s22
      %p310 = scmp.eq.s32.totalorder %s23, 0
      // Predicated region
      $region33: #{transformer_forward.37} parent=31 // pred_check
        %p311 = pneg %p310
      $region34: #{transformer_forward.37} parent=31 // pred_check_branch
        %313 = sbr.rel (%p311) target = $region36
      $region35: #{transformer_forward.37} parent=31 // pred_region
        %vm314 = vcmask 64512
        %315 = vst.msk [vmem:[#allocation2] sm:$0xff] %vm314, 0.0
        %316 = vst.msk [vmem:[#allocation2 + $0x8] sm:$0xff] %vm314, 0.0
      $region36: #{transformer_forward.37} parent=31 // pred_fallthru
        _
      %v317 = vld [vmem:[#allocation2] sm:$0xff]
      %v318 = vld [vmem:[#allocation2 + $0x8] sm:$0xff]
      %v319 = vld [vmem:[%s272] sm:$0xf]
      %v320 = vld [vmem:[%s272 + $0x4] sm:$0xf]
      %v321 = vld [vmem:[%s286] sm:$0xf]
      %v322 = vld [vmem:[%s286 + $0x4] sm:$0xf]
      %v323 = vld [vmem:[%s286 + $0x8] sm:$0xf]
      %v324 = vld [vmem:[%s286 + $0xc] sm:$0xf]
      %v327 = vunpack.c.l.b16 %v319
      %v328 = vunpack.c.l.b16 %v320
      %v329 = vpack.c.b16 %v328, %v327
      %v334 = vunpack.c.l.b16 %v321
      %v335 = vunpack.c.l.b16 %v322
      %v336 = vunpack.c.l.b16 %v323
      %v337 = vunpack.c.l.b16 %v324
      %v338 = vpack.c.b16 %v335, %v334
      %v339 = vpack.c.b16 %v337, %v336
      %vm342 = vcmask 261120
      %v344 = vsel %vm342, %v329, 0
      %346 = vmatpush.bf16.msra.mxu0 0
      %347 = vmatpush.bf16.msra.mxu0 0
      %348 = vmatpush.bf16.msra.mxu0 0
      %349 = vmatpush.bf16.msra.mxu0 0
      %350 = vmatpush.bf16.msra.mxu0 0
      %351 = vmatpush.bf16.msra.mxu0 0
      %352 = vmatpush.bf16.msra.mxu0 %v339
      %353 = vmatpush.bf16.msra.mxu0 %v338
      %354 = vmatmul.bf16.gmra.mxu0 %v344
      %v355 = vpop.f32.mrf.mxu0
      %v356 = vadd.f32 0.0, %v355
      %v357 = vpop.f32.mrf.mxu0
      %v358 = vadd.f32 0.0, %v357
      %359 = vdwg.mxu0
      %v360 = vadd.f32 %v317, %v356
      %v361 = vadd.f32 %v318, %v358
      %vm362 = vcmask 64512
      %363 = vst.msk [vmem:[#allocation2] sm:$0xff] %vm362, %v360
      %364 = vst.msk [vmem:[#allocation2 + $0x8] sm:$0xff] %vm362, %v361
      // Predicated region
      $region37: #{transformer_forward.37} parent=31 // pred_check
        %p365 = pneg %p310
      $region38: #{transformer_forward.37} parent=31 // pred_check_branch
        %367 = sbr.rel (%p365) target = $region40
      $region39: #{transformer_forward.37} parent=31 // pred_region
        %v368 = vld [vmem:[#allocation2] sm:$0xff]
        %v369 = vld [vmem:[#allocation2 + $0x8] sm:$0xff]
        %v370 = vld [vmem:[%s294] sm:$0x1]
        %v372 = vperm.slane %v370, 0
        %v374 = vadd.f32 %v368, %v372
        %v375 = vadd.f32 %v369, %v372
        %v376 = vpack.c.bf16 %v374, %v374
        %v377 = vpack.c.bf16 %v375, %v375
        %vm378 = vcmask 60416
        %379 = vst.msk [vmem:[%s307] sm:$0xf] %vm378, %v376
        %380 = vst.msk [vmem:[%s307 + $0x4] sm:$0xf] %vm378, %v377
      $region40: #{transformer_forward.37} parent=31 // pred_fallthru
        _
      %s381 = smul.u32 2, %s22
      %p382 = scmp.lt.s32.totalorder %s20, 1
      %s383 = scalar_select %p382, %s20, 1
      %p384 = scmp.lt.s32.totalorder %s21, 3
      %s385 = scalar_select %p384, %s21, 3
      %p386 = scmp.lt.s32.totalorder %s381, 1
      %s387 = scalar_select %p386, %s381, 1
      %s388 = smul.addr %s385, 2
      %s389 = sadd.s32 %s387, %s388
      %s390 = smul.addr %s383, 8
      %s391 = sadd.s32 %s389, %s390
      %s392 = smul.addr %s391, 4
      %s393 = scalar_lea.vmem %s3, %s392
      // Predicated region
      $region41: #{transformer_forward.37} parent=31 // pred_check
        %p394 = pneg %p148
      $region42: #{transformer_forward.37} parent=31 // pred_check_branch
        %396 = sbr.rel (%p394) target = $region44
      $region43: #{transformer_forward.37} parent=31 // pred_region
        %s397 = smul.u32 2, %s22
      $region44: #{transformer_forward.37} parent=31 // pred_fallthru
        _
    $region32: #{transformer_forward.37} parent=5 // pred_fallthru
      _
    %p398 = scmp.le.s32.totalorder 2, %s9
    // Predicated region
    $region45: #{transformer_forward.37} parent=5 // pred_check
      %p399 = pneg %p398
    $region46: #{transformer_forward.37} parent=5 // pred_check_branch
      %401 = sbr.rel (%p399) target = $region48
    $region47: #{transformer_forward.37} parent=5 // pred_region
      %s402 = ssub.s32 %s9, 2
      // Predicated region
      $region49: #{transformer_forward.37} parent=47 // pred_check
        %p403 = pneg %p154
      $region50: #{transformer_forward.37} parent=47 // pred_check_branch
        %405 = sbr.rel (%p403) target = $region52
      $region51: #{transformer_forward.37} parent=47 // pred_region
        %s406 = smul.u32 2, %s26
        %p407 = scmp.lt.s32.totalorder %s24, 1
        %s408 = scalar_select %p407, %s24, 1
        %p409 = scmp.lt.s32.totalorder %s25, 3
        %s410 = scalar_select %p409, %s25, 3
        %p411 = scmp.lt.s32.totalorder %s406, 1
        %s412 = scalar_select %p411, %s406, 1
        %s413 = smul.addr %s410, 2
        %s414 = sadd.s32 %s412, %s413
        %s415 = smul.addr %s408, 8
        %s416 = sadd.s32 %s414, %s415
        %s417 = smul.addr %s416, 4
        %s418 = scalar_lea.vmem %s3, %s417
      $region52: #{transformer_forward.37} parent=47 // pred_fallthru
        _
    $region48: #{transformer_forward.37} parent=5 // pred_fallthru
      _
  $region6: #{transformer_forward.37} parent=0 // loop_footer
    %s13 = sadd.s32 1, %s9
  $region7: #{transformer_forward.37} parent=0 // loop_footer_branch
    %8 = sbr.rel target = $region3
  $region8: #{transformer_forward.37} parent=0 // loop_exit
    _

// kernel: transformer_forward.49
$region0: #{transformer_forward.49}
  #allocation0 [shape = 'u32[]', space=smem, size = 0x4, offset = 0x4, fixed_abs, tag = 'smem constant byte address 0x4 - core index']
  #allocation1 [shape = 'u32[72,128]{1,0:T(1,128)}', space=vmem, size = 0x9000, scoped, tag = 'internal scratch']
  #allocation2 [shape = 'f32[16,50]{1,0:T(8,128)}', space=vmem, size = 0x2000, scoped, tag = 'scratch operand']
  %s0 = inlined_call_operand.vmem [shape: bf16[16,32], index: 0, kind: input, shape index: {}]
  %s1 = inlined_call_operand.vmem [shape: bf16[32,50], index: 1, kind: input, shape index: {}]
  %s2 = inlined_call_operand.vmem [shape: f32[1,50], index: 2, kind: input, shape index: {}]
  %s3 = inlined_call_operand.hbm [shape: f32[16,50], index: 3, kind: output, shape index: {}]
  %s4 = sld [smem:[#allocation0]]
  $region30: #{transformer_forward.49} parent=0
    _
  %s6 = ssub.s32 1, %s4
  %s7 = scalar_select 0, %s6, %s4
  $region1: #{transformer_forward.49} parent=0
    #allocation3 [shape = 'u8[8192]{0}', space=vmem, size = 0x2000, scoped, tag = 'output window, operand 0, single buffered']
    #allocation4 [shape = 's32[1]{0}', space=sflag, size = 0x4, scoped, tag = 'scoped memory for transformer_forward.49']
    %8 = vsyncpa [#allocation4], 0
    // Predicated region
    $region2: #{transformer_forward.49} parent=1 // pred_check
      _
    $region3: #{transformer_forward.49} parent=1 // pred_check_branch
      %10 = sbr.rel (0) target = $region5
    $region4: #{transformer_forward.49} parent=1 // pred_region
      _
    $region5: #{transformer_forward.49} parent=1 // pred_fallthru
      _
    // Predicated region
    $region6: #{transformer_forward.49} parent=1 // pred_check
      _
    $region7: #{transformer_forward.49} parent=1 // pred_check_branch
      %12 = sbr.rel (0) target = $region9
    $region8: #{transformer_forward.49} parent=1 // pred_region
      _
    $region9: #{transformer_forward.49} parent=1 // pred_fallthru
      _
    // Predicated region
    $region10: #{transformer_forward.49} parent=1 // pred_check
      _
    $region11: #{transformer_forward.49} parent=1 // pred_check_branch
      %14 = sbr.rel (0) target = $region13
    $region12: #{transformer_forward.49} parent=1 // pred_region
      _
    $region13: #{transformer_forward.49} parent=1 // pred_fallthru
      _
    %p16 = scmp.eq.s32.totalorder 0, 0
    // Predicated region
    $region14: #{transformer_forward.49} parent=1 // pred_check
      %p17 = pneg %p16
    $region15: #{transformer_forward.49} parent=1 // pred_check_branch
      %19 = sbr.rel (%p17) target = $region17
    $region16: #{transformer_forward.49} parent=1 // pred_region
      %vm20 = vcmask 408576
      %21 = vst.msk [vmem:[#allocation2] sm:$0xff] %vm20, 0.0
      %22 = vst.msk [vmem:[#allocation2 + $0x8] sm:$0xff] %vm20, 0.0
    $region17: #{transformer_forward.49} parent=1 // pred_fallthru
      _
    %v23 = vld [vmem:[#allocation2] sm:$0xff]
    %v24 = vld [vmem:[#allocation2 + $0x8] sm:$0xff]
    %v25 = vld [vmem:[%s0] sm:$0xf]
    %v26 = vld [vmem:[%s0 + $0x4] sm:$0xf]
    %v27 = vld [vmem:[%s1] sm:$0xf]
    %v28 = vld [vmem:[%s1 + $0x4] sm:$0xf]
    %v29 = vld [vmem:[%s1 + $0x8] sm:$0xf]
    %v30 = vld [vmem:[%s1 + $0xc] sm:$0xf]
    %v33 = vunpack.c.l.b16 %v25
    %v34 = vunpack.c.l.b16 %v26
    %v35 = vpack.c.b16 %v34, %v33
    %v40 = vunpack.c.l.b16 %v27
    %v41 = vunpack.c.l.b16 %v28
    %v42 = vunpack.c.l.b16 %v29
    %v43 = vunpack.c.l.b16 %v30
    %v44 = vpack.c.b16 %v41, %v40
    %v45 = vpack.c.b16 %v43, %v42
    %vm48 = vcmask 261120
    %v50 = vsel %vm48, %v35, 0
    %52 = vmatpush.bf16.msra.mxu0 0
    %53 = vmatpush.bf16.msra.mxu0 0
    %54 = vmatpush.bf16.msra.mxu0 0
    %55 = vmatpush.bf16.msra.mxu0 0
    %56 = vmatpush.bf16.msra.mxu0 0
    %57 = vmatpush.bf16.msra.mxu0 0
    %58 = vmatpush.bf16.msra.mxu0 %v45
    %59 = vmatpush.bf16.msra.mxu0 %v44
    %60 = vmatmul.bf16.gmra.mxu0 %v50
    %v61 = vpop.f32.mrf.mxu0
    %v62 = vadd.f32 0.0, %v61
    %v63 = vpop.f32.mrf.mxu0
    %v64 = vadd.f32 0.0, %v63
    %65 = vdwg.mxu0
    %v66 = vadd.f32 %v23, %v62
    %v67 = vadd.f32 %v24, %v64
    %vm68 = vcmask 408576
    %69 = vst.msk [vmem:[#allocation2] sm:$0xff] %vm68, %v66
    %70 = vst.msk [vmem:[#allocation2 + $0x8] sm:$0xff] %vm68, %v67
    // Predicated region
    $region18: #{transformer_forward.49} parent=1 // pred_check
      %p71 = pneg %p16
    $region19: #{transformer_forward.49} parent=1 // pred_check_branch
      %73 = sbr.rel (%p71) target = $region21
    $region20: #{transformer_forward.49} parent=1 // pred_region
      %v74 = vld [vmem:[#allocation2] sm:$0xff]
      %v75 = vld [vmem:[#allocation2 + $0x8] sm:$0xff]
      %v76 = vld [vmem:[%s2] sm:$0x1]
      %v78 = vperm.slane %v76, 0
      %v80 = vadd.f32 %v74, %v78
      %v81 = vadd.f32 %v75, %v78
      %82 = vst.msk [vmem:[#allocation3] sm:$0xff] %vm68, %v80
      %83 = vst.msk [vmem:[#allocation3 + $0x8] sm:$0xff] %vm68, %v81
    $region21: #{transformer_forward.49} parent=1 // pred_fallthru
      _
    // Predicated region
    $region22: #{transformer_forward.49} parent=1 // pred_check
      _
    $region23: #{transformer_forward.49} parent=1 // pred_check_branch
      %85 = sbr.rel (0) target = $region25
    $region24: #{transformer_forward.49} parent=1 // pred_region
      %87 = vsyncadd [#allocation4], 0
      %s88 = sshll.u32 [#allocation3], 4
      %s89 = int_to_ptr.vmem [resolvable:$true] %s88
      %s90 = sshll.u32 %s3, 4
      %s91 = int_to_ptr.hbm [resolvable:$true] %s90
      %96 = dma.vmem_to_hbm [thread:$0]  %s89, 256, %s91, [#allocation4], 128, 128, 8
    $region25: #{transformer_forward.49} parent=1 // pred_fallthru
      _
    // Predicated region
    $region26: #{transformer_forward.49} parent=1 // pred_check
      _
    $region27: #{transformer_forward.49} parent=1 // pred_check_branch
      %98 = sbr.rel (0) target = $region29
    $region28: #{transformer_forward.49} parent=1 // pred_region
      %100 = dma.done [#allocation4], 256
    $region29: #{transformer_forward.49} parent=1 // pred_fallthru
      _
    %101 = vsyncpa [#allocation4], 1

// kernel: transformer_forward.28
$region0: #{transformer_forward.28}
  #allocation0 [shape = 'u32[]', space=smem, size = 0x4, offset = 0x4, fixed_abs, tag = 'smem constant byte address 0x4 - core index']
  #allocation1 [shape = 'u32[72,128]{1,0:T(1,128)}', space=vmem, size = 0x9000, scoped, tag = 'internal scratch']
  #allocation2 [shape = 'f32[16,32]{1,0:T(8,128)}', space=vmem, size = 0x2000, scoped, tag = 'scratch operand']
  %s0 = inlined_call_operand.vmem [shape: bf16[16,32], index: 0, kind: input, shape index: {}]
  %s1 = inlined_call_operand.vmem [shape: bf16[32,64], index: 1, kind: input, shape index: {}]
  %s2 = inlined_call_operand.vmem [shape: f32[1,64], index: 2, kind: input, shape index: {}]
  %s3 = inlined_call_operand.vmem [shape: bf16[64,32], index: 3, kind: input, shape index: {}]
  %s4 = inlined_call_operand.vmem [shape: f32[1,32], index: 4, kind: input, shape index: {}]
  %s5 = inlined_call_operand.vmem [shape: f32[1,32], index: 5, kind: input, shape index: {}]
  %s6 = inlined_call_operand.vmem [shape: f32[1,32], index: 6, kind: input, shape index: {}]
  %s7 = inlined_call_operand.vmem [shape: bf16[16,32], index: 7, kind: output, shape index: {}]
  %s8 = sld [smem:[#allocation0]]
  $region46: #{transformer_forward.28} parent=0
    _
  %s10 = ssub.s32 1, %s8
  %s11 = scalar_select 0, %s10, %s8
  // Predicated region
  $region2: #{transformer_forward.28} parent=0 // pred_check
    _
  $region3: #{transformer_forward.28} parent=0 // pred_check_branch
    %13 = sbr.rel (0) target = $region5
  $region4: #{transformer_forward.28} parent=0 // pred_region
    _
  $region5: #{transformer_forward.28} parent=0 // pred_fallthru
    _
  // Predicated region
  $region6: #{transformer_forward.28} parent=0 // pred_check
    _
  $region7: #{transformer_forward.28} parent=0 // pred_check_branch
    %15 = sbr.rel (0) target = $region9
  $region8: #{transformer_forward.28} parent=0 // pred_region
    _
  $region9: #{transformer_forward.28} parent=0 // pred_fallthru
    _
  // Predicated region
  $region10: #{transformer_forward.28} parent=0 // pred_check
    _
  $region11: #{transformer_forward.28} parent=0 // pred_check_branch
    %17 = sbr.rel (0) target = $region13
  $region12: #{transformer_forward.28} parent=0 // pred_region
    _
  $region13: #{transformer_forward.28} parent=0 // pred_fallthru
    _
  // Predicated region
  $region14: #{transformer_forward.28} parent=0 // pred_check
    _
  $region15: #{transformer_forward.28} parent=0 // pred_check_branch
    %19 = sbr.rel (0) target = $region17
  $region16: #{transformer_forward.28} parent=0 // pred_region
    _
  $region17: #{transformer_forward.28} parent=0 // pred_fallthru
    _
  // Predicated region
  $region18: #{transformer_forward.28} parent=0 // pred_check
    _
  $region19: #{transformer_forward.28} parent=0 // pred_check_branch
    %21 = sbr.rel (0) target = $region21
  $region20: #{transformer_forward.28} parent=0 // pred_region
    _
  $region21: #{transformer_forward.28} parent=0 // pred_fallthru
    _
  // Predicated region
  $region22: #{transformer_forward.28} parent=0 // pred_check
    _
  $region23: #{transformer_forward.28} parent=0 // pred_check_branch
    %23 = sbr.rel (0) target = $region25
  $region24: #{transformer_forward.28} parent=0 // pred_region
    _
  $region25: #{transformer_forward.28} parent=0 // pred_fallthru
    _
  // Predicated region
  $region26: #{transformer_forward.28} parent=0 // pred_check
    _
  $region27: #{transformer_forward.28} parent=0 // pred_check_branch
    %25 = sbr.rel (0) target = $region29
  $region28: #{transformer_forward.28} parent=0 // pred_region
    _
  $region29: #{transformer_forward.28} parent=0 // pred_fallthru
    _
  %p27 = scmp.eq.s32.totalorder 0, 0
  // Predicated region
  $region30: #{transformer_forward.28} parent=0 // pred_check
    %p28 = pneg %p27
  $region31: #{transformer_forward.28} parent=0 // pred_check_branch
    %30 = sbr.rel (%p28) target = $region33
  $region32: #{transformer_forward.28} parent=0 // pred_region
    %vm31 = vcmask 261120
    %32 = vst.msk [vmem:[#allocation2] sm:$0xff] %vm31, 0.0
    %33 = vst.msk [vmem:[#allocation2 + $0x8] sm:$0xff] %vm31, 0.0
  $region33: #{transformer_forward.28} parent=0 // pred_fallthru
    _
  %v34 = vld [vmem:[%s0] sm:$0xf]
  %v35 = vld [vmem:[%s0 + $0x4] sm:$0xf]
  %v36 = vld [vmem:[%s1] sm:$0xf]
  %v37 = vld [vmem:[%s1 + $0x4] sm:$0xf]
  %v38 = vld [vmem:[%s1 + $0x8] sm:$0xf]
  %v39 = vld [vmem:[%s1 + $0xc] sm:$0xf]
  %v40 = vld [vmem:[%s2] sm:$0x1]
  %v42 = vperm.slane %v40, 0
  %v46 = vunpack.c.l.b16 %v34
  %v47 = vunpack.c.l.b16 %v35
  %v48 = vpack.c.b16 %v47, %v46
  %v53 = vunpack.c.l.b16 %v36
  %v54 = vunpack.c.l.b16 %v37
  %v55 = vunpack.c.l.b16 %v38
  %v56 = vunpack.c.l.b16 %v39
  %v57 = vpack.c.b16 %v54, %v53
  %v58 = vpack.c.b16 %v56, %v55
  %vm61 = vcmask 261120
  %v63 = vsel %vm61, %v48, 0
  %65 = vmatpush.bf16.msra.mxu0 0
  %66 = vmatpush.bf16.msra.mxu0 0
  %67 = vmatpush.bf16.msra.mxu0 0
  %68 = vmatpush.bf16.msra.mxu0 0
  %69 = vmatpush.bf16.msra.mxu0 0
  %70 = vmatpush.bf16.msra.mxu0 0
  %71 = vmatpush.bf16.msra.mxu0 %v58
  %72 = vmatpush.bf16.msra.mxu0 %v57
  %73 = vmatmul.bf16.gmra.mxu0 %v63
  %v74 = vpop.f32.mrf.mxu0
  %v75 = vadd.f32 %v42, %v74
  %v76 = vpop.f32.mrf.mxu0
  %v77 = vadd.f32 %v42, %v76
  %78 = vdwg.mxu0
  %v79 = vmax.f32 %v75, 0.0
  %v80 = vmax.f32 %v77, 0.0
  %v81 = vld [vmem:[#allocation2] sm:$0xff]
  %v82 = vld [vmem:[#allocation2 + $0x8] sm:$0xff]
  %v83 = vpack.c.bf16 %v80, %v79
  %v84 = vld [vmem:[%s3] sm:$0xf]
  %v85 = vld [vmem:[%s3 + $0x4] sm:$0xf]
  %v86 = vld [vmem:[%s3 + $0x8] sm:$0xf]
  %v87 = vld [vmem:[%s3 + $0xc] sm:$0xf]
  %v88 = vld [vmem:[%s3 + $0x10] sm:$0xf]
  %v89 = vld [vmem:[%s3 + $0x14] sm:$0xf]
  %v90 = vld [vmem:[%s3 + $0x18] sm:$0xf]
  %v91 = vld [vmem:[%s3 + $0x1c] sm:$0xf]
  %v100 = vunpack.c.l.b16 %v84
  %v101 = vunpack.c.l.b16 %v85
  %v102 = vunpack.c.l.b16 %v86
  %v103 = vunpack.c.l.b16 %v87
  %v104 = vunpack.c.l.b16 %v88
  %v105 = vunpack.c.l.b16 %v89
  %v106 = vunpack.c.l.b16 %v90
  %v107 = vunpack.c.l.b16 %v91
  %v108 = vpack.c.b16 %v101, %v100
  %v109 = vpack.c.b16 %v103, %v102
  %v110 = vpack.c.b16 %v105, %v104
  %v111 = vpack.c.b16 %v107, %v106
  %vm116 = vcmask 523264
  %v118 = vsel %vm116, %v83, 0
  %120 = vmatpush.bf16.msra.mxu0 0
  %121 = vmatpush.bf16.msra.mxu0 0
  %122 = vmatpush.bf16.msra.mxu0 0
  %123 = vmatpush.bf16.msra.mxu0 0
  %124 = vmatpush.bf16.msra.mxu0 %v111
  %125 = vmatpush.bf16.msra.mxu0 %v110
  %126 = vmatpush.bf16.msra.mxu0 %v109
  %127 = vmatpush.bf16.msra.mxu0 %v108
  %128 = vmatmul.bf16.gmra.mxu0 %v118
  %v129 = vpop.f32.mrf.mxu0
  %v130 = vadd.f32 0.0, %v129
  %v131 = vpop.f32.mrf.mxu0
  %v132 = vadd.f32 0.0, %v131
  %133 = vdwg.mxu0
  %v134 = vadd.f32 %v81, %v130
  %v135 = vadd.f32 %v82, %v132
  %136 = vst.msk [vmem:[#allocation2] sm:$0xff] %vm61, %v134
  %137 = vst.msk [vmem:[#allocation2 + $0x8] sm:$0xff] %vm61, %v135
  // Predicated region
  $region34: #{transformer_forward.28} parent=0 // pred_check
    %p138 = pneg %p27
  $region35: #{transformer_forward.28} parent=0 // pred_check_branch
    %140 = sbr.rel (%p138) target = $region37
  $region36: #{transformer_forward.28} parent=0 // pred_region
    %v141 = vld [vmem:[#allocation2] sm:$0xff]
    %v142 = vld [vmem:[#allocation2 + $0x8] sm:$0xff]
    %v143 = vld [vmem:[%s4] sm:$0x1]
    %v145 = vperm.slane %v143, 0
    %v147 = vadd.f32 %v141, %v145
    %v148 = vadd.f32 %v142, %v145
    %v149 = vld [vmem:[%s0] sm:$0xf]
    %v150 = vld [vmem:[%s0 + $0x4] sm:$0xf]
    %v151 = vunpack.c.l.bf16 %v149
    %v152 = vunpack.c.l.bf16 %v150
    %v153 = vadd.f32 %v147, %v151
    %v154 = vadd.f32 %v148, %v152
    %v155 = vsel %vm61, %v153, 0.0
    %156 = vadd.xlane.f32.xlu0 %v155
    %v157 = vpop.xlane.xlu0 %156
    %v158 = vsel %vm61, %v154, 0.0
    %159 = vadd.xlane.f32.xlu0 %v158
    %v160 = vpop.xlane.xlu0 %159
    %v161 = vrcp.pop 32.0
    %v162 = vmul.f32 32.0, %v161
    %v163 = vsub.f32 1.0, %v162
    %v164 = vmul.f32 %v161, %v163
    %v165 = vadd.f32 %v161, %v164
    %vm166 = vweird.f32 %v161
    %v167 = vsel %vm166, %v161, %v165
    %v168 = vmul.f32 %v157, %v167
    %v169 = vmul.f32 %v160, %v167
    %v170 = vsub.f32 %v153, %v168
    %v171 = vsub.f32 %v154, %v169
    %v172 = vmul.f32 %v170, %v170
    %v173 = vmul.f32 %v171, %v171
    %v174 = vsel %vm61, %v172, 0.0
    %175 = vadd.xlane.f32.xlu0 %v174
    %v176 = vpop.xlane.xlu0 %175
    %v177 = vsel %vm61, %v173, 0.0
    %178 = vadd.xlane.f32.xlu0 %v177
    %v179 = vpop.xlane.xlu0 %178
    %v180 = vmul.f32 %v176, %v167
    %v181 = vmul.f32 %v179, %v167
    %v182 = vadd.f32 %v180, 1e-05
    %v183 = vadd.f32 %v181, 1e-05
    %v184 = vrsqrt.pop %v182
    %v185 = vmul.f32 %v184, %v182
    %v186 = vmul.f32 %v185, %v184
    %v187 = vmul.f32 0.5, %v186
    %v188 = vsub.f32 1.5, %v187
    %v189 = vmul.f32 %v184, %v188
    %vm190 = vweird.f32 %v182
    %vm191 = vweird.f32 %v184
    %vm192 = vmor %vm190, %vm191
    %v193 = vsel %vm192, %v184, %v189
    %v194 = vrsqrt.pop %v183
    %v195 = vmul.f32 %v194, %v183
    %v196 = vmul.f32 %v195, %v194
    %v197 = vmul.f32 0.5, %v196
    %v198 = vsub.f32 1.5, %v197
    %v199 = vmul.f32 %v194, %v198
    %vm200 = vweird.f32 %v183
    %vm201 = vweird.f32 %v194
    %vm202 = vmor %vm200, %vm201
    %v203 = vsel %vm202, %v194, %v199
    %v204 = vmul.f32 %v170, %v193
    %v205 = vmul.f32 %v171, %v203
    %v206 = vld [vmem:[%s5] sm:$0x1]
    %v208 = vperm.slane %v206, 0
    %v210 = vmul.f32 %v204, %v208
    %v211 = vmul.f32 %v205, %v208
    %v212 = vld [vmem:[%s6] sm:$0x1]
    %v214 = vperm.slane %v212, 0
    %v216 = vadd.f32 %v210, %v214
    %v217 = vadd.f32 %v211, %v214
    %v218 = vpack.c.bf16 %v216, %v216
    %v219 = vpack.c.bf16 %v217, %v217
    %vm220 = vcmask 257024
    %221 = vst.msk [vmem:[%s7] sm:$0xf] %vm220, %v218
    %222 = vst.msk [vmem:[%s7 + $0x4] sm:$0xf] %vm220, %v219
  $region37: #{transformer_forward.28} parent=0 // pred_fallthru
    _
  // Predicated region
  $region38: #{transformer_forward.28} parent=0 // pred_check
    _
  $region39: #{transformer_forward.28} parent=0 // pred_check_branch
    %224 = sbr.rel (0) target = $region41
  $region40: #{transformer_forward.28} parent=0 // pred_region
    _
  $region41: #{transformer_forward.28} parent=0 // pred_fallthru
    _
  // Predicated region
  $region42: #{transformer_forward.28} parent=0 // pred_check
    _
  $region43: #{transformer_forward.28} parent=0 // pred_check_branch
    %226 = sbr.rel (0) target = $region45
  $region44: #{transformer_forward.28} parent=0 // pred_region
    _
  $region45: #{transformer_forward.28} parent=0 // pred_fallthru
    _

</llo_original>
